<compile_context>
chip_gen: v7x
topology: tpu7x:2x2x1
jax: 0.10.0
libtpu: 0.0.40
codegen_flags: <defaults>
</compile_context>

<pallas_src>
import math
from functools import partial

import numpy as np
import jax
import jax.numpy as jnp
from jax.experimental import pallas as pl
from jax.experimental.pallas import tpu as pltpu

_VMEM_LIMIT = 32 << 20        # explicit scoped-VMEM limit: safe on v5e/v6e/v7x
_BLOCK_BUDGET = 3 << 20       # target bytes per (input+output) grid block
_K_TARGET = 256               # MXU depth target for the block-diag left matmul
_LANE_TARGET = 4096           # lane-tile cap for the merged Ho*Wo axis


# --------------------------------------------------------------------------- trace-time constants
def _interp_matrix(n_in, n_out):
    """(n_out, n_in) 1-D linear interpolation matrix, align_corners=True."""
    m = np.zeros((n_out, n_in), np.float32)
    if n_out == 1:
        src = np.zeros((1,), np.float64)
    else:
        src = np.arange(n_out, dtype=np.float64) * (n_in - 1) / (n_out - 1)
    i0 = np.clip(np.floor(src).astype(np.int64), 0, n_in - 1)
    i1 = np.minimum(i0 + 1, n_in - 1)
    t = (src - i0).astype(np.float32)
    rows = np.arange(n_out)
    np.add.at(m, (rows, i0), 1.0 - t)
    np.add.at(m, (rows, i1), t)
    return m


def _block_diag(m, g):
    """Repeat (out, in) matrix g times along the diagonal -> (g*out, g*in)."""
    out, inn = m.shape
    bd = np.zeros((g * out, g * inn), np.float32)
    for i in range(g):
        bd[i * out:(i + 1) * out, i * inn:(i + 1) * inn] = m
    return bd


# --------------------------------------------------------------------------- block-size selection
def _choose_groups(n_units, rows_in, rows_out, unit_in_bytes, unit_out_bytes,
                   budget_bytes=_BLOCK_BUDGET, k_target=_K_TARGET):
    """Pick (G, g): G units per grid block (VMEM byte budget, exact divisor,
    8-aligned rows, >=2 grid steps when possible) and g units per inner
    block-diagonal matmul (K = g*rows_in close to the MXU depth target)."""
    def aligned(g):
        return (g * rows_in) % 8 == 0 and (g * rows_out) % 8 == 0

    divs = [g for g in range(1, n_units + 1) if n_units % g == 0]
    cands = [g for g in divs if aligned(g) or g == n_units]
    blk_bytes = lambda g: g * (unit_in_bytes + unit_out_bytes)
    in_budget = [g for g in cands if blk_bytes(g) <= budget_bytes]
    multi = [g for g in in_budget if n_units // g >= 2]
    if multi:
        G = max(multi)
    elif in_budget:
        G = max(in_budget)
    else:
        G = min(cands)

    gi_divs = [g for g in range(1, G + 1) if G % g == 0]
    gi_aligned = [g for g in gi_divs if aligned(g)]
    pool = gi_aligned if gi_aligned else [G]
    under = [g for g in pool if g * rows_in <= k_target]
    gi = max(under) if under else min(pool)
    return G, gi


def _choose_lane_tile(L, target=_LANE_TARGET):
    """Largest multiple-of-128 divisor of L that is <= target (or full L)."""
    if L <= target or L % 128 != 0:
        return L
    best = 128
    for t in range(128, target + 1, 128):
        if L % t == 0:
            best = t
    return best


# --------------------------------------------------------------------------- Pallas kernels
def _make_groupwise_kernel(rows_in, rows_out, g_inner, r_inner, fused_right):
    """One grid block = r_inner inner groups of g_inner units.

    fused_right=True : out = blockdiag(m_left) @ (x @ m_right)   (W+H stage)
    fused_right=False: out = blockdiag(m_left) @ x               (D stage)
    """
    gh_in = g_inner * rows_in
    gh_out = g_inner * rows_out
    unroll = r_inner <= 8

    if fused_right:
        def kernel(x_ref, mr_ref, ml_ref, o_ref):
            mr = mr_ref[...]
            ml = ml_ref[...]
            if r_inner == 1:
                t = jnp.dot(x_ref[...], mr, preferred_element_type=jnp.float32)
                o_ref[...] = jnp.dot(ml, t, preferred_element_type=jnp.float32)
                return

            def body(r, carry):
                ri = pl.multiple_of(r * gh_in, gh_in)
                ro = pl.multiple_of(r * gh_out, gh_out)
                t = jnp.dot(x_ref[pl.ds(ri, gh_in), :], mr,
                            preferred_element_type=jnp.float32)
                o_ref[pl.ds(ro, gh_out), :] = jnp.dot(
                    ml, t, preferred_element_type=jnp.float32)
                return carry

            jax.lax.fori_loop(0, r_inner, body, 0, unroll=unroll)
    else:
        def kernel(x_ref, ml_ref, o_ref):
            ml = ml_ref[...]
            if r_inner == 1:
                o_ref[...] = jnp.dot(ml, x_ref[...],
                                     preferred_element_type=jnp.float32)
                return

            def body(r, carry):
                ri = pl.multiple_of(r * gh_in, gh_in)
                ro = pl.multiple_of(r * gh_out, gh_out)
                o_ref[pl.ds(ro, gh_out), :] = jnp.dot(
                    ml, x_ref[pl.ds(ri, gh_in), :],
                    preferred_element_type=jnp.float32)
                return carry

            jax.lax.fori_loop(0, r_inner, body, 0, unroll=unroll)

    return kernel


# --------------------------------------------------------------------------- stage wrappers
def _resize_hw(x2d, n_units, h, ho, m_w, m_h):
    """Fused W+H resize.  x2d: (n_units*H, W) -> (n_units*Ho, Wo),
    per D-plane: out = m_h @ (x @ m_w)."""
    w = x2d.shape[1]
    wo = m_w.shape[1]
    unit_in = h * w * 4
    unit_out = ho * wo * 4
    G, g = _choose_groups(n_units, h, ho, unit_in, unit_out)
    r = G // g
    m_h_bd = jnp.asarray(_block_diag(m_h, g))
    kernel = _make_groupwise_kernel(h, ho, g, r, fused_right=True)

    flops = 2 * n_units * h * w * wo + 2 * n_units * ho * (g * h) * wo
    bytes_acc = n_units * (unit_in + unit_out) + (w * wo + g * g * h * ho) * 4

    return pl.pallas_call(
        kernel,
        out_shape=jax.ShapeDtypeStruct((n_units * ho, wo), jnp.float32),
        grid=(n_units // G,),
        in_specs=[
            pl.BlockSpec((G * h, w), lambda i: (i, 0)),
            pl.BlockSpec((w, wo), lambda i: (0, 0)),
            pl.BlockSpec((g * ho, g * h), lambda i: (0, 0)),
        ],
        out_specs=pl.BlockSpec((G * ho, wo), lambda i: (i, 0)),
        compiler_params=pltpu.CompilerParams(
            dimension_semantics=("parallel",),
            vmem_limit_bytes=_VMEM_LIMIT),
        cost_estimate=pl.CostEstimate(flops=int(flops), transcendentals=0,
                                      bytes_accessed=int(bytes_acc)),
    )(x2d, jnp.asarray(m_w), m_h_bd)


def _resize_d(x2d, n_units, d, do, m_d):
    """D resize with lane-dense merged Ho*Wo axis.
    x2d: (n_units*D, L) -> (n_units*Do, L), per (b,c): out = m_d @ x."""
    L = x2d.shape[1]
    Lt = _choose_lane_tile(L)
    unit_in = d * Lt * 4
    unit_out = do * Lt * 4
    G, g = _choose_groups(n_units, d, do, unit_in, unit_out)
    r = G // g
    m_d_bd = jnp.asarray(_block_diag(m_d, g))
    kernel = _make_groupwise_kernel(d, do, g, r, fused_right=False)

    flops = 2 * n_units * do * (g * d) * L
    bytes_acc = n_units * (d + do) * L * 4 + g * g * d * do * 4

    return pl.pallas_call(
        kernel,
        out_shape=jax.ShapeDtypeStruct((n_units * do, L), jnp.float32),
        grid=(n_units // G, L // Lt),
        in_specs=[
            pl.BlockSpec((G * d, Lt), lambda i, j: (i, j)),
            pl.BlockSpec((g * do, g * d), lambda i, j: (0, 0)),
        ],
        out_specs=pl.BlockSpec((G * do, Lt), lambda i, j: (i, j)),
        compiler_params=pltpu.CompilerParams(
            dimension_semantics=("parallel", "parallel"),
            vmem_limit_bytes=_VMEM_LIMIT),
        cost_estimate=pl.CostEstimate(flops=int(flops), transcendentals=0,
                                      bytes_accessed=int(bytes_acc)),
    )(x2d, m_d_bd)


# --------------------------------------------------------------------------- forward
def resize_transformer_block(x, factor, mode="trilinear"):
    """Pallas forward of ResizeTransformer_block.  x: (B, C, D, H, W) NCDHW."""
    assert mode == "trilinear"
    if factor == 1:
        return x
    x = x.astype(jnp.float32)
    b, c, d, h, w = x.shape
    do = int(math.floor(d * factor))
    ho = int(math.floor(h * factor))
    wo = int(math.floor(w * factor))

    # Trace-time interpolation matrices.  The module's `factor *` rescale is
    # folded into the W matrix (factor*interp(x) == interp(factor*x)).
    m_w = _interp_matrix(w, wo).T * np.float32(factor)   # (W, Wo)
    m_h = _interp_matrix(h, ho)                          # (Ho, H)
    m_d = _interp_matrix(d, do)                          # (Do, D)

    # Stage 1: fused W+H resize over all B*C*D planes (one HBM read, one write).
    y = _resize_hw(x.reshape(b * c * d * h, w), b * c * d, h, ho, m_w, m_h)
    # (B*C*D*Ho, Wo) -> (B*C*D, Ho*Wo) is a contiguous, metadata-only reshape.
    # Stage 2: D resize; Ho*Wo stays merged on the lane axis (lane-dense I/O).
    y = _resize_d(y.reshape(b * c * d, ho * wo), b * c, d, do, m_d)
    return y.reshape(b, c, do, ho, wo)


# --------------------------------------------------------------------------- pure-JAX reference (independent gather+lerp)
def _ref_interp_axis(x, axis, n_out):
    n_in = x.shape[axis]
    if n_out == 1:
        src = jnp.zeros((1,), jnp.float32)
    else:
        src = jnp.arange(n_out, dtype=jnp.float32) * (n_in - 1) / (n_out - 1)
    i0 = jnp.clip(jnp.floor(src).astype(jnp.int32), 0, n_in - 1)
    i1 = jnp.clip(i0 + 1, 0, n_in - 1)
    t = src - i0.astype(jnp.float32)
    x0 = jnp.take(x, i0, axis=axis)
    x1 = jnp.take(x, i1, axis=axis)
    shp = [1] * x.ndim
    shp[axis] = n_out
    t = t.reshape(shp)
    return x0 * (1.0 - t) + x1 * t


def ref_resize_transformer_block(x, factor):
    if factor == 1:
        return x
    b, c, d, h, w = x.shape
    do = int(math.floor(d * factor))
    ho = int(math.floor(h * factor))
    wo = int(math.floor(w * factor))
    y = x.astype(jnp.float32) * jnp.float32(factor)  # scale commutes with linear interp
    y = _ref_interp_axis(y, 2, do)
    y = _ref_interp_axis(y, 3, ho)
    y = _ref_interp_axis(y, 4, wo)
    return y


# --------------------------------------------------------------------------- main
if __name__ == "__main__":
    B, C, D, H, W = 2, 3, 16, 16, 16  # flow-like input, small spatial size
    x = jax.random.normal(jax.random.PRNGKey(0), (B, C, D, H, W), jnp.float32)

    for factor in (2.0, 0.5):  # exercise both the upsample and downsample branches
        fwd = jax.jit(partial(resize_transformer_block, factor=factor))
        out = jax.block_until_ready(fwd(x))

        Do = int(math.floor(D * factor))
        Ho = int(math.floor(H * factor))
        Wo = int(math.floor(W * factor))
        assert out.shape == (B, C, Do, Ho, Wo), out.shape
        assert bool(jnp.all(jnp.isfinite(out)))

        ref = ref_resize_transformer_block(x, factor)
        assert bool(jnp.allclose(out, ref, atol=2e-2, rtol=2e-2)), \
            float(jnp.max(jnp.abs(out - ref)))

    # factor == 1 is the identity branch (no interpolation in the reference).
    assert bool(jnp.allclose(resize_transformer_block(x, 1.0), x))

    print("KERNEL_OK")
</pallas_src>

<mosaic_0001>
module attributes {stable_mosaic.version = 11 : i64} {
  func.func @kernel(%arg0: i32, %arg1: memref<768x16xf32, #tpu.memory_space<vmem>>, %arg2: memref<16x32xf32, #tpu.memory_space<vmem>>, %arg3: memref<512x256xf32, #tpu.memory_space<vmem>>, %arg4: memref<1536x32xf32, #tpu.memory_space<vmem>>) attributes {dimension_semantics = [#tpu.dimension_semantics<parallel>], iteration_bounds = array<i64: 2>, scalar_prefetch = 0 : i64, scratch_operands = 0 : i64, tpu.core_type = #tpu.core_type<tc>, window_params = [{transform_indices = @transform_0, window_bounds = array<i64: 768, 16>}, {pipeline_mode = #tpu.pipeline_mode<synchronous>, transform_indices = @transform_1, window_bounds = array<i64: 16, 32>}, {pipeline_mode = #tpu.pipeline_mode<synchronous>, transform_indices = @transform_2, window_bounds = array<i64: 512, 256>}, {transform_indices = @transform_3, window_bounds = array<i64: 1536, 32>}]} {
    %c0 = arith.constant 0 : index
    %c0_0 = arith.constant 0 : index
    %0 = vector.load %arg2[%c0, %c0_0] : memref<16x32xf32, #tpu.memory_space<vmem>>, vector<16x32xf32>
    %c0_1 = arith.constant 0 : index
    %c0_2 = arith.constant 0 : index
    %1 = vector.load %arg3[%c0_1, %c0_2] : memref<512x256xf32, #tpu.memory_space<vmem>>, vector<512x256xf32>
    %c0_i32 = arith.constant 0 : i32
    %c256_i32 = arith.constant 256 : i32
    %2 = arith.muli %c0_i32, %c256_i32 : i32
    %3 = tpu.assume_multiple %2, 256 : i32
    %c512_i32 = arith.constant 512 : i32
    %4 = arith.muli %c0_i32, %c512_i32 : i32
    %5 = tpu.assume_multiple %4, 512 : i32
    %6 = arith.index_cast %3 : i32 to index
    %c0_3 = arith.constant 0 : index
    %7 = vector.load %arg1[%6, %c0_3] : memref<768x16xf32, #tpu.memory_space<vmem>>, vector<256x16xf32>
    %cst = arith.constant dense<0.000000e+00> : vector<256x32xf32>
    %8 = tpu.matmul %7, %0, %cst {dimension_numbers = #tpu.dot_dimension_numbers<[1], [0], [0], [1], [0, 0, 1, 1], [], []>} : vector<256x16xf32>, vector<16x32xf32>, vector<256x32xf32> -> vector<256x32xf32>
    %cst_4 = arith.constant dense<0.000000e+00> : vector<512x32xf32>
    %9 = tpu.matmul %1, %8, %cst_4 {dimension_numbers = #tpu.dot_dimension_numbers<[1], [0], [0], [1], [0, 0, 1, 1], [], []>} : vector<512x256xf32>, vector<256x32xf32>, vector<512x32xf32> -> vector<512x32xf32>
    %10 = arith.index_cast %5 : i32 to index
    %c0_5 = arith.constant 0 : index
    %11 = vector.load %arg4[%10, %c0_5] : memref<1536x32xf32, #tpu.memory_space<vmem>>, vector<512x32xf32>
    tpu.vector_store %arg4[%10, %c0_5], %9 {strides = array<i32>} : memref<1536x32xf32, #tpu.memory_space<vmem>>, vector<512x32xf32>,
    %c1_i32 = arith.constant 1 : i32
    %c256_i32_6 = arith.constant 256 : i32
    %12 = arith.muli %c1_i32, %c256_i32_6 : i32
    %13 = tpu.assume_multiple %12, 256 : i32
    %c512_i32_7 = arith.constant 512 : i32
    %14 = arith.muli %c1_i32, %c512_i32_7 : i32
    %15 = tpu.assume_multiple %14, 512 : i32
    %16 = arith.index_cast %13 : i32 to index
    %c0_8 = arith.constant 0 : index
    %17 = vector.load %arg1[%16, %c0_8] : memref<768x16xf32, #tpu.memory_space<vmem>>, vector<256x16xf32>
    %cst_9 = arith.constant dense<0.000000e+00> : vector<256x32xf32>
    %18 = tpu.matmul %17, %0, %cst_9 {dimension_numbers = #tpu.dot_dimension_numbers<[1], [0], [0], [1], [0, 0, 1, 1], [], []>} : vector<256x16xf32>, vector<16x32xf32>, vector<256x32xf32> -> vector<256x32xf32>
    %cst_10 = arith.constant dense<0.000000e+00> : vector<512x32xf32>
    %19 = tpu.matmul %1, %18, %cst_10 {dimension_numbers = #tpu.dot_dimension_numbers<[1], [0], [0], [1], [0, 0, 1, 1], [], []>} : vector<512x256xf32>, vector<256x32xf32>, vector<512x32xf32> -> vector<512x32xf32>
    %20 = arith.index_cast %15 : i32 to index
    %c0_11 = arith.constant 0 : index
    %21 = vector.load %arg4[%20, %c0_11] : memref<1536x32xf32, #tpu.memory_space<vmem>>, vector<512x32xf32>
    tpu.vector_store %arg4[%20, %c0_11], %19 {strides = array<i32>} : memref<1536x32xf32, #tpu.memory_space<vmem>>, vector<512x32xf32>,
    %c2_i32 = arith.constant 2 : i32
    %c256_i32_12 = arith.constant 256 : i32
    %22 = arith.muli %c2_i32, %c256_i32_12 : i32
    %23 = tpu.assume_multiple %22, 256 : i32
    %c512_i32_13 = arith.constant 512 : i32
    %24 = arith.muli %c2_i32, %c512_i32_13 : i32
    %25 = tpu.assume_multiple %24, 512 : i32
    %26 = arith.index_cast %23 : i32 to index
    %c0_14 = arith.constant 0 : index
    %27 = vector.load %arg1[%26, %c0_14] : memref<768x16xf32, #tpu.memory_space<vmem>>, vector<256x16xf32>
    %cst_15 = arith.constant dense<0.000000e+00> : vector<256x32xf32>
    %28 = tpu.matmul %27, %0, %cst_15 {dimension_numbers = #tpu.dot_dimension_numbers<[1], [0], [0], [1], [0, 0, 1, 1], [], []>} : vector<256x16xf32>, vector<16x32xf32>, vector<256x32xf32> -> vector<256x32xf32>
    %cst_16 = arith.constant dense<0.000000e+00> : vector<512x32xf32>
    %29 = tpu.matmul %1, %28, %cst_16 {dimension_numbers = #tpu.dot_dimension_numbers<[1], [0], [0], [1], [0, 0, 1, 1], [], []>} : vector<512x256xf32>, vector<256x32xf32>, vector<512x32xf32> -> vector<512x32xf32>
    %30 = arith.index_cast %25 : i32 to index
    %c0_17 = arith.constant 0 : index
    %31 = vector.load %arg4[%30, %c0_17] : memref<1536x32xf32, #tpu.memory_space<vmem>>, vector<512x32xf32>
    tpu.vector_store %arg4[%30, %c0_17], %29 {strides = array<i32>} : memref<1536x32xf32, #tpu.memory_space<vmem>>, vector<512x32xf32>,
    %c3_i32 = arith.constant 3 : i32
    return
  }
  func.func @transform_0(%arg0: i32) -> (i32, i32) {
    %c0_i32 = arith.constant 0 : i32
    %c0_i32_0 = arith.constant 0 : i32
    return %arg0, %c0_i32 : i32, i32
  }
  func.func @transform_1(%arg0: i32) -> (i32, i32) {
    %c0_i32 = arith.constant 0 : i32
    %c0_i32_0 = arith.constant 0 : i32
    %c0_i32_1 = arith.constant 0 : i32
    return %c0_i32, %c0_i32_0 : i32, i32
  }
  func.func @transform_2(%arg0: i32) -> (i32, i32) {
    %c0_i32 = arith.constant 0 : i32
    %c0_i32_0 = arith.constant 0 : i32
    %c0_i32_1 = arith.constant 0 : i32
    return %c0_i32, %c0_i32_0 : i32, i32
  }
  func.func @transform_3(%arg0: i32) -> (i32, i32) {
    %c0_i32 = arith.constant 0 : i32
    %c0_i32_0 = arith.constant 0 : i32
    return %arg0, %c0_i32 : i32, i32
  }
}

module attributes {stable_mosaic.version = 11 : i64} {
  func.func @kernel(%arg0: i32, %arg1: i32, %arg2: memref<48x1024xf32, #tpu.memory_space<vmem>>, %arg3: memref<96x48xf32, #tpu.memory_space<vmem>>, %arg4: memref<96x1024xf32, #tpu.memory_space<vmem>>) attributes {dimension_semantics = [#tpu.dimension_semantics<parallel>, #tpu.dimension_semantics<parallel>], iteration_bounds = array<i64: 2, 1>, scalar_prefetch = 0 : i64, scratch_operands = 0 : i64, tpu.core_type = #tpu.core_type<tc>, window_params = [{transform_indices = @transform_0, window_bounds = array<i64: 48, 1024>}, {pipeline_mode = #tpu.pipeline_mode<synchronous>, transform_indices = @transform_1, window_bounds = array<i64: 96, 48>}, {transform_indices = @transform_2, window_bounds = array<i64: 96, 1024>}]} {
    %c0 = arith.constant 0 : index
    %c0_0 = arith.constant 0 : index
    %0 = vector.load %arg3[%c0, %c0_0] : memref<96x48xf32, #tpu.memory_space<vmem>>, vector<96x48xf32>
    %c0_1 = arith.constant 0 : index
    %c0_2 = arith.constant 0 : index
    %1 = vector.load %arg2[%c0_1, %c0_2] : memref<48x1024xf32, #tpu.memory_space<vmem>>, vector<48x1024xf32>
    %cst = arith.constant dense<0.000000e+00> : vector<96x1024xf32>
    %2 = tpu.matmul %0, %1, %cst {dimension_numbers = #tpu.dot_dimension_numbers<[1], [0], [0], [1], [0, 0, 1, 1], [], []>} : vector<96x48xf32>, vector<48x1024xf32>, vector<96x1024xf32> -> vector<96x1024xf32>
    %c0_3 = arith.constant 0 : index
    %c0_4 = arith.constant 0 : index
    %3 = vector.load %arg4[%c0_3, %c0_4] : memref<96x1024xf32, #tpu.memory_space<vmem>>, vector<96x1024xf32>
    tpu.vector_store %arg4[%c0_3, %c0_4], %2 {strides = array<i32>} : memref<96x1024xf32, #tpu.memory_space<vmem>>, vector<96x1024xf32>,
    return
  }
  func.func @transform_0(%arg0: i32, %arg1: i32) -> (i32, i32) {
    %c0_i32 = arith.constant 0 : i32
    return %arg0, %arg1 : i32, i32
  }
  func.func @transform_1(%arg0: i32, %arg1: i32) -> (i32, i32) {
    %c0_i32 = arith.constant 0 : i32
    %c0_i32_0 = arith.constant 0 : i32
    %c0_i32_1 = arith.constant 0 : i32
    return %c0_i32, %c0_i32_0 : i32, i32
  }
  func.func @transform_2(%arg0: i32, %arg1: i32) -> (i32, i32) {
    %c0_i32 = arith.constant 0 : i32
    return %arg0, %arg1 : i32, i32
  }
}

</mosaic_0001>

<llo_original>
// kernel: resize_transformer_block.3
$region0: #{resize_transformer_block.3}
  #allocation0 [shape = 'u32[]', space=smem, size = 0x4, offset = 0x4, fixed_abs, tag = 'smem constant byte address 0x4 - core index']
  #allocation1 [shape = 'u32[144,128]{1,0:T(1,128)}', space=vmem, size = 0x12000, scoped, tag = 'internal scratch']
  %s0 = inlined_call_operand.vmem [shape: f32[96,1024], index: 0, kind: input, shape index: {}]
  %s1 = inlined_call_operand.vmem [shape: f32[96,48], index: 1, kind: input, shape index: {}]
  %s2 = inlined_call_operand.vmem [shape: f32[192,1024], index: 2, kind: output, shape index: {}]
  %s3 = sld [smem:[#allocation0]]
  $region41: #{resize_transformer_block.3} parent=0
    _
  %s5 = ssub.s32 1, %s3
  %s6 = scalar_select 0, %s5, %s3
  loop: start=0, step=1, limit=4
  $region2: #{resize_transformer_block.3} parent=0 // loop_pre_header
    _
  $region3: #{resize_transformer_block.3} parent=0 // loop_header
    %s8 = sphi 0, %s12
    %p9 = scmp.ge.s32.totalorder %s8, 4
    %s15 = sphi 0, %s27
    %s16 = sphi 0, %s23
    %s17 = sphi 0, %s15
    %s18 = sphi 0, %s16
    %s19 = sphi 0, %s17
    %s20 = sphi 0, %s18
    %s32 = sphi 0, %s34
    %s35 = sphi 0, %s32
    %s36 = sphi 0, %s35
    %s52 = sphi 0, %s36
    %s56 = sphi 0, %s56
    %s58 = sphi 0, %s56
    %s59 = sphi 0, %s58
    %s73 = sphi 0, %s59
    %s81 = sphi 0, %s83
    %s84 = sphi 0, %s81
    %s85 = sphi 0, %s84
    %s101 = sphi 0, %s85
  $region4: #{resize_transformer_block.3} parent=0 // loop_header_branch
    %11 = sbr.rel (%p9) target = $region8
  $region5: #{resize_transformer_block.3} parent=0 // loop_body
    %s13 = ssub.s32 %s8, 1
    %s14 = ssub.s32 %s8, 2
    %s21 = sadd.s32 1, %s16
    %p22 = scmp.ge.s32.totalorder %s21, 1
    %s23 = scalar_select %p22, 0, %s21
    %s24 = sadd.s32 1, %s15
    %s25 = scalar_select %p22, %s24, %s15
    %p26 = scmp.ge.s32.totalorder %s25, 2
    %s27 = scalar_select %p26, 0, %s25
    %s28 = ssub.s32 %s15, %s27
    %s29 = ssub.s32 %s16, %s23
    %s30 = sor.u32 %s28, %s29
    %p31 = scmp.eq.s32.totalorder %s30, 0
    %s33 = sadd.s32 %s32, 1
    %s34 = scalar_select %p31, %s32, %s33
    %p37 = pneg %p31
    %p38 = scmp.eq.s32.totalorder %s8, 1
    %p39 = por %p37, %p38
    %p40 = scmp.ne.s32.totalorder %s32, %s35
    %p41 = scmp.eq.s32.totalorder %s8, 0
    %p42 = por %p40, %p41
    %p43 = scmp.ne.s32.totalorder %s32, %s35
    %p44 = scmp.eq.s32.totalorder %s13, 1
    %p45 = por %p43, %p44
    %p46 = scmp.ne.s32.totalorder %s35, %s36
    %p47 = scmp.eq.s32.totalorder %s13, 0
    %p48 = por %p46, %p47
    %p49 = scmp.ne.s32.totalorder %s35, %s36
    %p50 = scmp.eq.s32.totalorder %s14, 1
    %p51 = por %p49, %p50
    %p53 = scmp.ne.s32.totalorder %s36, %s52
    %p54 = scmp.eq.s32.totalorder %s14, 0
    %p55 = por %p53, %p54
    %s57 = sadd.s32 %s56, 1
    %p60 = scmp.eq.s32.totalorder %s8, 1
    %p61 = scmp.ne.s32.totalorder %s56, %s58
    %p62 = scmp.eq.s32.totalorder %s8, 0
    %p63 = por %p61, %p62
    %p64 = scmp.ne.s32.totalorder %s56, %s58
    %p65 = scmp.eq.s32.totalorder %s13, 1
    %p66 = por %p64, %p65
    %p67 = scmp.ne.s32.totalorder %s58, %s59
    %p68 = scmp.eq.s32.totalorder %s13, 0
    %p69 = por %p67, %p68
    %p70 = scmp.ne.s32.totalorder %s58, %s59
    %p71 = scmp.eq.s32.totalorder %s14, 1
    %p72 = por %p70, %p71
    %p74 = scmp.ne.s32.totalorder %s59, %s73
    %p75 = scmp.eq.s32.totalorder %s14, 0
    %p76 = por %p74, %p75
    %s77 = ssub.s32 %s15, %s27
    %s78 = ssub.s32 %s16, %s23
    %s79 = sor.u32 %s77, %s78
    %p80 = scmp.eq.s32.totalorder %s79, 0
    %s82 = sadd.s32 %s81, 1
    %s83 = scalar_select %p80, %s81, %s82
    %p86 = pneg %p80
    %p87 = scmp.eq.s32.totalorder %s8, 1
    %p88 = por %p86, %p87
    %p89 = scmp.ne.s32.totalorder %s81, %s84
    %p90 = scmp.eq.s32.totalorder %s8, 0
    %p91 = por %p89, %p90
    %p92 = scmp.ne.s32.totalorder %s81, %s84
    %p93 = scmp.eq.s32.totalorder %s13, 1
    %p94 = por %p92, %p93
    %p95 = scmp.ne.s32.totalorder %s84, %s85
    %p96 = scmp.eq.s32.totalorder %s13, 0
    %p97 = por %p95, %p96
    %p98 = scmp.ne.s32.totalorder %s84, %s85
    %p99 = scmp.eq.s32.totalorder %s14, 1
    %p100 = por %p98, %p99
    %p102 = scmp.ne.s32.totalorder %s85, %s101
    %p103 = scmp.eq.s32.totalorder %s14, 0
    %p104 = por %p102, %p103
    %p105 = scmp.le.s32.totalorder 1, %s8
    %p106 = scmp.lt.s32.totalorder %s8, 3
    %p107 = pnand %p105, %p106
    %p108 = pneg %p107
    // Predicated region
    $region9: #{resize_transformer_block.3} parent=5 // pred_check
      _
    $region10: #{resize_transformer_block.3} parent=5 // pred_check_branch
      %110 = sbr.rel (%p107) target = $region12
    $region11: #{resize_transformer_block.3} parent=5 // pred_region
      %s111 = ssub.s32 %s8, 1
      // Predicated region
      $region13: #{resize_transformer_block.3} parent=11 // pred_check
        %p112 = pneg %p69
      $region14: #{resize_transformer_block.3} parent=11 // pred_check_branch
        %114 = sbr.rel (%p112) target = $region16
      $region15: #{resize_transformer_block.3} parent=11 // pred_region
        _
      $region16: #{resize_transformer_block.3} parent=11 // pred_fallthru
        _
    $region12: #{resize_transformer_block.3} parent=5 // pred_fallthru
      _
    %p115 = scmp.lt.s32.totalorder %s8, 2
    // Predicated region
    $region17: #{resize_transformer_block.3} parent=5 // pred_check
      %p116 = pneg %p115
    $region18: #{resize_transformer_block.3} parent=5 // pred_check_branch
      %118 = sbr.rel (%p116) target = $region20
    $region19: #{resize_transformer_block.3} parent=5 // pred_region
      // Predicated region
      $region21: #{resize_transformer_block.3} parent=19 // pred_check
        %p119 = pneg %p42
      $region22: #{resize_transformer_block.3} parent=19 // pred_check_branch
        %121 = sbr.rel (%p119) target = $region24
      $region23: #{resize_transformer_block.3} parent=19 // pred_region
        %s122 = smul.u32 6, %s15
        %s123 = smul.u32 8, %s16
        %p124 = scmp.lt.s32.totalorder %s122, 11
        %s125 = scalar_select %p124, %s122, 11
        %p126 = scmp.lt.s32.totalorder %s123, 7
        %s127 = scalar_select %p126, %s123, 7
        %s128 = smul.addr %s125, 8
        %s129 = sadd.s32 %s127, %s128
        %s130 = smul.addr %s129, 8
        %s131 = scalar_lea.vmem %s0, %s130
        %s132 = smul.u32 6, %s15
        %s133 = smul.u32 8, %s16
      $region24: #{resize_transformer_block.3} parent=19 // pred_fallthru
        _
    $region20: #{resize_transformer_block.3} parent=5 // pred_fallthru
      _
    %p134 = scmp.le.s32.totalorder 1, %s8
    %p135 = scmp.lt.s32.totalorder %s8, 3
    %p136 = pnand %p134, %p135
    %p137 = pneg %p136
    // Predicated region
    $region25: #{resize_transformer_block.3} parent=5 // pred_check
      _
    $region26: #{resize_transformer_block.3} parent=5 // pred_check_branch
      %139 = sbr.rel (%p136) target = $region28
    $region27: #{resize_transformer_block.3} parent=5 // pred_region
      %s140 = ssub.s32 %s8, 1
      %s141 = smul.u32 6, %s17
      %s142 = smul.u32 8, %s18
      %p143 = scmp.lt.s32.totalorder %s141, 11
      %s144 = scalar_select %p143, %s141, 11
      %p145 = scmp.lt.s32.totalorder %s142, 7
      %s146 = scalar_select %p145, %s142, 7
      %s147 = smul.addr %s144, 8
      %s148 = sadd.s32 %s146, %s147
      %s149 = smul.addr %s148, 8
      %s150 = scalar_lea.vmem %s0, %s149
      %p151 = pneg %p48
      %p152 = pneg %p45
      %p153 = pneg %p69
      %p154 = pneg %p66
      %p155 = pneg %p97
      %p156 = pneg %p94
      %s157 = smul.u32 12, %s17
      %s158 = smul.u32 8, %s18
      %p159 = scmp.lt.s32.totalorder %s157, 23
      %s160 = scalar_select %p159, %s157, 23
      %p161 = scmp.lt.s32.totalorder %s158, 7
      %s162 = scalar_select %p161, %s158, 7
      %s163 = smul.addr %s160, 8
      %s164 = sadd.s32 %s162, %s163
      %s165 = smul.addr %s164, 8
      %s166 = scalar_lea.vmem %s2, %s165
      %s167 = smul.u32 6, %s17
      %s168 = smul.u32 8, %s18
      %p169 = scmp.lt.s32.totalorder %s167, 11
      %s170 = scalar_select %p169, %s167, 11
      %p171 = scmp.lt.s32.totalorder %s168, 7
      %s172 = scalar_select %p171, %s168, 7
      %s173 = smul.addr %s170, 8
      %s174 = sadd.s32 %s172, %s173
      %s175 = smul.addr %s174, 8
      %s176 = scalar_lea.vmem %s0, %s175
      %s177 = smul.u32 6, %s17
      %s178 = smul.u32 8, %s18
      %s179 = smul.u32 12, %s17
      %s180 = smul.u32 8, %s18
      %p181 = scmp.lt.s32.totalorder %s179, 23
      %s182 = scalar_select %p181, %s179, 23
      %p183 = scmp.lt.s32.totalorder %s180, 7
      %s184 = scalar_select %p183, %s180, 7
      %s185 = smul.addr %s182, 8
      %s186 = sadd.s32 %s184, %s185
      %s187 = smul.addr %s186, 8
      %s188 = scalar_lea.vmem %s2, %s187
      %s189 = smul.u32 12, %s17
      %s190 = smul.u32 8, %s18
      %v191 = vld [vmem:[%s1] sm:$0xff]
      %v192 = vld [vmem:[%s1 + $0x8] sm:$0xff]
      %v193 = vld [vmem:[%s1 + $0x10] sm:$0xff]
      %v194 = vld [vmem:[%s1 + $0x18] sm:$0xff]
      %v195 = vld [vmem:[%s1 + $0x20] sm:$0xff]
      %v196 = vld [vmem:[%s1 + $0x28] sm:$0xff]
      %v197 = vld [vmem:[%s1 + $0x30] sm:$0xff]
      %v198 = vld [vmem:[%s1 + $0x38] sm:$0xff]
      %v199 = vld [vmem:[%s1 + $0x40] sm:$0xff]
      %v200 = vld [vmem:[%s1 + $0x48] sm:$0xff]
      %v201 = vld [vmem:[%s1 + $0x50] sm:$0xff]
      %v202 = vld [vmem:[%s1 + $0x58] sm:$0xff]
      %v203 = vld [vmem:[%s176] sm:$0xff]
      %v204 = vld [vmem:[%s176 + $0x8] sm:$0xff]
      %v205 = vld [vmem:[%s176 + $0x10] sm:$0xff]
      %v206 = vld [vmem:[%s176 + $0x18] sm:$0xff]
      %v207 = vld [vmem:[%s176 + $0x20] sm:$0xff]
      %v208 = vld [vmem:[%s176 + $0x28] sm:$0xff]
      %v209 = vld [vmem:[%s176 + $0x30] sm:$0xff]
      %v210 = vld [vmem:[%s176 + $0x38] sm:$0xff]
      %v211 = vld [vmem:[%s176 + $0x40] sm:$0xff]
      %v212 = vld [vmem:[%s176 + $0x48] sm:$0xff]
      %v213 = vld [vmem:[%s176 + $0x50] sm:$0xff]
      %v214 = vld [vmem:[%s176 + $0x58] sm:$0xff]
      %v215 = vld [vmem:[%s176 + $0x60] sm:$0xff]
      %v216 = vld [vmem:[%s176 + $0x68] sm:$0xff]
      %v217 = vld [vmem:[%s176 + $0x70] sm:$0xff]
      %v218 = vld [vmem:[%s176 + $0x78] sm:$0xff]
      %v219 = vld [vmem:[%s176 + $0x80] sm:$0xff]
      %v220 = vld [vmem:[%s176 + $0x88] sm:$0xff]
      %v221 = vld [vmem:[%s176 + $0x90] sm:$0xff]
      %v222 = vld [vmem:[%s176 + $0x98] sm:$0xff]
      %v223 = vld [vmem:[%s176 + $0xa0] sm:$0xff]
      %v224 = vld [vmem:[%s176 + $0xa8] sm:$0xff]
      %v225 = vld [vmem:[%s176 + $0xb0] sm:$0xff]
      %v226 = vld [vmem:[%s176 + $0xb8] sm:$0xff]
      %v227 = vld [vmem:[%s176 + $0xc0] sm:$0xff]
      %v228 = vld [vmem:[%s176 + $0xc8] sm:$0xff]
      %v229 = vld [vmem:[%s176 + $0xd0] sm:$0xff]
      %v230 = vld [vmem:[%s176 + $0xd8] sm:$0xff]
      %v231 = vld [vmem:[%s176 + $0xe0] sm:$0xff]
      %v232 = vld [vmem:[%s176 + $0xe8] sm:$0xff]
      %v233 = vld [vmem:[%s176 + $0xf0] sm:$0xff]
      %v234 = vld [vmem:[%s176 + $0xf8] sm:$0xff]
      %v235 = vld [vmem:[%s176 + $0x100] sm:$0xff]
      %v236 = vld [vmem:[%s176 + $0x108] sm:$0xff]
      %v237 = vld [vmem:[%s176 + $0x110] sm:$0xff]
      %v238 = vld [vmem:[%s176 + $0x118] sm:$0xff]
      %v239 = vld [vmem:[%s176 + $0x120] sm:$0xff]
      %v240 = vld [vmem:[%s176 + $0x128] sm:$0xff]
      %v241 = vld [vmem:[%s176 + $0x130] sm:$0xff]
      %v242 = vld [vmem:[%s176 + $0x138] sm:$0xff]
      %v243 = vld [vmem:[%s176 + $0x140] sm:$0xff]
      %v244 = vld [vmem:[%s176 + $0x148] sm:$0xff]
      %v245 = vld [vmem:[%s176 + $0x150] sm:$0xff]
      %v246 = vld [vmem:[%s176 + $0x158] sm:$0xff]
      %v247 = vld [vmem:[%s176 + $0x160] sm:$0xff]
      %v248 = vld [vmem:[%s176 + $0x168] sm:$0xff]
      %v249 = vld [vmem:[%s176 + $0x170] sm:$0xff]
      %v250 = vld [vmem:[%s176 + $0x178] sm:$0xff]
      %vm251 = vcmask 392192
      %v253 = vsel %vm251, %v191, 0
      %v256 = vsel %vm251, %v192, 0
      %v259 = vsel %vm251, %v193, 0
      %v262 = vsel %vm251, %v194, 0
      %v265 = vsel %vm251, %v195, 0
      %v268 = vsel %vm251, %v196, 0
      %v271 = vsel %vm251, %v197, 0
      %v274 = vsel %vm251, %v198, 0
      %v277 = vsel %vm251, %v199, 0
      %v280 = vsel %vm251, %v200, 0
      %v283 = vsel %vm251, %v201, 0
      %v286 = vsel %vm251, %v202, 0
      %288 = vmatprep.subr.mxu0 %v204
      %289 = vmatpush1.msra.mxu0 %v203
      %290 = vmatprep.subr.mxu0 %v212
      %291 = vmatpush1.msra.mxu0 %v211
      %292 = vmatprep.subr.mxu0 %v220
      %293 = vmatpush1.msra.mxu0 %v219
      %294 = vmatprep.subr.mxu0 %v228
      %295 = vmatpush1.msra.mxu0 %v227
      %296 = vmatprep.subr.mxu0 %v236
      %297 = vmatpush1.msra.mxu0 %v235
      %298 = vmatprep.subr.mxu0 %v244
      %299 = vmatpush1.msra.mxu0 %v243
      %300 = vmatprep.subr.mxu0 0.0
      %301 = vmatpush1.msra.mxu0 0.0
      %302 = vmatprep.subr.mxu0 0.0
      %303 = vmatpush1.msra.mxu0 0.0
      %304 = vmatprep.subr.mxu0 0.0
      %305 = vmatpush1.msra.mxu0 0.0
      %306 = vmatprep.subr.mxu0 0.0
      %307 = vmatpush1.msra.mxu0 0.0
      %308 = vmatprep.subr.mxu0 0.0
      %309 = vmatpush1.msra.mxu0 0.0
      %310 = vmatprep.subr.mxu0 0.0
      %311 = vmatpush1.msra.mxu0 0.0
      %312 = vmatprep.subr.mxu0 0.0
      %313 = vmatpush1.msra.mxu0 0.0
      %314 = vmatprep.subr.mxu0 0.0
      %315 = vmatpush1.msra.mxu0 0.0
      %316 = vmatprep.subr.mxu0 0.0
      %317 = vmatpush1.msra.mxu0 0.0
      %318 = vmatprep.subr.mxu0 0.0
      %319 = vmatpush1.msra.mxu0 0.0
      %320 = vmatprep.subr.mxu0 0.0
      %321 = vmatpush1.msra.mxu0 0.0
      %322 = vmatprep.subr.mxu0 0.0
      %323 = vmatpush1.msra.mxu0 0.0
      %324 = vmatprep.subr.mxu0 0.0
      %325 = vmatpush1.msra.mxu0 0.0
      %326 = vmatprep.subr.mxu0 0.0
      %327 = vmatpush1.msra.mxu0 0.0
      %328 = vmatprep.subr.mxu0 0.0
      %329 = vmatpush1.msra.mxu0 0.0
      %330 = vmatprep.subr.mxu0 0.0
      %331 = vmatpush1.msra.mxu0 0.0
      %332 = vmatprep.subr.mxu0 0.0
      %333 = vmatpush1.msra.mxu0 0.0
      %334 = vmatprep.subr.mxu0 0.0
      %335 = vmatpush1.msra.mxu0 0.0
      %336 = vmatprep.subr.mxu0 0.0
      %337 = vmatpush1.msra.mxu0 0.0
      %338 = vmatprep.subr.mxu0 0.0
      %339 = vmatpush1.msra.mxu0 0.0
      %340 = vmatprep.subr.mxu0 0.0
      %341 = vmatpush1.msra.mxu0 0.0
      %342 = vmatprep.subr.mxu0 0.0
      %343 = vmatpush1.msra.mxu0 0.0
      %344 = vmatprep.subr.mxu0 0.0
      %345 = vmatpush1.msra.mxu0 0.0
      %346 = vmatprep.subr.mxu0 0.0
      %347 = vmatpush1.msra.mxu0 0.0
      %348 = vmatprep.subr.mxu0 0.0
      %349 = vmatpush1.msra.mxu0 0.0
      %350 = vmatprep.subr.mxu0 0.0
      %351 = vmatpush1.msra.mxu0 0.0
      %352 = vmatprep.mubr.f32.mxu0 0.0
      %353 = vmatmul.mubr.f32.gmra.mrb[0].mxu0 %v253
      %v354 = vpop.f32.mrb[0].mxu0
      %v355 = vadd.f32 0.0, %v354
      %v356 = vpop.f32.mrb[0].mxu0
      %v357 = vadd.f32 0.0, %v356
      %358 = vmatprep.mubr.f32.mxu0 0.0
      %359 = vmatmul.mubr.f32.gmra.mrb[0].mxu0 %v256
      %v360 = vpop.f32.mrb[0].mxu0
      %v361 = vadd.f32 0.0, %v360
      %v362 = vpop.f32.mrb[0].mxu0
      %v363 = vadd.f32 0.0, %v362
      %364 = vmatprep.mubr.f32.mxu0 0.0
      %365 = vmatmul.mubr.f32.gmra.mrb[0].mxu0 %v259
      %v366 = vpop.f32.mrb[0].mxu0
      %v367 = vadd.f32 0.0, %v366
      %v368 = vpop.f32.mrb[0].mxu0
      %v369 = vadd.f32 0.0, %v368
      %370 = vmatprep.mubr.f32.mxu0 0.0
      %371 = vmatmul.mubr.f32.gmra.mrb[0].mxu0 %v262
      %v372 = vpop.f32.mrb[0].mxu0
      %v373 = vadd.f32 0.0, %v372
      %v374 = vpop.f32.mrb[0].mxu0
      %v375 = vadd.f32 0.0, %v374
      %376 = vmatprep.mubr.f32.mxu0 0.0
      %377 = vmatmul.mubr.f32.gmra.mrb[0].mxu0 %v265
      %v378 = vpop.f32.mrb[0].mxu0
      %v379 = vadd.f32 0.0, %v378
      %v380 = vpop.f32.mrb[0].mxu0
      %v381 = vadd.f32 0.0, %v380
      %382 = vmatprep.mubr.f32.mxu0 0.0
      %383 = vmatmul.mubr.f32.gmra.mrb[0].mxu0 %v268
      %v384 = vpop.f32.mrb[0].mxu0
      %v385 = vadd.f32 0.0, %v384
      %v386 = vpop.f32.mrb[0].mxu0
      %v387 = vadd.f32 0.0, %v386
      %388 = vmatprep.mubr.f32.mxu0 0.0
      %389 = vmatmul.mubr.f32.gmra.mrb[0].mxu0 %v271
      %v390 = vpop.f32.mrb[0].mxu0
      %v391 = vadd.f32 0.0, %v390
      %v392 = vpop.f32.mrb[0].mxu0
      %v393 = vadd.f32 0.0, %v392
      %394 = vmatprep.mubr.f32.mxu0 0.0
      %395 = vmatmul.mubr.f32.gmra.mrb[0].mxu0 %v274
      %v396 = vpop.f32.mrb[0].mxu0
      %v397 = vadd.f32 0.0, %v396
      %v398 = vpop.f32.mrb[0].mxu0
      %v399 = vadd.f32 0.0, %v398
      %400 = vmatprep.mubr.f32.mxu0 0.0
      %401 = vmatmul.mubr.f32.gmra.mrb[0].mxu0 %v277
      %v402 = vpop.f32.mrb[0].mxu0
      %v403 = vadd.f32 0.0, %v402
      %v404 = vpop.f32.mrb[0].mxu0
      %v405 = vadd.f32 0.0, %v404
      %406 = vmatprep.mubr.f32.mxu0 0.0
      %407 = vmatmul.mubr.f32.gmra.mrb[0].mxu0 %v280
      %v408 = vpop.f32.mrb[0].mxu0
      %v409 = vadd.f32 0.0, %v408
      %v410 = vpop.f32.mrb[0].mxu0
      %v411 = vadd.f32 0.0, %v410
      %412 = vmatprep.mubr.f32.mxu0 0.0
      %413 = vmatmul.mubr.f32.gmra.mrb[0].mxu0 %v283
      %v414 = vpop.f32.mrb[0].mxu0
      %v415 = vadd.f32 0.0, %v414
      %v416 = vpop.f32.mrb[0].mxu0
      %v417 = vadd.f32 0.0, %v416
      %418 = vmatprep.mubr.f32.mxu0 0.0
      %419 = vmatmul.mubr.f32.gmra.mrb[0].mxu0 %v286
      %v420 = vpop.f32.mrb[0].mxu0
      %v421 = vadd.f32 0.0, %v420
      %v422 = vpop.f32.mrb[0].mxu0
      %v423 = vadd.f32 0.0, %v422
      %424 = vdwg.mxu0
      %425 = vmatprep.subr.mxu0 %v206
      %426 = vmatpush1.msra.mxu0 %v205
      %427 = vmatprep.subr.mxu0 %v214
      %428 = vmatpush1.msra.mxu0 %v213
      %429 = vmatprep.subr.mxu0 %v222
      %430 = vmatpush1.msra.mxu0 %v221
      %431 = vmatprep.subr.mxu0 %v230
      %432 = vmatpush1.msra.mxu0 %v229
      %433 = vmatprep.subr.mxu0 %v238
      %434 = vmatpush1.msra.mxu0 %v237
      %435 = vmatprep.subr.mxu0 %v246
      %436 = vmatpush1.msra.mxu0 %v245
      %437 = vmatprep.subr.mxu0 0.0
      %438 = vmatpush1.msra.mxu0 0.0
      %439 = vmatprep.subr.mxu0 0.0
      %440 = vmatpush1.msra.mxu0 0.0
      %441 = vmatprep.subr.mxu0 0.0
      %442 = vmatpush1.msra.mxu0 0.0
      %443 = vmatprep.subr.mxu0 0.0
      %444 = vmatpush1.msra.mxu0 0.0
      %445 = vmatprep.subr.mxu0 0.0
      %446 = vmatpush1.msra.mxu0 0.0
      %447 = vmatprep.subr.mxu0 0.0
      %448 = vmatpush1.msra.mxu0 0.0
      %449 = vmatprep.subr.mxu0 0.0
      %450 = vmatpush1.msra.mxu0 0.0
      %451 = vmatprep.subr.mxu0 0.0
      %452 = vmatpush1.msra.mxu0 0.0
      %453 = vmatprep.subr.mxu0 0.0
      %454 = vmatpush1.msra.mxu0 0.0
      %455 = vmatprep.subr.mxu0 0.0
      %456 = vmatpush1.msra.mxu0 0.0
      %457 = vmatprep.subr.mxu0 0.0
      %458 = vmatpush1.msra.mxu0 0.0
      %459 = vmatprep.subr.mxu0 0.0
      %460 = vmatpush1.msra.mxu0 0.0
      %461 = vmatprep.subr.mxu0 0.0
      %462 = vmatpush1.msra.mxu0 0.0
      %463 = vmatprep.subr.mxu0 0.0
      %464 = vmatpush1.msra.mxu0 0.0
      %465 = vmatprep.subr.mxu0 0.0
      %466 = vmatpush1.msra.mxu0 0.0
      %467 = vmatprep.subr.mxu0 0.0
      %468 = vmatpush1.msra.mxu0 0.0
      %469 = vmatprep.subr.mxu0 0.0
      %470 = vmatpush1.msra.mxu0 0.0
      %471 = vmatprep.subr.mxu0 0.0
      %472 = vmatpush1.msra.mxu0 0.0
      %473 = vmatprep.subr.mxu0 0.0
      %474 = vmatpush1.msra.mxu0 0.0
      %475 = vmatprep.subr.mxu0 0.0
      %476 = vmatpush1.msra.mxu0 0.0
      %477 = vmatprep.subr.mxu0 0.0
      %478 = vmatpush1.msra.mxu0 0.0
      %479 = vmatprep.subr.mxu0 0.0
      %480 = vmatpush1.msra.mxu0 0.0
      %481 = vmatprep.subr.mxu0 0.0
      %482 = vmatpush1.msra.mxu0 0.0
      %483 = vmatprep.subr.mxu0 0.0
      %484 = vmatpush1.msra.mxu0 0.0
      %485 = vmatprep.subr.mxu0 0.0
      %486 = vmatpush1.msra.mxu0 0.0
      %487 = vmatprep.subr.mxu0 0.0
      %488 = vmatpush1.msra.mxu0 0.0
      %489 = vmatprep.mubr.f32.mxu0 0.0
      %490 = vmatmul.mubr.f32.gmra.mrb[0].mxu0 %v253
      %v491 = vpop.f32.mrb[0].mxu0
      %v492 = vadd.f32 0.0, %v491
      %v493 = vpop.f32.mrb[0].mxu0
      %v494 = vadd.f32 0.0, %v493
      %495 = vmatprep.mubr.f32.mxu0 0.0
      %496 = vmatmul.mubr.f32.gmra.mrb[0].mxu0 %v256
      %v497 = vpop.f32.mrb[0].mxu0
      %v498 = vadd.f32 0.0, %v497
      %v499 = vpop.f32.mrb[0].mxu0
      %v500 = vadd.f32 0.0, %v499
      %501 = vmatprep.mubr.f32.mxu0 0.0
      %502 = vmatmul.mubr.f32.gmra.mrb[0].mxu0 %v259
      %v503 = vpop.f32.mrb[0].mxu0
      %v504 = vadd.f32 0.0, %v503
      %v505 = vpop.f32.mrb[0].mxu0
      %v506 = vadd.f32 0.0, %v505
      %507 = vmatprep.mubr.f32.mxu0 0.0
      %508 = vmatmul.mubr.f32.gmra.mrb[0].mxu0 %v262
      %v509 = vpop.f32.mrb[0].mxu0
      %v510 = vadd.f32 0.0, %v509
      %v511 = vpop.f32.mrb[0].mxu0
      %v512 = vadd.f32 0.0, %v511
      %513 = vmatprep.mubr.f32.mxu0 0.0
      %514 = vmatmul.mubr.f32.gmra.mrb[0].mxu0 %v265
      %v515 = vpop.f32.mrb[0].mxu0
      %v516 = vadd.f32 0.0, %v515
      %v517 = vpop.f32.mrb[0].mxu0
      %v518 = vadd.f32 0.0, %v517
      %519 = vmatprep.mubr.f32.mxu0 0.0
      %520 = vmatmul.mubr.f32.gmra.mrb[0].mxu0 %v268
      %v521 = vpop.f32.mrb[0].mxu0
      %v522 = vadd.f32 0.0, %v521
      %v523 = vpop.f32.mrb[0].mxu0
      %v524 = vadd.f32 0.0, %v523
      %525 = vmatprep.mubr.f32.mxu0 0.0
      %526 = vmatmul.mubr.f32.gmra.mrb[0].mxu0 %v271
      %v527 = vpop.f32.mrb[0].mxu0
      %v528 = vadd.f32 0.0, %v527
      %v529 = vpop.f32.mrb[0].mxu0
      %v530 = vadd.f32 0.0, %v529
      %531 = vmatprep.mubr.f32.mxu0 0.0
      %532 = vmatmul.mubr.f32.gmra.mrb[0].mxu0 %v274
      %v533 = vpop.f32.mrb[0].mxu0
      %v534 = vadd.f32 0.0, %v533
      %v535 = vpop.f32.mrb[0].mxu0
      %v536 = vadd.f32 0.0, %v535
      %537 = vmatprep.mubr.f32.mxu0 0.0
      %538 = vmatmul.mubr.f32.gmra.mrb[0].mxu0 %v277
      %v539 = vpop.f32.mrb[0].mxu0
      %v540 = vadd.f32 0.0, %v539
      %v541 = vpop.f32.mrb[0].mxu0
      %v542 = vadd.f32 0.0, %v541
      %543 = vmatprep.mubr.f32.mxu0 0.0
      %544 = vmatmul.mubr.f32.gmra.mrb[0].mxu0 %v280
      %v545 = vpop.f32.mrb[0].mxu0
      %v546 = vadd.f32 0.0, %v545
      %v547 = vpop.f32.mrb[0].mxu0
      %v548 = vadd.f32 0.0, %v547
      %549 = vmatprep.mubr.f32.mxu0 0.0
      %550 = vmatmul.mubr.f32.gmra.mrb[0].mxu0 %v283
      %v551 = vpop.f32.mrb[0].mxu0
      %v552 = vadd.f32 0.0, %v551
      %v553 = vpop.f32.mrb[0].mxu0
      %v554 = vadd.f32 0.0, %v553
      %555 = vmatprep.mubr.f32.mxu0 0.0
      %556 = vmatmul.mubr.f32.gmra.mrb[0].mxu0 %v286
      %v557 = vpop.f32.mrb[0].mxu0
      %v558 = vadd.f32 0.0, %v557
      %v559 = vpop.f32.mrb[0].mxu0
      %v560 = vadd.f32 0.0, %v559
      %561 = vdwg.mxu0
      %562 = vmatprep.subr.mxu0 %v208
      %563 = vmatpush1.msra.mxu0 %v207
      %564 = vmatprep.subr.mxu0 %v216
      %565 = vmatpush1.msra.mxu0 %v215
      %566 = vmatprep.subr.mxu0 %v224
      %567 = vmatpush1.msra.mxu0 %v223
      %568 = vmatprep.subr.mxu0 %v232
      %569 = vmatpush1.msra.mxu0 %v231
      %570 = vmatprep.subr.mxu0 %v240
      %571 = vmatpush1.msra.mxu0 %v239
      %572 = vmatprep.subr.mxu0 %v248
      %573 = vmatpush1.msra.mxu0 %v247
      %574 = vmatprep.subr.mxu0 0.0
      %575 = vmatpush1.msra.mxu0 0.0
      %576 = vmatprep.subr.mxu0 0.0
      %577 = vmatpush1.msra.mxu0 0.0
      %578 = vmatprep.subr.mxu0 0.0
      %579 = vmatpush1.msra.mxu0 0.0
      %580 = vmatprep.subr.mxu0 0.0
      %581 = vmatpush1.msra.mxu0 0.0
      %582 = vmatprep.subr.mxu0 0.0
      %583 = vmatpush1.msra.mxu0 0.0
      %584 = vmatprep.subr.mxu0 0.0
      %585 = vmatpush1.msra.mxu0 0.0
      %586 = vmatprep.subr.mxu0 0.0
      %587 = vmatpush1.msra.mxu0 0.0
      %588 = vmatprep.subr.mxu0 0.0
      %589 = vmatpush1.msra.mxu0 0.0
      %590 = vmatprep.subr.mxu0 0.0
      %591 = vmatpush1.msra.mxu0 0.0
      %592 = vmatprep.subr.mxu0 0.0
      %593 = vmatpush1.msra.mxu0 0.0
      %594 = vmatprep.subr.mxu0 0.0
      %595 = vmatpush1.msra.mxu0 0.0
      %596 = vmatprep.subr.mxu0 0.0
      %597 = vmatpush1.msra.mxu0 0.0
      %598 = vmatprep.subr.mxu0 0.0
      %599 = vmatpush1.msra.mxu0 0.0
      %600 = vmatprep.subr.mxu0 0.0
      %601 = vmatpush1.msra.mxu0 0.0
      %602 = vmatprep.subr.mxu0 0.0
      %603 = vmatpush1.msra.mxu0 0.0
      %604 = vmatprep.subr.mxu0 0.0
      %605 = vmatpush1.msra.mxu0 0.0
      %606 = vmatprep.subr.mxu0 0.0
      %607 = vmatpush1.msra.mxu0 0.0
      %608 = vmatprep.subr.mxu0 0.0
      %609 = vmatpush1.msra.mxu0 0.0
      %610 = vmatprep.subr.mxu0 0.0
      %611 = vmatpush1.msra.mxu0 0.0
      %612 = vmatprep.subr.mxu0 0.0
      %613 = vmatpush1.msra.mxu0 0.0
      %614 = vmatprep.subr.mxu0 0.0
      %615 = vmatpush1.msra.mxu0 0.0
      %616 = vmatprep.subr.mxu0 0.0
      %617 = vmatpush1.msra.mxu0 0.0
      %618 = vmatprep.subr.mxu0 0.0
      %619 = vmatpush1.msra.mxu0 0.0
      %620 = vmatprep.subr.mxu0 0.0
      %621 = vmatpush1.msra.mxu0 0.0
      %622 = vmatprep.subr.mxu0 0.0
      %623 = vmatpush1.msra.mxu0 0.0
      %624 = vmatprep.subr.mxu0 0.0
      %625 = vmatpush1.msra.mxu0 0.0
      %626 = vmatprep.mubr.f32.mxu0 0.0
      %627 = vmatmul.mubr.f32.gmra.mrb[0].mxu0 %v253
      %v628 = vpop.f32.mrb[0].mxu0
      %v629 = vadd.f32 0.0, %v628
      %v630 = vpop.f32.mrb[0].mxu0
      %v631 = vadd.f32 0.0, %v630
      %632 = vmatprep.mubr.f32.mxu0 0.0
      %633 = vmatmul.mubr.f32.gmra.mrb[0].mxu0 %v256
      %v634 = vpop.f32.mrb[0].mxu0
      %v635 = vadd.f32 0.0, %v634
      %v636 = vpop.f32.mrb[0].mxu0
      %v637 = vadd.f32 0.0, %v636
      %638 = vmatprep.mubr.f32.mxu0 0.0
      %639 = vmatmul.mubr.f32.gmra.mrb[0].mxu0 %v259
      %v640 = vpop.f32.mrb[0].mxu0
      %v641 = vadd.f32 0.0, %v640
      %v642 = vpop.f32.mrb[0].mxu0
      %v643 = vadd.f32 0.0, %v642
      %644 = vmatprep.mubr.f32.mxu0 0.0
      %645 = vmatmul.mubr.f32.gmra.mrb[0].mxu0 %v262
      %v646 = vpop.f32.mrb[0].mxu0
      %v647 = vadd.f32 0.0, %v646
      %v648 = vpop.f32.mrb[0].mxu0
      %v649 = vadd.f32 0.0, %v648
      %650 = vmatprep.mubr.f32.mxu0 0.0
      %651 = vmatmul.mubr.f32.gmra.mrb[0].mxu0 %v265
      %v652 = vpop.f32.mrb[0].mxu0
      %v653 = vadd.f32 0.0, %v652
      %v654 = vpop.f32.mrb[0].mxu0
      %v655 = vadd.f32 0.0, %v654
      %656 = vmatprep.mubr.f32.mxu0 0.0
      %657 = vmatmul.mubr.f32.gmra.mrb[0].mxu0 %v268
      %v658 = vpop.f32.mrb[0].mxu0
      %v659 = vadd.f32 0.0, %v658
      %v660 = vpop.f32.mrb[0].mxu0
      %v661 = vadd.f32 0.0, %v660
      %662 = vmatprep.mubr.f32.mxu0 0.0
      %663 = vmatmul.mubr.f32.gmra.mrb[0].mxu0 %v271
      %v664 = vpop.f32.mrb[0].mxu0
      %v665 = vadd.f32 0.0, %v664
      %v666 = vpop.f32.mrb[0].mxu0
      %v667 = vadd.f32 0.0, %v666
      %668 = vmatprep.mubr.f32.mxu0 0.0
      %669 = vmatmul.mubr.f32.gmra.mrb[0].mxu0 %v274
      %v670 = vpop.f32.mrb[0].mxu0
      %v671 = vadd.f32 0.0, %v670
      %v672 = vpop.f32.mrb[0].mxu0
      %v673 = vadd.f32 0.0, %v672
      %674 = vmatprep.mubr.f32.mxu0 0.0
      %675 = vmatmul.mubr.f32.gmra.mrb[0].mxu0 %v277
      %v676 = vpop.f32.mrb[0].mxu0
      %v677 = vadd.f32 0.0, %v676
      %v678 = vpop.f32.mrb[0].mxu0
      %v679 = vadd.f32 0.0, %v678
      %680 = vmatprep.mubr.f32.mxu0 0.0
      %681 = vmatmul.mubr.f32.gmra.mrb[0].mxu0 %v280
      %v682 = vpop.f32.mrb[0].mxu0
      %v683 = vadd.f32 0.0, %v682
      %v684 = vpop.f32.mrb[0].mxu0
      %v685 = vadd.f32 0.0, %v684
      %686 = vmatprep.mubr.f32.mxu0 0.0
      %687 = vmatmul.mubr.f32.gmra.mrb[0].mxu0 %v283
      %v688 = vpop.f32.mrb[0].mxu0
      %v689 = vadd.f32 0.0, %v688
      %v690 = vpop.f32.mrb[0].mxu0
      %v691 = vadd.f32 0.0, %v690
      %692 = vmatprep.mubr.f32.mxu0 0.0
      %693 = vmatmul.mubr.f32.gmra.mrb[0].mxu0 %v286
      %v694 = vpop.f32.mrb[0].mxu0
      %v695 = vadd.f32 0.0, %v694
      %v696 = vpop.f32.mrb[0].mxu0
      %v697 = vadd.f32 0.0, %v696
      %698 = vdwg.mxu0
      %699 = vmatprep.subr.mxu0 %v210
      %700 = vmatpush1.msra.mxu0 %v209
      %701 = vmatprep.subr.mxu0 %v218
      %702 = vmatpush1.msra.mxu0 %v217
      %703 = vmatprep.subr.mxu0 %v226
      %704 = vmatpush1.msra.mxu0 %v225
      %705 = vmatprep.subr.mxu0 %v234
      %706 = vmatpush1.msra.mxu0 %v233
      %707 = vmatprep.subr.mxu0 %v242
      %708 = vmatpush1.msra.mxu0 %v241
      %709 = vmatprep.subr.mxu0 %v250
      %710 = vmatpush1.msra.mxu0 %v249
      %711 = vmatprep.subr.mxu0 0.0
      %712 = vmatpush1.msra.mxu0 0.0
      %713 = vmatprep.subr.mxu0 0.0
      %714 = vmatpush1.msra.mxu0 0.0
      %715 = vmatprep.subr.mxu0 0.0
      %716 = vmatpush1.msra.mxu0 0.0
      %717 = vmatprep.subr.mxu0 0.0
      %718 = vmatpush1.msra.mxu0 0.0
      %719 = vmatprep.subr.mxu0 0.0
      %720 = vmatpush1.msra.mxu0 0.0
      %721 = vmatprep.subr.mxu0 0.0
      %722 = vmatpush1.msra.mxu0 0.0
      %723 = vmatprep.subr.mxu0 0.0
      %724 = vmatpush1.msra.mxu0 0.0
      %725 = vmatprep.subr.mxu0 0.0
      %726 = vmatpush1.msra.mxu0 0.0
      %727 = vmatprep.subr.mxu0 0.0
      %728 = vmatpush1.msra.mxu0 0.0
      %729 = vmatprep.subr.mxu0 0.0
      %730 = vmatpush1.msra.mxu0 0.0
      %731 = vmatprep.subr.mxu0 0.0
      %732 = vmatpush1.msra.mxu0 0.0
      %733 = vmatprep.subr.mxu0 0.0
      %734 = vmatpush1.msra.mxu0 0.0
      %735 = vmatprep.subr.mxu0 0.0
      %736 = vmatpush1.msra.mxu0 0.0
      %737 = vmatprep.subr.mxu0 0.0
      %738 = vmatpush1.msra.mxu0 0.0
      %739 = vmatprep.subr.mxu0 0.0
      %740 = vmatpush1.msra.mxu0 0.0
      %741 = vmatprep.subr.mxu0 0.0
      %742 = vmatpush1.msra.mxu0 0.0
      %743 = vmatprep.subr.mxu0 0.0
      %744 = vmatpush1.msra.mxu0 0.0
      %745 = vmatprep.subr.mxu0 0.0
      %746 = vmatpush1.msra.mxu0 0.0
      %747 = vmatprep.subr.mxu0 0.0
      %748 = vmatpush1.msra.mxu0 0.0
      %749 = vmatprep.subr.mxu0 0.0
      %750 = vmatpush1.msra.mxu0 0.0
      %751 = vmatprep.subr.mxu0 0.0
      %752 = vmatpush1.msra.mxu0 0.0
      %753 = vmatprep.subr.mxu0 0.0
      %754 = vmatpush1.msra.mxu0 0.0
      %755 = vmatprep.subr.mxu0 0.0
      %756 = vmatpush1.msra.mxu0 0.0
      %757 = vmatprep.subr.mxu0 0.0
      %758 = vmatpush1.msra.mxu0 0.0
      %759 = vmatprep.subr.mxu0 0.0
      %760 = vmatpush1.msra.mxu0 0.0
      %761 = vmatprep.subr.mxu0 0.0
      %762 = vmatpush1.msra.mxu0 0.0
      %763 = vmatprep.mubr.f32.mxu0 0.0
      %764 = vmatmul.mubr.f32.gmra.mrb[0].mxu0 %v253
      %v765 = vpop.f32.mrb[0].mxu0
      %v766 = vadd.f32 0.0, %v765
      %v767 = vpop.f32.mrb[0].mxu0
      %v768 = vadd.f32 0.0, %v767
      %769 = vmatprep.mubr.f32.mxu0 0.0
      %770 = vmatmul.mubr.f32.gmra.mrb[0].mxu0 %v256
      %v771 = vpop.f32.mrb[0].mxu0
      %v772 = vadd.f32 0.0, %v771
      %v773 = vpop.f32.mrb[0].mxu0
      %v774 = vadd.f32 0.0, %v773
      %775 = vmatprep.mubr.f32.mxu0 0.0
      %776 = vmatmul.mubr.f32.gmra.mrb[0].mxu0 %v259
      %v777 = vpop.f32.mrb[0].mxu0
      %v778 = vadd.f32 0.0, %v777
      %v779 = vpop.f32.mrb[0].mxu0
      %v780 = vadd.f32 0.0, %v779
      %781 = vmatprep.mubr.f32.mxu0 0.0
      %782 = vmatmul.mubr.f32.gmra.mrb[0].mxu0 %v262
      %v783 = vpop.f32.mrb[0].mxu0
      %v784 = vadd.f32 0.0, %v783
      %v785 = vpop.f32.mrb[0].mxu0
      %v786 = vadd.f32 0.0, %v785
      %787 = vmatprep.mubr.f32.mxu0 0.0
      %788 = vmatmul.mubr.f32.gmra.mrb[0].mxu0 %v265
      %v789 = vpop.f32.mrb[0].mxu0
      %v790 = vadd.f32 0.0, %v789
      %v791 = vpop.f32.mrb[0].mxu0
      %v792 = vadd.f32 0.0, %v791
      %793 = vmatprep.mubr.f32.mxu0 0.0
      %794 = vmatmul.mubr.f32.gmra.mrb[0].mxu0 %v268
      %v795 = vpop.f32.mrb[0].mxu0
      %v796 = vadd.f32 0.0, %v795
      %v797 = vpop.f32.mrb[0].mxu0
      %v798 = vadd.f32 0.0, %v797
      %799 = vmatprep.mubr.f32.mxu0 0.0
      %800 = vmatmul.mubr.f32.gmra.mrb[0].mxu0 %v271
      %v801 = vpop.f32.mrb[0].mxu0
      %v802 = vadd.f32 0.0, %v801
      %v803 = vpop.f32.mrb[0].mxu0
      %v804 = vadd.f32 0.0, %v803
      %805 = vmatprep.mubr.f32.mxu0 0.0
      %806 = vmatmul.mubr.f32.gmra.mrb[0].mxu0 %v274
      %v807 = vpop.f32.mrb[0].mxu0
      %v808 = vadd.f32 0.0, %v807
      %v809 = vpop.f32.mrb[0].mxu0
      %v810 = vadd.f32 0.0, %v809
      %811 = vmatprep.mubr.f32.mxu0 0.0
      %812 = vmatmul.mubr.f32.gmra.mrb[0].mxu0 %v277
      %v813 = vpop.f32.mrb[0].mxu0
      %v814 = vadd.f32 0.0, %v813
      %v815 = vpop.f32.mrb[0].mxu0
      %v816 = vadd.f32 0.0, %v815
      %817 = vmatprep.mubr.f32.mxu0 0.0
      %818 = vmatmul.mubr.f32.gmra.mrb[0].mxu0 %v280
      %v819 = vpop.f32.mrb[0].mxu0
      %v820 = vadd.f32 0.0, %v819
      %v821 = vpop.f32.mrb[0].mxu0
      %v822 = vadd.f32 0.0, %v821
      %823 = vmatprep.mubr.f32.mxu0 0.0
      %824 = vmatmul.mubr.f32.gmra.mrb[0].mxu0 %v283
      %v825 = vpop.f32.mrb[0].mxu0
      %v826 = vadd.f32 0.0, %v825
      %v827 = vpop.f32.mrb[0].mxu0
      %v828 = vadd.f32 0.0, %v827
      %829 = vmatprep.mubr.f32.mxu0 0.0
      %830 = vmatmul.mubr.f32.gmra.mrb[0].mxu0 %v286
      %v831 = vpop.f32.mrb[0].mxu0
      %v832 = vadd.f32 0.0, %v831
      %v833 = vpop.f32.mrb[0].mxu0
      %v834 = vadd.f32 0.0, %v833
      %835 = vdwg.mxu0
      %836 = vst [vmem:[%s188] sm:$0xff] %v355
      %837 = vst [vmem:[%s188 + $0x8] sm:$0xff] %v357
      %838 = vst [vmem:[%s188 + $0x10] sm:$0xff] %v492
      %839 = vst [vmem:[%s188 + $0x18] sm:$0xff] %v494
      %840 = vst [vmem:[%s188 + $0x20] sm:$0xff] %v629
      %841 = vst [vmem:[%s188 + $0x28] sm:$0xff] %v631
      %842 = vst [vmem:[%s188 + $0x30] sm:$0xff] %v766
      %843 = vst [vmem:[%s188 + $0x38] sm:$0xff] %v768
      %844 = vst [vmem:[%s188 + $0x40] sm:$0xff] %v361
      %845 = vst [vmem:[%s188 + $0x48] sm:$0xff] %v363
      %846 = vst [vmem:[%s188 + $0x50] sm:$0xff] %v498
      %847 = vst [vmem:[%s188 + $0x58] sm:$0xff] %v500
      %848 = vst [vmem:[%s188 + $0x60] sm:$0xff] %v635
      %849 = vst [vmem:[%s188 + $0x68] sm:$0xff] %v637
      %850 = vst [vmem:[%s188 + $0x70] sm:$0xff] %v772
      %851 = vst [vmem:[%s188 + $0x78] sm:$0xff] %v774
      %852 = vst [vmem:[%s188 + $0x80] sm:$0xff] %v367
      %853 = vst [vmem:[%s188 + $0x88] sm:$0xff] %v369
      %854 = vst [vmem:[%s188 + $0x90] sm:$0xff] %v504
      %855 = vst [vmem:[%s188 + $0x98] sm:$0xff] %v506
      %856 = vst [vmem:[%s188 + $0xa0] sm:$0xff] %v641
      %857 = vst [vmem:[%s188 + $0xa8] sm:$0xff] %v643
      %858 = vst [vmem:[%s188 + $0xb0] sm:$0xff] %v778
      %859 = vst [vmem:[%s188 + $0xb8] sm:$0xff] %v780
      %860 = vst [vmem:[%s188 + $0xc0] sm:$0xff] %v373
      %861 = vst [vmem:[%s188 + $0xc8] sm:$0xff] %v375
      %862 = vst [vmem:[%s188 + $0xd0] sm:$0xff] %v510
      %863 = vst [vmem:[%s188 + $0xd8] sm:$0xff] %v512
      %864 = vst [vmem:[%s188 + $0xe0] sm:$0xff] %v647
      %865 = vst [vmem:[%s188 + $0xe8] sm:$0xff] %v649
      %866 = vst [vmem:[%s188 + $0xf0] sm:$0xff] %v784
      %867 = vst [vmem:[%s188 + $0xf8] sm:$0xff] %v786
      %868 = vst [vmem:[%s188 + $0x100] sm:$0xff] %v379
      %869 = vst [vmem:[%s188 + $0x108] sm:$0xff] %v381
      %870 = vst [vmem:[%s188 + $0x110] sm:$0xff] %v516
      %871 = vst [vmem:[%s188 + $0x118] sm:$0xff] %v518
      %872 = vst [vmem:[%s188 + $0x120] sm:$0xff] %v653
      %873 = vst [vmem:[%s188 + $0x128] sm:$0xff] %v655
      %874 = vst [vmem:[%s188 + $0x130] sm:$0xff] %v790
      %875 = vst [vmem:[%s188 + $0x138] sm:$0xff] %v792
      %876 = vst [vmem:[%s188 + $0x140] sm:$0xff] %v385
      %877 = vst [vmem:[%s188 + $0x148] sm:$0xff] %v387
      %878 = vst [vmem:[%s188 + $0x150] sm:$0xff] %v522
      %879 = vst [vmem:[%s188 + $0x158] sm:$0xff] %v524
      %880 = vst [vmem:[%s188 + $0x160] sm:$0xff] %v659
      %881 = vst [vmem:[%s188 + $0x168] sm:$0xff] %v661
      %882 = vst [vmem:[%s188 + $0x170] sm:$0xff] %v796
      %883 = vst [vmem:[%s188 + $0x178] sm:$0xff] %v798
      %884 = vst [vmem:[%s188 + $0x180] sm:$0xff] %v391
      %885 = vst [vmem:[%s188 + $0x188] sm:$0xff] %v393
      %886 = vst [vmem:[%s188 + $0x190] sm:$0xff] %v528
      %887 = vst [vmem:[%s188 + $0x198] sm:$0xff] %v530
      %888 = vst [vmem:[%s188 + $0x1a0] sm:$0xff] %v665
      %889 = vst [vmem:[%s188 + $0x1a8] sm:$0xff] %v667
      %890 = vst [vmem:[%s188 + $0x1b0] sm:$0xff] %v802
      %891 = vst [vmem:[%s188 + $0x1b8] sm:$0xff] %v804
      %892 = vst [vmem:[%s188 + $0x1c0] sm:$0xff] %v397
      %893 = vst [vmem:[%s188 + $0x1c8] sm:$0xff] %v399
      %894 = vst [vmem:[%s188 + $0x1d0] sm:$0xff] %v534
      %895 = vst [vmem:[%s188 + $0x1d8] sm:$0xff] %v536
      %896 = vst [vmem:[%s188 + $0x1e0] sm:$0xff] %v671
      %897 = vst [vmem:[%s188 + $0x1e8] sm:$0xff] %v673
      %898 = vst [vmem:[%s188 + $0x1f0] sm:$0xff] %v808
      %899 = vst [vmem:[%s188 + $0x1f8] sm:$0xff] %v810
      %900 = vst [vmem:[%s188 + $0x200] sm:$0xff] %v403
      %901 = vst [vmem:[%s188 + $0x208] sm:$0xff] %v405
      %902 = vst [vmem:[%s188 + $0x210] sm:$0xff] %v540
      %903 = vst [vmem:[%s188 + $0x218] sm:$0xff] %v542
      %904 = vst [vmem:[%s188 + $0x220] sm:$0xff] %v677
      %905 = vst [vmem:[%s188 + $0x228] sm:$0xff] %v679
      %906 = vst [vmem:[%s188 + $0x230] sm:$0xff] %v814
      %907 = vst [vmem:[%s188 + $0x238] sm:$0xff] %v816
      %908 = vst [vmem:[%s188 + $0x240] sm:$0xff] %v409
      %909 = vst [vmem:[%s188 + $0x248] sm:$0xff] %v411
      %910 = vst [vmem:[%s188 + $0x250] sm:$0xff] %v546
      %911 = vst [vmem:[%s188 + $0x258] sm:$0xff] %v548
      %912 = vst [vmem:[%s188 + $0x260] sm:$0xff] %v683
      %913 = vst [vmem:[%s188 + $0x268] sm:$0xff] %v685
      %914 = vst [vmem:[%s188 + $0x270] sm:$0xff] %v820
      %915 = vst [vmem:[%s188 + $0x278] sm:$0xff] %v822
      %916 = vst [vmem:[%s188 + $0x280] sm:$0xff] %v415
      %917 = vst [vmem:[%s188 + $0x288] sm:$0xff] %v417
      %918 = vst [vmem:[%s188 + $0x290] sm:$0xff] %v552
      %919 = vst [vmem:[%s188 + $0x298] sm:$0xff] %v554
      %920 = vst [vmem:[%s188 + $0x2a0] sm:$0xff] %v689
      %921 = vst [vmem:[%s188 + $0x2a8] sm:$0xff] %v691
      %922 = vst [vmem:[%s188 + $0x2b0] sm:$0xff] %v826
      %923 = vst [vmem:[%s188 + $0x2b8] sm:$0xff] %v828
      %924 = vst [vmem:[%s188 + $0x2c0] sm:$0xff] %v421
      %925 = vst [vmem:[%s188 + $0x2c8] sm:$0xff] %v423
      %926 = vst [vmem:[%s188 + $0x2d0] sm:$0xff] %v558
      %927 = vst [vmem:[%s188 + $0x2d8] sm:$0xff] %v560
      %928 = vst [vmem:[%s188 + $0x2e0] sm:$0xff] %v695
      %929 = vst [vmem:[%s188 + $0x2e8] sm:$0xff] %v697
      %930 = vst [vmem:[%s188 + $0x2f0] sm:$0xff] %v832
      %931 = vst [vmem:[%s188 + $0x2f8] sm:$0xff] %v834
      %s932 = smul.u32 12, %s17
      %s933 = smul.u32 8, %s18
      %p934 = scmp.lt.s32.totalorder %s932, 23
      %s935 = scalar_select %p934, %s932, 23
      %p936 = scmp.lt.s32.totalorder %s933, 7
      %s937 = scalar_select %p936, %s933, 7
      %s938 = smul.addr %s935, 8
      %s939 = sadd.s32 %s937, %s938
      %s940 = smul.addr %s939, 8
      %s941 = scalar_lea.vmem %s2, %s940
      // Predicated region
      $region29: #{resize_transformer_block.3} parent=27 // pred_check
        %p942 = pneg %p94
      $region30: #{resize_transformer_block.3} parent=27 // pred_check_branch
        %944 = sbr.rel (%p942) target = $region32
      $region31: #{resize_transformer_block.3} parent=27 // pred_region
        %s945 = smul.u32 12, %s17
        %s946 = smul.u32 8, %s18
      $region32: #{resize_transformer_block.3} parent=27 // pred_fallthru
        _
    $region28: #{resize_transformer_block.3} parent=5 // pred_fallthru
      _
    %p947 = scmp.le.s32.totalorder 2, %s8
    // Predicated region
    $region33: #{resize_transformer_block.3} parent=5 // pred_check
      %p948 = pneg %p947
    $region34: #{resize_transformer_block.3} parent=5 // pred_check_branch
      %950 = sbr.rel (%p948) target = $region36
    $region35: #{resize_transformer_block.3} parent=5 // pred_region
      %s951 = ssub.s32 %s8, 2
      // Predicated region
      $region37: #{resize_transformer_block.3} parent=35 // pred_check
        %p952 = pneg %p100
      $region38: #{resize_transformer_block.3} parent=35 // pred_check_branch
        %954 = sbr.rel (%p952) target = $region40
      $region39: #{resize_transformer_block.3} parent=35 // pred_region
        %s955 = smul.u32 12, %s19
        %s956 = smul.u32 8, %s20
        %p957 = scmp.lt.s32.totalorder %s955, 23
        %s958 = scalar_select %p957, %s955, 23
        %p959 = scmp.lt.s32.totalorder %s956, 7
        %s960 = scalar_select %p959, %s956, 7
        %s961 = smul.addr %s958, 8
        %s962 = sadd.s32 %s960, %s961
        %s963 = smul.addr %s962, 8
        %s964 = scalar_lea.vmem %s2, %s963
      $region40: #{resize_transformer_block.3} parent=35 // pred_fallthru
        _
    $region36: #{resize_transformer_block.3} parent=5 // pred_fallthru
      _
  $region6: #{resize_transformer_block.3} parent=0 // loop_footer
    %s12 = sadd.s32 1, %s8
  $region7: #{resize_transformer_block.3} parent=0 // loop_footer_branch
    %7 = sbr.rel target = $region3
  $region8: #{resize_transformer_block.3} parent=0 // loop_exit
    _

// kernel: resize_transformer_block.2
$region0: #{resize_transformer_block.2}
  #allocation0 [shape = 'u32[]', space=smem, size = 0x4, offset = 0x4, fixed_abs, tag = 'smem constant byte address 0x4 - core index']
  #allocation1 [shape = 'u32[144,128]{1,0:T(1,128)}', space=vmem, size = 0x12000, scoped, tag = 'internal scratch']
  %s0 = inlined_call_operand.hbm [shape: f32[1536,16], index: 0, kind: input, shape index: {}]
  %s1 = inlined_call_operand.hbm [shape: f32[16,32], index: 1, kind: input, shape index: {}]
  %s2 = inlined_call_operand.hbm [shape: f32[512,256], index: 2, kind: input, shape index: {}]
  %s3 = inlined_call_operand.vmem [shape: f32[3072,32], index: 3, kind: output, shape index: {}]
  %s4 = sld [smem:[#allocation0]]
  $region57: #{resize_transformer_block.2} parent=0
    _
  %s6 = ssub.s32 1, %s4
  %s7 = scalar_select 0, %s6, %s4
  $region1: #{resize_transformer_block.2} parent=0
    #allocation2 [shape = 'u8[786432]{0}', space=vmem, size = 0xc0000, scoped, tag = 'input window, operand 0']
    #allocation3 [shape = 's32[2]{0}', space=sflag, size = 0x8, scoped, tag = 'scoped memory for resize_transformer_block.2']
    #allocation4 [shape = 'u8[8192]{0}', space=vmem, size = 0x2000, scoped, tag = 'input window, operand 1, single buffered']
    #allocation5 [shape = 's32[1]{0}', space=sflag, size = 0x4, scoped, tag = 'scoped memory for resize_transformer_block.2']
    #allocation6 [shape = 'u8[524288]{0}', space=vmem, size = 0x80000, scoped, tag = 'input window, operand 2, single buffered']
    %8 = vsyncpa [#allocation3], 0
    %s9 = scalar_lea.sflag [#allocation3], 1
    %10 = vsyncpa %s9, 0
    %11 = vsyncpa [#allocation5], 0
    loop: start=0, step=1, limit=4
    $region2: #{resize_transformer_block.2} parent=1 // loop_pre_header
      _
    $region3: #{resize_transformer_block.2} parent=1 // loop_header
      %s13 = sphi 0, %s17
      %p14 = scmp.ge.s32.totalorder %s13, 4
      %s23 = sphi 0, %s25
      %s26 = sphi 0, %s23
      %s27 = sphi 0, %s26
      %s43 = sphi 0, %s27
      %s47 = sphi 0, %s47
      %s49 = sphi 0, %s47
      %s50 = sphi 0, %s49
      %s64 = sphi 0, %s50
      %s68 = sphi 0, %s68
      %s70 = sphi 0, %s68
      %s71 = sphi 0, %s70
      %s85 = sphi 0, %s71
      %s91 = sphi 0, %s93
      %s94 = sphi 0, %s91
      %s95 = sphi 0, %s94
      %s111 = sphi 0, %s95
    $region4: #{resize_transformer_block.2} parent=1 // loop_header_branch
      %16 = sbr.rel (%p14) target = $region8
    $region5: #{resize_transformer_block.2} parent=1 // loop_body
      %s18 = ssub.s32 %s13, 1
      %s19 = ssub.s32 %s13, 2
      %s20 = sadd.s32 %s13, 1
      %s21 = ssub.s32 %s13, %s20
      %p22 = scmp.eq.s32.totalorder %s21, 0
      %s24 = sadd.s32 %s23, 1
      %s25 = scalar_select %p22, %s23, %s24
      %p28 = pneg %p22
      %p29 = scmp.eq.s32.totalorder %s13, 1
      %p30 = por %p28, %p29
      %p31 = scmp.ne.s32.totalorder %s23, %s26
      %p32 = scmp.eq.s32.totalorder %s13, 0
      %p33 = por %p31, %p32
      %p34 = scmp.ne.s32.totalorder %s23, %s26
      %p35 = scmp.eq.s32.totalorder %s18, 1
      %p36 = por %p34, %p35
      %p37 = scmp.ne.s32.totalorder %s26, %s27
      %p38 = scmp.eq.s32.totalorder %s18, 0
      %p39 = por %p37, %p38
      %p40 = scmp.ne.s32.totalorder %s26, %s27
      %p41 = scmp.eq.s32.totalorder %s19, 1
      %p42 = por %p40, %p41
      %p44 = scmp.ne.s32.totalorder %s27, %s43
      %p45 = scmp.eq.s32.totalorder %s19, 0
      %p46 = por %p44, %p45
      %s48 = sadd.s32 %s47, 1
      %p51 = scmp.eq.s32.totalorder %s13, 1
      %p52 = scmp.ne.s32.totalorder %s47, %s49
      %p53 = scmp.eq.s32.totalorder %s13, 0
      %p54 = por %p52, %p53
      %p55 = scmp.ne.s32.totalorder %s47, %s49
      %p56 = scmp.eq.s32.totalorder %s18, 1
      %p57 = por %p55, %p56
      %p58 = scmp.ne.s32.totalorder %s49, %s50
      %p59 = scmp.eq.s32.totalorder %s18, 0
      %p60 = por %p58, %p59
      %p61 = scmp.ne.s32.totalorder %s49, %s50
      %p62 = scmp.eq.s32.totalorder %s19, 1
      %p63 = por %p61, %p62
      %p65 = scmp.ne.s32.totalorder %s50, %s64
      %p66 = scmp.eq.s32.totalorder %s19, 0
      %p67 = por %p65, %p66
      %s69 = sadd.s32 %s68, 1
      %p72 = scmp.eq.s32.totalorder %s13, 1
      %p73 = scmp.ne.s32.totalorder %s68, %s70
      %p74 = scmp.eq.s32.totalorder %s13, 0
      %p75 = por %p73, %p74
      %p76 = scmp.ne.s32.totalorder %s68, %s70
      %p77 = scmp.eq.s32.totalorder %s18, 1
      %p78 = por %p76, %p77
      %p79 = scmp.ne.s32.totalorder %s70, %s71
      %p80 = scmp.eq.s32.totalorder %s18, 0
      %p81 = por %p79, %p80
      %p82 = scmp.ne.s32.totalorder %s70, %s71
      %p83 = scmp.eq.s32.totalorder %s19, 1
      %p84 = por %p82, %p83
      %p86 = scmp.ne.s32.totalorder %s71, %s85
      %p87 = scmp.eq.s32.totalorder %s19, 0
      %p88 = por %p86, %p87
      %s89 = ssub.s32 %s13, %s20
      %p90 = scmp.eq.s32.totalorder %s89, 0
      %s92 = sadd.s32 %s91, 1
      %s93 = scalar_select %p90, %s91, %s92
      %p96 = pneg %p90
      %p97 = scmp.eq.s32.totalorder %s13, 1
      %p98 = por %p96, %p97
      %p99 = scmp.ne.s32.totalorder %s91, %s94
      %p100 = scmp.eq.s32.totalorder %s13, 0
      %p101 = por %p99, %p100
      %p102 = scmp.ne.s32.totalorder %s91, %s94
      %p103 = scmp.eq.s32.totalorder %s18, 1
      %p104 = por %p102, %p103
      %p105 = scmp.ne.s32.totalorder %s94, %s95
      %p106 = scmp.eq.s32.totalorder %s18, 0
      %p107 = por %p105, %p106
      %p108 = scmp.ne.s32.totalorder %s94, %s95
      %p109 = scmp.eq.s32.totalorder %s19, 1
      %p110 = por %p108, %p109
      %p112 = scmp.ne.s32.totalorder %s95, %s111
      %p113 = scmp.eq.s32.totalorder %s19, 0
      %p114 = por %p112, %p113
      %p115 = scmp.le.s32.totalorder 1, %s13
      %p116 = scmp.lt.s32.totalorder %s13, 3
      %p117 = pnand %p115, %p116
      %p118 = pneg %p117
      // Predicated region
      $region9: #{resize_transformer_block.2} parent=5 // pred_check
        _
      $region10: #{resize_transformer_block.2} parent=5 // pred_check_branch
        %120 = sbr.rel (%p117) target = $region12
      $region11: #{resize_transformer_block.2} parent=5 // pred_region
        %s121 = ssub.s32 %s13, 1
        // Predicated region
        $region13: #{resize_transformer_block.2} parent=11 // pred_check
          %p122 = pneg %p60
        $region14: #{resize_transformer_block.2} parent=11 // pred_check_branch
          %124 = sbr.rel (%p122) target = $region16
        $region15: #{resize_transformer_block.2} parent=11 // pred_region
          %s126 = ssub.s32 256, 256
          %127 = vsyncadd [#allocation5], %s126
          %s128 = sshll.u32 [#allocation4], 4
          %s129 = int_to_ptr.vmem [resolvable:$true] %s128
          %134 = dma.hbm_to_vmem [thread:$0]  %s1, 256, %s129, [#allocation5], 128, 128, 8
        $region16: #{resize_transformer_block.2} parent=11 // pred_fallthru
          _
        // Predicated region
        $region17: #{resize_transformer_block.2} parent=11 // pred_check
          %p135 = pneg %p81
        $region18: #{resize_transformer_block.2} parent=11 // pred_check_branch
          %137 = sbr.rel (%p135) target = $region20
        $region19: #{resize_transformer_block.2} parent=11 // pred_region
          %s139 = ssub.s32 16384, 16384
          %140 = vsyncadd [#allocation5], %s139
          %s141 = sshll.u32 [#allocation6], 4
          %s142 = int_to_ptr.vmem [resolvable:$true] %s141
          %147 = dma.hbm_to_vmem [thread:$0]  %s2, 16384, %s142, [#allocation5], 256, 256, 16
        $region20: #{resize_transformer_block.2} parent=11 // pred_fallthru
          _
      $region12: #{resize_transformer_block.2} parent=5 // pred_fallthru
        _
      %p148 = scmp.lt.s32.totalorder %s13, 2
      // Predicated region
      $region21: #{resize_transformer_block.2} parent=5 // pred_check
        %p149 = pneg %p148
      $region22: #{resize_transformer_block.2} parent=5 // pred_check_branch
        %151 = sbr.rel (%p149) target = $region24
      $region23: #{resize_transformer_block.2} parent=5 // pred_region
        // Predicated region
        $region25: #{resize_transformer_block.2} parent=23 // pred_check
          %p152 = pneg %p33
        $region26: #{resize_transformer_block.2} parent=23 // pred_check_branch
          %154 = sbr.rel (%p152) target = $region28
        $region27: #{resize_transformer_block.2} parent=23 // pred_region
          %s155 = sand.u32 %s23, 1
          %s156 = scalar_lea.sflag [#allocation3], %s155
          %s157 = sand.u32 %s23, 1
          %s158 = smul.addr %s157, 768
          %s159 = scalar_lea.vmem [#allocation2], %s158
          %s160 = smul.u32 96, %s13
          %s162 = ssub.s32 12288, 12288
          %163 = vsyncadd %s156, %s162
          %s164 = smul.addr %s160, 128
          %s165 = scalar_lea.hbm %s0, %s164
          %s166 = sshll.u32 %s159, 4
          %s167 = int_to_ptr.vmem [resolvable:$true] %s166
          %172 = dma.hbm_to_vmem [thread:$0]  %s165, 12288, %s167, %s156, 128, 128, 8
        $region28: #{resize_transformer_block.2} parent=23 // pred_fallthru
          _
      $region24: #{resize_transformer_block.2} parent=5 // pred_fallthru
        _
      %p173 = scmp.le.s32.totalorder 1, %s13
      %p174 = scmp.lt.s32.totalorder %s13, 3
      %p175 = pnand %p173, %p174
      %p176 = pneg %p175
      // Predicated region
      $region29: #{resize_transformer_block.2} parent=5 // pred_check
        _
      $region30: #{resize_transformer_block.2} parent=5 // pred_check_branch
        %178 = sbr.rel (%p175) target = $region32
      $region31: #{resize_transformer_block.2} parent=5 // pred_region
        %s179 = ssub.s32 %s13, 1
        %s180 = sand.u32 %s26, 1
        %s181 = scalar_lea.sflag [#allocation3], %s180
        %s182 = sand.u32 %s26, 1
        %s183 = smul.addr %s182, 768
        %s184 = scalar_lea.vmem [#allocation2], %s183
        // Predicated region
        $region33: #{resize_transformer_block.2} parent=31 // pred_check
          %p185 = pneg %p39
        $region34: #{resize_transformer_block.2} parent=31 // pred_check_branch
          %187 = sbr.rel (%p185) target = $region36
        $region35: #{resize_transformer_block.2} parent=31 // pred_region
          %188 = dma.done %s181, 12288
        $region36: #{resize_transformer_block.2} parent=31 // pred_fallthru
          _
        // Predicated region
        $region37: #{resize_transformer_block.2} parent=31 // pred_check
          %p189 = pneg %p60
        $region38: #{resize_transformer_block.2} parent=31 // pred_check_branch
          %191 = sbr.rel (%p189) target = $region40
        $region39: #{resize_transformer_block.2} parent=31 // pred_region
          %192 = dma.done [#allocation5], 256
        $region40: #{resize_transformer_block.2} parent=31 // pred_fallthru
          _
        // Predicated region
        $region41: #{resize_transformer_block.2} parent=31 // pred_check
          %p193 = pneg %p81
        $region42: #{resize_transformer_block.2} parent=31 // pred_check_branch
          %195 = sbr.rel (%p193) target = $region44
        $region43: #{resize_transformer_block.2} parent=31 // pred_region
          %196 = dma.done [#allocation5], 16384
        $region44: #{resize_transformer_block.2} parent=31 // pred_fallthru
          _
        %s197 = sand.u32 %s26, 1
        %s198 = scalar_lea.sflag [#allocation3], %s197
        %s199 = sand.u32 %s26, 1
        %s200 = smul.addr %s199, 768
        %s201 = scalar_lea.vmem [#allocation2], %s200
        %p202 = pneg %p39
        %p203 = pneg %p36
        %p204 = pneg %p60
        %p205 = pneg %p57
        %p206 = pneg %p81
        %p207 = pneg %p78
        %p208 = pneg %p107
        %p209 = pneg %p104
        %s210 = smul.u32 192, %s18
        %p211 = scmp.lt.s32.totalorder %s210, 383
        %s212 = scalar_select %p211, %s210, 383
        %s213 = smul.addr %s212, 8
        %s214 = scalar_lea.vmem %s3, %s213
        %s215 = smul.u32 96, %s18
        %s216 = smul.u32 192, %s18
        %p217 = scmp.lt.s32.totalorder %s216, 383
        %s218 = scalar_select %p217, %s216, 383
        %s219 = smul.addr %s218, 8
        %s220 = scalar_lea.vmem %s3, %s219
        %s221 = smul.u32 192, %s18
        %v222 = vld [vmem:[#allocation4] sm:$0xff]
        %v223 = vld [vmem:[#allocation4 + $0x8] sm:$0xff]
        %v224 = vld [vmem:[#allocation6] sm:$0xff]
        %v225 = vld [vmem:[#allocation6 + $0x8] sm:$0xff]
        %v226 = vld [vmem:[#allocation6 + $0x10] sm:$0xff]
        %v227 = vld [vmem:[#allocation6 + $0x18] sm:$0xff]
        %v228 = vld [vmem:[#allocation6 + $0x20] sm:$0xff]
        %v229 = vld [vmem:[#allocation6 + $0x28] sm:$0xff]
        %v230 = vld [vmem:[#allocation6 + $0x30] sm:$0xff]
        %v231 = vld [vmem:[#allocation6 + $0x38] sm:$0xff]
        %v232 = vld [vmem:[#allocation6 + $0x40] sm:$0xff]
        %v233 = vld [vmem:[#allocation6 + $0x48] sm:$0xff]
        %v234 = vld [vmem:[#allocation6 + $0x50] sm:$0xff]
        %v235 = vld [vmem:[#allocation6 + $0x58] sm:$0xff]
        %v236 = vld [vmem:[#allocation6 + $0x60] sm:$0xff]
        %v237 = vld [vmem:[#allocation6 + $0x68] sm:$0xff]
        %v238 = vld [vmem:[#allocation6 + $0x70] sm:$0xff]
        %v239 = vld [vmem:[#allocation6 + $0x78] sm:$0xff]
        %v240 = vld [vmem:[#allocation6 + $0x80] sm:$0xff]
        %v241 = vld [vmem:[#allocation6 + $0x88] sm:$0xff]
        %v242 = vld [vmem:[#allocation6 + $0x90] sm:$0xff]
        %v243 = vld [vmem:[#allocation6 + $0x98] sm:$0xff]
        %v244 = vld [vmem:[#allocation6 + $0xa0] sm:$0xff]
        %v245 = vld [vmem:[#allocation6 + $0xa8] sm:$0xff]
        %v246 = vld [vmem:[#allocation6 + $0xb0] sm:$0xff]
        %v247 = vld [vmem:[#allocation6 + $0xb8] sm:$0xff]
        %v248 = vld [vmem:[#allocation6 + $0xc0] sm:$0xff]
        %v249 = vld [vmem:[#allocation6 + $0xc8] sm:$0xff]
        %v250 = vld [vmem:[#allocation6 + $0xd0] sm:$0xff]
        %v251 = vld [vmem:[#allocation6 + $0xd8] sm:$0xff]
        %v252 = vld [vmem:[#allocation6 + $0xe0] sm:$0xff]
        %v253 = vld [vmem:[#allocation6 + $0xe8] sm:$0xff]
        %v254 = vld [vmem:[#allocation6 + $0xf0] sm:$0xff]
        %v255 = vld [vmem:[#allocation6 + $0xf8] sm:$0xff]
        %v256 = vld [vmem:[#allocation6 + $0x100] sm:$0xff]
        %v257 = vld [vmem:[#allocation6 + $0x108] sm:$0xff]
        %v258 = vld [vmem:[#allocation6 + $0x110] sm:$0xff]
        %v259 = vld [vmem:[#allocation6 + $0x118] sm:$0xff]
        %v260 = vld [vmem:[#allocation6 + $0x120] sm:$0xff]
        %v261 = vld [vmem:[#allocation6 + $0x128] sm:$0xff]
        %v262 = vld [vmem:[#allocation6 + $0x130] sm:$0xff]
        %v263 = vld [vmem:[#allocation6 + $0x138] sm:$0xff]
        %v264 = vld [vmem:[#allocation6 + $0x140] sm:$0xff]
        %v265 = vld [vmem:[#allocation6 + $0x148] sm:$0xff]
        %v266 = vld [vmem:[#allocation6 + $0x150] sm:$0xff]
        %v267 = vld [vmem:[#allocation6 + $0x158] sm:$0xff]
        %v268 = vld [vmem:[#allocation6 + $0x160] sm:$0xff]
        %v269 = vld [vmem:[#allocation6 + $0x168] sm:$0xff]
        %v270 = vld [vmem:[#allocation6 + $0x170] sm:$0xff]
        %v271 = vld [vmem:[#allocation6 + $0x178] sm:$0xff]
        %v272 = vld [vmem:[#allocation6 + $0x180] sm:$0xff]
        %v273 = vld [vmem:[#allocation6 + $0x188] sm:$0xff]
        %v274 = vld [vmem:[#allocation6 + $0x190] sm:$0xff]
        %v275 = vld [vmem:[#allocation6 + $0x198] sm:$0xff]
        %v276 = vld [vmem:[#allocation6 + $0x1a0] sm:$0xff]
        %v277 = vld [vmem:[#allocation6 + $0x1a8] sm:$0xff]
        %v278 = vld [vmem:[#allocation6 + $0x1b0] sm:$0xff]
        %v279 = vld [vmem:[#allocation6 + $0x1b8] sm:$0xff]
        %v280 = vld [vmem:[#allocation6 + $0x1c0] sm:$0xff]
        %v281 = vld [vmem:[#allocation6 + $0x1c8] sm:$0xff]
        %v282 = vld [vmem:[#allocation6 + $0x1d0] sm:$0xff]
        %v283 = vld [vmem:[#allocation6 + $0x1d8] sm:$0xff]
        %v284 = vld [vmem:[#allocation6 + $0x1e0] sm:$0xff]
        %v285 = vld [vmem:[#allocation6 + $0x1e8] sm:$0xff]
        %v286 = vld [vmem:[#allocation6 + $0x1f0] sm:$0xff]
        %v287 = vld [vmem:[#allocation6 + $0x1f8] sm:$0xff]
        %v288 = vld [vmem:[#allocation6 + $0x200] sm:$0xff]
        %v289 = vld [vmem:[#allocation6 + $0x208] sm:$0xff]
        %v290 = vld [vmem:[#allocation6 + $0x210] sm:$0xff]
        %v291 = vld [vmem:[#allocation6 + $0x218] sm:$0xff]
        %v292 = vld [vmem:[#allocation6 + $0x220] sm:$0xff]
        %v293 = vld [vmem:[#allocation6 + $0x228] sm:$0xff]
        %v294 = vld [vmem:[#allocation6 + $0x230] sm:$0xff]
        %v295 = vld [vmem:[#allocation6 + $0x238] sm:$0xff]
        %v296 = vld [vmem:[#allocation6 + $0x240] sm:$0xff]
        %v297 = vld [vmem:[#allocation6 + $0x248] sm:$0xff]
        %v298 = vld [vmem:[#allocation6 + $0x250] sm:$0xff]
        %v299 = vld [vmem:[#allocation6 + $0x258] sm:$0xff]
        %v300 = vld [vmem:[#allocation6 + $0x260] sm:$0xff]
        %v301 = vld [vmem:[#allocation6 + $0x268] sm:$0xff]
        %v302 = vld [vmem:[#allocation6 + $0x270] sm:$0xff]
        %v303 = vld [vmem:[#allocation6 + $0x278] sm:$0xff]
        %v304 = vld [vmem:[#allocation6 + $0x280] sm:$0xff]
        %v305 = vld [vmem:[#allocation6 + $0x288] sm:$0xff]
        %v306 = vld [vmem:[#allocation6 + $0x290] sm:$0xff]
        %v307 = vld [vmem:[#allocation6 + $0x298] sm:$0xff]
        %v308 = vld [vmem:[#allocation6 + $0x2a0] sm:$0xff]
        %v309 = vld [vmem:[#allocation6 + $0x2a8] sm:$0xff]
        %v310 = vld [vmem:[#allocation6 + $0x2b0] sm:$0xff]
        %v311 = vld [vmem:[#allocation6 + $0x2b8] sm:$0xff]
        %v312 = vld [vmem:[#allocation6 + $0x2c0] sm:$0xff]
        %v313 = vld [vmem:[#allocation6 + $0x2c8] sm:$0xff]
        %v314 = vld [vmem:[#allocation6 + $0x2d0] sm:$0xff]
        %v315 = vld [vmem:[#allocation6 + $0x2d8] sm:$0xff]
        %v316 = vld [vmem:[#allocation6 + $0x2e0] sm:$0xff]
        %v317 = vld [vmem:[#allocation6 + $0x2e8] sm:$0xff]
        %v318 = vld [vmem:[#allocation6 + $0x2f0] sm:$0xff]
        %v319 = vld [vmem:[#allocation6 + $0x2f8] sm:$0xff]
        %v320 = vld [vmem:[#allocation6 + $0x300] sm:$0xff]
        %v321 = vld [vmem:[#allocation6 + $0x308] sm:$0xff]
        %v322 = vld [vmem:[#allocation6 + $0x310] sm:$0xff]
        %v323 = vld [vmem:[#allocation6 + $0x318] sm:$0xff]
        %v324 = vld [vmem:[#allocation6 + $0x320] sm:$0xff]
        %v325 = vld [vmem:[#allocation6 + $0x328] sm:$0xff]
        %v326 = vld [vmem:[#allocation6 + $0x330] sm:$0xff]
        %v327 = vld [vmem:[#allocation6 + $0x338] sm:$0xff]
        %v328 = vld [vmem:[#allocation6 + $0x340] sm:$0xff]
        %v329 = vld [vmem:[#allocation6 + $0x348] sm:$0xff]
        %v330 = vld [vmem:[#allocation6 + $0x350] sm:$0xff]
        %v331 = vld [vmem:[#allocation6 + $0x358] sm:$0xff]
        %v332 = vld [vmem:[#allocation6 + $0x360] sm:$0xff]
        %v333 = vld [vmem:[#allocation6 + $0x368] sm:$0xff]
        %v334 = vld [vmem:[#allocation6 + $0x370] sm:$0xff]
        %v335 = vld [vmem:[#allocation6 + $0x378] sm:$0xff]
        %v336 = vld [vmem:[#allocation6 + $0x380] sm:$0xff]
        %v337 = vld [vmem:[#allocation6 + $0x388] sm:$0xff]
        %v338 = vld [vmem:[#allocation6 + $0x390] sm:$0xff]
        %v339 = vld [vmem:[#allocation6 + $0x398] sm:$0xff]
        %v340 = vld [vmem:[#allocation6 + $0x3a0] sm:$0xff]
        %v341 = vld [vmem:[#allocation6 + $0x3a8] sm:$0xff]
        %v342 = vld [vmem:[#allocation6 + $0x3b0] sm:$0xff]
        %v343 = vld [vmem:[#allocation6 + $0x3b8] sm:$0xff]
        %v344 = vld [vmem:[#allocation6 + $0x3c0] sm:$0xff]
        %v345 = vld [vmem:[#allocation6 + $0x3c8] sm:$0xff]
        %v346 = vld [vmem:[#allocation6 + $0x3d0] sm:$0xff]
        %v347 = vld [vmem:[#allocation6 + $0x3d8] sm:$0xff]
        %v348 = vld [vmem:[#allocation6 + $0x3e0] sm:$0xff]
        %v349 = vld [vmem:[#allocation6 + $0x3e8] sm:$0xff]
        %v350 = vld [vmem:[#allocation6 + $0x3f0] sm:$0xff]
        %v351 = vld [vmem:[#allocation6 + $0x3f8] sm:$0xff]
        %v352 = vld [vmem:[%s184] sm:$0xff]
        %v353 = vld [vmem:[%s184 + $0x8] sm:$0xff]
        %v354 = vld [vmem:[%s184 + $0x10] sm:$0xff]
        %v355 = vld [vmem:[%s184 + $0x18] sm:$0xff]
        %v356 = vld [vmem:[%s184 + $0x20] sm:$0xff]
        %v357 = vld [vmem:[%s184 + $0x28] sm:$0xff]
        %v358 = vld [vmem:[%s184 + $0x30] sm:$0xff]
        %v359 = vld [vmem:[%s184 + $0x38] sm:$0xff]
        %v360 = vld [vmem:[%s184 + $0x40] sm:$0xff]
        %v361 = vld [vmem:[%s184 + $0x48] sm:$0xff]
        %v362 = vld [vmem:[%s184 + $0x50] sm:$0xff]
        %v363 = vld [vmem:[%s184 + $0x58] sm:$0xff]
        %v364 = vld [vmem:[%s184 + $0x60] sm:$0xff]
        %v365 = vld [vmem:[%s184 + $0x68] sm:$0xff]
        %v366 = vld [vmem:[%s184 + $0x70] sm:$0xff]
        %v367 = vld [vmem:[%s184 + $0x78] sm:$0xff]
        %v368 = vld [vmem:[%s184 + $0x80] sm:$0xff]
        %v369 = vld [vmem:[%s184 + $0x88] sm:$0xff]
        %v370 = vld [vmem:[%s184 + $0x90] sm:$0xff]
        %v371 = vld [vmem:[%s184 + $0x98] sm:$0xff]
        %v372 = vld [vmem:[%s184 + $0xa0] sm:$0xff]
        %v373 = vld [vmem:[%s184 + $0xa8] sm:$0xff]
        %v374 = vld [vmem:[%s184 + $0xb0] sm:$0xff]
        %v375 = vld [vmem:[%s184 + $0xb8] sm:$0xff]
        %v376 = vld [vmem:[%s184 + $0xc0] sm:$0xff]
        %v377 = vld [vmem:[%s184 + $0xc8] sm:$0xff]
        %v378 = vld [vmem:[%s184 + $0xd0] sm:$0xff]
        %v379 = vld [vmem:[%s184 + $0xd8] sm:$0xff]
        %v380 = vld [vmem:[%s184 + $0xe0] sm:$0xff]
        %v381 = vld [vmem:[%s184 + $0xe8] sm:$0xff]
        %v382 = vld [vmem:[%s184 + $0xf0] sm:$0xff]
        %v383 = vld [vmem:[%s184 + $0xf8] sm:$0xff]
        %vm384 = vcmask 130048
        %v386 = vsel %vm384, %v352, 0
        %v389 = vsel %vm384, %v353, 0
        %v392 = vsel %vm384, %v354, 0
        %v395 = vsel %vm384, %v355, 0
        %v398 = vsel %vm384, %v356, 0
        %v401 = vsel %vm384, %v357, 0
        %v404 = vsel %vm384, %v358, 0
        %v407 = vsel %vm384, %v359, 0
        %v410 = vsel %vm384, %v360, 0
        %v413 = vsel %vm384, %v361, 0
        %v416 = vsel %vm384, %v362, 0
        %v419 = vsel %vm384, %v363, 0
        %v422 = vsel %vm384, %v364, 0
        %v425 = vsel %vm384, %v365, 0
        %v428 = vsel %vm384, %v366, 0
        %v431 = vsel %vm384, %v367, 0
        %v434 = vsel %vm384, %v368, 0
        %v437 = vsel %vm384, %v369, 0
        %v440 = vsel %vm384, %v370, 0
        %v443 = vsel %vm384, %v371, 0
        %v446 = vsel %vm384, %v372, 0
        %v449 = vsel %vm384, %v373, 0
        %v452 = vsel %vm384, %v374, 0
        %v455 = vsel %vm384, %v375, 0
        %v458 = vsel %vm384, %v376, 0
        %v461 = vsel %vm384, %v377, 0
        %v464 = vsel %vm384, %v378, 0
        %v467 = vsel %vm384, %v379, 0
        %v470 = vsel %vm384, %v380, 0
        %v473 = vsel %vm384, %v381, 0
        %v476 = vsel %vm384, %v382, 0
        %v479 = vsel %vm384, %v383, 0
        %481 = vmatprep.subr.mxu0 0.0
        %482 = vmatpush1.msra.mxu0 %v222
        %483 = vmatprep.subr.mxu0 0.0
        %484 = vmatpush1.msra.mxu0 %v223
        %485 = vmatprep.subr.mxu0 0.0
        %486 = vmatpush1.msra.mxu0 0.0
        %487 = vmatprep.subr.mxu0 0.0
        %488 = vmatpush1.msra.mxu0 0.0
        %489 = vmatprep.subr.mxu0 0.0
        %490 = vmatpush1.msra.mxu0 0.0
        %491 = vmatprep.subr.mxu0 0.0
        %492 = vmatpush1.msra.mxu0 0.0
        %493 = vmatprep.subr.mxu0 0.0
        %494 = vmatpush1.msra.mxu0 0.0
        %495 = vmatprep.subr.mxu0 0.0
        %496 = vmatpush1.msra.mxu0 0.0
        %497 = vmatprep.subr.mxu0 0.0
        %498 = vmatpush1.msra.mxu0 0.0
        %499 = vmatprep.subr.mxu0 0.0
        %500 = vmatpush1.msra.mxu0 0.0
        %501 = vmatprep.subr.mxu0 0.0
        %502 = vmatpush1.msra.mxu0 0.0
        %503 = vmatprep.subr.mxu0 0.0
        %504 = vmatpush1.msra.mxu0 0.0
        %505 = vmatprep.subr.mxu0 0.0
        %506 = vmatpush1.msra.mxu0 0.0
        %507 = vmatprep.subr.mxu0 0.0
        %508 = vmatpush1.msra.mxu0 0.0
        %509 = vmatprep.subr.mxu0 0.0
        %510 = vmatpush1.msra.mxu0 0.0
        %511 = vmatprep.subr.mxu0 0.0
        %512 = vmatpush1.msra.mxu0 0.0
        %513 = vmatprep.subr.mxu0 0.0
        %514 = vmatpush1.msra.mxu0 0.0
        %515 = vmatprep.subr.mxu0 0.0
        %516 = vmatpush1.msra.mxu0 0.0
        %517 = vmatprep.subr.mxu0 0.0
        %518 = vmatpush1.msra.mxu0 0.0
        %519 = vmatprep.subr.mxu0 0.0
        %520 = vmatpush1.msra.mxu0 0.0
        %521 = vmatprep.subr.mxu0 0.0
        %522 = vmatpush1.msra.mxu0 0.0
        %523 = vmatprep.subr.mxu0 0.0
        %524 = vmatpush1.msra.mxu0 0.0
        %525 = vmatprep.subr.mxu0 0.0
        %526 = vmatpush1.msra.mxu0 0.0
        %527 = vmatprep.subr.mxu0 0.0
        %528 = vmatpush1.msra.mxu0 0.0
        %529 = vmatprep.subr.mxu0 0.0
        %530 = vmatpush1.msra.mxu0 0.0
        %531 = vmatprep.subr.mxu0 0.0
        %532 = vmatpush1.msra.mxu0 0.0
        %533 = vmatprep.subr.mxu0 0.0
        %534 = vmatpush1.msra.mxu0 0.0
        %535 = vmatprep.subr.mxu0 0.0
        %536 = vmatpush1.msra.mxu0 0.0
        %537 = vmatprep.subr.mxu0 0.0
        %538 = vmatpush1.msra.mxu0 0.0
        %539 = vmatprep.subr.mxu0 0.0
        %540 = vmatpush1.msra.mxu0 0.0
        %541 = vmatprep.subr.mxu0 0.0
        %542 = vmatpush1.msra.mxu0 0.0
        %543 = vmatprep.subr.mxu0 0.0
        %544 = vmatpush1.msra.mxu0 0.0
        %545 = vmatprep.mubr.f32.mxu0 0.0
        %546 = vmatmul.mubr.f32.gmra.mrb[0].mxu0 %v386
        %v547 = vpop.f32.mrb[0].mxu0
        %v548 = vadd.f32 0.0, %v547
        %v549 = vpop.f32.mrb[0].mxu0
        %550 = vmatprep.mubr.f32.mxu0 0.0
        %551 = vmatmul.mubr.f32.gmra.mrb[0].mxu0 %v389
        %v552 = vpop.f32.mrb[0].mxu0
        %v553 = vadd.f32 0.0, %v552
        %v554 = vpop.f32.mrb[0].mxu0
        %555 = vmatprep.mubr.f32.mxu0 0.0
        %556 = vmatmul.mubr.f32.gmra.mrb[0].mxu0 %v392
        %v557 = vpop.f32.mrb[0].mxu0
        %v558 = vadd.f32 0.0, %v557
        %v559 = vpop.f32.mrb[0].mxu0
        %560 = vmatprep.mubr.f32.mxu0 0.0
        %561 = vmatmul.mubr.f32.gmra.mrb[0].mxu0 %v395
        %v562 = vpop.f32.mrb[0].mxu0
        %v563 = vadd.f32 0.0, %v562
        %v564 = vpop.f32.mrb[0].mxu0
        %565 = vmatprep.mubr.f32.mxu0 0.0
        %566 = vmatmul.mubr.f32.gmra.mrb[0].mxu0 %v398
        %v567 = vpop.f32.mrb[0].mxu0
        %v568 = vadd.f32 0.0, %v567
        %v569 = vpop.f32.mrb[0].mxu0
        %570 = vmatprep.mubr.f32.mxu0 0.0
        %571 = vmatmul.mubr.f32.gmra.mrb[0].mxu0 %v401
        %v572 = vpop.f32.mrb[0].mxu0
        %v573 = vadd.f32 0.0, %v572
        %v574 = vpop.f32.mrb[0].mxu0
        %575 = vmatprep.mubr.f32.mxu0 0.0
        %576 = vmatmul.mubr.f32.gmra.mrb[0].mxu0 %v404
        %v577 = vpop.f32.mrb[0].mxu0
        %v578 = vadd.f32 0.0, %v577
        %v579 = vpop.f32.mrb[0].mxu0
        %580 = vmatprep.mubr.f32.mxu0 0.0
        %581 = vmatmul.mubr.f32.gmra.mrb[0].mxu0 %v407
        %v582 = vpop.f32.mrb[0].mxu0
        %v583 = vadd.f32 0.0, %v582
        %v584 = vpop.f32.mrb[0].mxu0
        %585 = vmatprep.mubr.f32.mxu0 0.0
        %586 = vmatmul.mubr.f32.gmra.mrb[0].mxu0 %v410
        %v587 = vpop.f32.mrb[0].mxu0
        %v588 = vadd.f32 0.0, %v587
        %v589 = vpop.f32.mrb[0].mxu0
        %590 = vmatprep.mubr.f32.mxu0 0.0
        %591 = vmatmul.mubr.f32.gmra.mrb[0].mxu0 %v413
        %v592 = vpop.f32.mrb[0].mxu0
        %v593 = vadd.f32 0.0, %v592
        %v594 = vpop.f32.mrb[0].mxu0
        %595 = vmatprep.mubr.f32.mxu0 0.0
        %596 = vmatmul.mubr.f32.gmra.mrb[0].mxu0 %v416
        %v597 = vpop.f32.mrb[0].mxu0
        %v598 = vadd.f32 0.0, %v597
        %v599 = vpop.f32.mrb[0].mxu0
        %600 = vmatprep.mubr.f32.mxu0 0.0
        %601 = vmatmul.mubr.f32.gmra.mrb[0].mxu0 %v419
        %v602 = vpop.f32.mrb[0].mxu0
        %v603 = vadd.f32 0.0, %v602
        %v604 = vpop.f32.mrb[0].mxu0
        %605 = vmatprep.mubr.f32.mxu0 0.0
        %606 = vmatmul.mubr.f32.gmra.mrb[0].mxu0 %v422
        %v607 = vpop.f32.mrb[0].mxu0
        %v608 = vadd.f32 0.0, %v607
        %v609 = vpop.f32.mrb[0].mxu0
        %610 = vmatprep.mubr.f32.mxu0 0.0
        %611 = vmatmul.mubr.f32.gmra.mrb[0].mxu0 %v425
        %v612 = vpop.f32.mrb[0].mxu0
        %v613 = vadd.f32 0.0, %v612
        %v614 = vpop.f32.mrb[0].mxu0
        %615 = vmatprep.mubr.f32.mxu0 0.0
        %616 = vmatmul.mubr.f32.gmra.mrb[0].mxu0 %v428
        %v617 = vpop.f32.mrb[0].mxu0
        %v618 = vadd.f32 0.0, %v617
        %v619 = vpop.f32.mrb[0].mxu0
        %620 = vmatprep.mubr.f32.mxu0 0.0
        %621 = vmatmul.mubr.f32.gmra.mrb[0].mxu0 %v431
        %v622 = vpop.f32.mrb[0].mxu0
        %v623 = vadd.f32 0.0, %v622
        %v624 = vpop.f32.mrb[0].mxu0
        %625 = vmatprep.mubr.f32.mxu0 0.0
        %626 = vmatmul.mubr.f32.gmra.mrb[0].mxu0 %v434
        %v627 = vpop.f32.mrb[0].mxu0
        %v628 = vadd.f32 0.0, %v627
        %v629 = vpop.f32.mrb[0].mxu0
        %630 = vmatprep.mubr.f32.mxu0 0.0
        %631 = vmatmul.mubr.f32.gmra.mrb[0].mxu0 %v437
        %v632 = vpop.f32.mrb[0].mxu0
        %v633 = vadd.f32 0.0, %v632
        %v634 = vpop.f32.mrb[0].mxu0
        %635 = vmatprep.mubr.f32.mxu0 0.0
        %636 = vmatmul.mubr.f32.gmra.mrb[0].mxu0 %v440
        %v637 = vpop.f32.mrb[0].mxu0
        %v638 = vadd.f32 0.0, %v637
        %v639 = vpop.f32.mrb[0].mxu0
        %640 = vmatprep.mubr.f32.mxu0 0.0
        %641 = vmatmul.mubr.f32.gmra.mrb[0].mxu0 %v443
        %v642 = vpop.f32.mrb[0].mxu0
        %v643 = vadd.f32 0.0, %v642
        %v644 = vpop.f32.mrb[0].mxu0
        %645 = vmatprep.mubr.f32.mxu0 0.0
        %646 = vmatmul.mubr.f32.gmra.mrb[0].mxu0 %v446
        %v647 = vpop.f32.mrb[0].mxu0
        %v648 = vadd.f32 0.0, %v647
        %v649 = vpop.f32.mrb[0].mxu0
        %650 = vmatprep.mubr.f32.mxu0 0.0
        %651 = vmatmul.mubr.f32.gmra.mrb[0].mxu0 %v449
        %v652 = vpop.f32.mrb[0].mxu0
        %v653 = vadd.f32 0.0, %v652
        %v654 = vpop.f32.mrb[0].mxu0
        %655 = vmatprep.mubr.f32.mxu0 0.0
        %656 = vmatmul.mubr.f32.gmra.mrb[0].mxu0 %v452
        %v657 = vpop.f32.mrb[0].mxu0
        %v658 = vadd.f32 0.0, %v657
        %v659 = vpop.f32.mrb[0].mxu0
        %660 = vmatprep.mubr.f32.mxu0 0.0
        %661 = vmatmul.mubr.f32.gmra.mrb[0].mxu0 %v455
        %v662 = vpop.f32.mrb[0].mxu0
        %v663 = vadd.f32 0.0, %v662
        %v664 = vpop.f32.mrb[0].mxu0
        %665 = vmatprep.mubr.f32.mxu0 0.0
        %666 = vmatmul.mubr.f32.gmra.mrb[0].mxu0 %v458
        %v667 = vpop.f32.mrb[0].mxu0
        %v668 = vadd.f32 0.0, %v667
        %v669 = vpop.f32.mrb[0].mxu0
        %670 = vmatprep.mubr.f32.mxu0 0.0
        %671 = vmatmul.mubr.f32.gmra.mrb[0].mxu0 %v461
        %v672 = vpop.f32.mrb[0].mxu0
        %v673 = vadd.f32 0.0, %v672
        %v674 = vpop.f32.mrb[0].mxu0
        %675 = vmatprep.mubr.f32.mxu0 0.0
        %676 = vmatmul.mubr.f32.gmra.mrb[0].mxu0 %v464
        %v677 = vpop.f32.mrb[0].mxu0
        %v678 = vadd.f32 0.0, %v677
        %v679 = vpop.f32.mrb[0].mxu0
        %680 = vmatprep.mubr.f32.mxu0 0.0
        %681 = vmatmul.mubr.f32.gmra.mrb[0].mxu0 %v467
        %v682 = vpop.f32.mrb[0].mxu0
        %v683 = vadd.f32 0.0, %v682
        %v684 = vpop.f32.mrb[0].mxu0
        %685 = vmatprep.mubr.f32.mxu0 0.0
        %686 = vmatmul.mubr.f32.gmra.mrb[0].mxu0 %v470
        %v687 = vpop.f32.mrb[0].mxu0
        %v688 = vadd.f32 0.0, %v687
        %v689 = vpop.f32.mrb[0].mxu0
        %690 = vmatprep.mubr.f32.mxu0 0.0
        %691 = vmatmul.mubr.f32.gmra.mrb[0].mxu0 %v473
        %v692 = vpop.f32.mrb[0].mxu0
        %v693 = vadd.f32 0.0, %v692
        %v694 = vpop.f32.mrb[0].mxu0
        %695 = vmatprep.mubr.f32.mxu0 0.0
        %696 = vmatmul.mubr.f32.gmra.mrb[0].mxu0 %v476
        %v697 = vpop.f32.mrb[0].mxu0
        %v698 = vadd.f32 0.0, %v697
        %v699 = vpop.f32.mrb[0].mxu0
        %700 = vmatprep.mubr.f32.mxu0 0.0
        %701 = vmatmul.mubr.f32.gmra.mrb[0].mxu0 %v479
        %v702 = vpop.f32.mrb[0].mxu0
        %v703 = vadd.f32 0.0, %v702
        %v704 = vpop.f32.mrb[0].mxu0
        %705 = vdwg.mxu0
        %706 = vmatprep.subr.mxu0 0.0
        %707 = vmatpush1.msra.mxu0 %v548
        %708 = vmatprep.subr.mxu0 0.0
        %709 = vmatpush1.msra.mxu0 %v553
        %710 = vmatprep.subr.mxu0 0.0
        %711 = vmatpush1.msra.mxu0 %v558
        %712 = vmatprep.subr.mxu0 0.0
        %713 = vmatpush1.msra.mxu0 %v563
        %714 = vmatprep.subr.mxu0 0.0
        %715 = vmatpush1.msra.mxu0 %v568
        %716 = vmatprep.subr.mxu0 0.0
        %717 = vmatpush1.msra.mxu0 %v573
        %718 = vmatprep.subr.mxu0 0.0
        %719 = vmatpush1.msra.mxu0 %v578
        %720 = vmatprep.subr.mxu0 0.0
        %721 = vmatpush1.msra.mxu0 %v583
        %722 = vmatprep.subr.mxu0 0.0
        %723 = vmatpush1.msra.mxu0 %v588
        %724 = vmatprep.subr.mxu0 0.0
        %725 = vmatpush1.msra.mxu0 %v593
        %726 = vmatprep.subr.mxu0 0.0
        %727 = vmatpush1.msra.mxu0 %v598
        %728 = vmatprep.subr.mxu0 0.0
        %729 = vmatpush1.msra.mxu0 %v603
        %730 = vmatprep.subr.mxu0 0.0
        %731 = vmatpush1.msra.mxu0 %v608
        %732 = vmatprep.subr.mxu0 0.0
        %733 = vmatpush1.msra.mxu0 %v613
        %734 = vmatprep.subr.mxu0 0.0
        %735 = vmatpush1.msra.mxu0 %v618
        %736 = vmatprep.subr.mxu0 0.0
        %737 = vmatpush1.msra.mxu0 %v623
        %738 = vmatprep.subr.mxu0 0.0
        %739 = vmatpush1.msra.mxu0 %v628
        %740 = vmatprep.subr.mxu0 0.0
        %741 = vmatpush1.msra.mxu0 %v633
        %742 = vmatprep.subr.mxu0 0.0
        %743 = vmatpush1.msra.mxu0 %v638
        %744 = vmatprep.subr.mxu0 0.0
        %745 = vmatpush1.msra.mxu0 %v643
        %746 = vmatprep.subr.mxu0 0.0
        %747 = vmatpush1.msra.mxu0 %v648
        %748 = vmatprep.subr.mxu0 0.0
        %749 = vmatpush1.msra.mxu0 %v653
        %750 = vmatprep.subr.mxu0 0.0
        %751 = vmatpush1.msra.mxu0 %v658
        %752 = vmatprep.subr.mxu0 0.0
        %753 = vmatpush1.msra.mxu0 %v663
        %754 = vmatprep.subr.mxu0 0.0
        %755 = vmatpush1.msra.mxu0 %v668
        %756 = vmatprep.subr.mxu0 0.0
        %757 = vmatpush1.msra.mxu0 %v673
        %758 = vmatprep.subr.mxu0 0.0
        %759 = vmatpush1.msra.mxu0 %v678
        %760 = vmatprep.subr.mxu0 0.0
        %761 = vmatpush1.msra.mxu0 %v683
        %762 = vmatprep.subr.mxu0 0.0
        %763 = vmatpush1.msra.mxu0 %v688
        %764 = vmatprep.subr.mxu0 0.0
        %765 = vmatpush1.msra.mxu0 %v693
        %766 = vmatprep.subr.mxu0 0.0
        %767 = vmatpush1.msra.mxu0 %v698
        %768 = vmatprep.subr.mxu0 0.0
        %769 = vmatpush1.msra.mxu0 %v703
        %770 = vmatprep.mubr.f32.mxu0 %v225
        %771 = vmatmul.mubr.f32.gmra.mrb[0].mxu0 %v224
        %v772 = vpop.f32.mrb[0].mxu0
        %v773 = vadd.f32 0.0, %v772
        %v774 = vpop.f32.mrb[0].mxu0
        %775 = vmatprep.mubr.f32.mxu0 %v227
        %776 = vmatmul.mubr.f32.gmra.mrb[0].mxu0 %v226
        %v777 = vpop.f32.mrb[0].mxu0
        %v778 = vadd.f32 0.0, %v777
        %v779 = vpop.f32.mrb[0].mxu0
        %780 = vmatprep.mubr.f32.mxu0 %v229
        %781 = vmatmul.mubr.f32.gmra.mrb[0].mxu0 %v228
        %v782 = vpop.f32.mrb[0].mxu0
        %v783 = vadd.f32 0.0, %v782
        %v784 = vpop.f32.mrb[0].mxu0
        %785 = vmatprep.mubr.f32.mxu0 %v231
        %786 = vmatmul.mubr.f32.gmra.mrb[0].mxu0 %v230
        %v787 = vpop.f32.mrb[0].mxu0
        %v788 = vadd.f32 0.0, %v787
        %v789 = vpop.f32.mrb[0].mxu0
        %790 = vmatprep.mubr.f32.mxu0 %v233
        %791 = vmatmul.mubr.f32.gmra.mrb[0].mxu0 %v232
        %v792 = vpop.f32.mrb[0].mxu0
        %v793 = vadd.f32 0.0, %v792
        %v794 = vpop.f32.mrb[0].mxu0
        %795 = vmatprep.mubr.f32.mxu0 %v235
        %796 = vmatmul.mubr.f32.gmra.mrb[0].mxu0 %v234
        %v797 = vpop.f32.mrb[0].mxu0
        %v798 = vadd.f32 0.0, %v797
        %v799 = vpop.f32.mrb[0].mxu0
        %800 = vmatprep.mubr.f32.mxu0 %v237
        %801 = vmatmul.mubr.f32.gmra.mrb[0].mxu0 %v236
        %v802 = vpop.f32.mrb[0].mxu0
        %v803 = vadd.f32 0.0, %v802
        %v804 = vpop.f32.mrb[0].mxu0
        %805 = vmatprep.mubr.f32.mxu0 %v239
        %806 = vmatmul.mubr.f32.gmra.mrb[0].mxu0 %v238
        %v807 = vpop.f32.mrb[0].mxu0
        %v808 = vadd.f32 0.0, %v807
        %v809 = vpop.f32.mrb[0].mxu0
        %810 = vmatprep.mubr.f32.mxu0 %v241
        %811 = vmatmul.mubr.f32.gmra.mrb[0].mxu0 %v240
        %v812 = vpop.f32.mrb[0].mxu0
        %v813 = vadd.f32 0.0, %v812
        %v814 = vpop.f32.mrb[0].mxu0
        %815 = vmatprep.mubr.f32.mxu0 %v243
        %816 = vmatmul.mubr.f32.gmra.mrb[0].mxu0 %v242
        %v817 = vpop.f32.mrb[0].mxu0
        %v818 = vadd.f32 0.0, %v817
        %v819 = vpop.f32.mrb[0].mxu0
        %820 = vmatprep.mubr.f32.mxu0 %v245
        %821 = vmatmul.mubr.f32.gmra.mrb[0].mxu0 %v244
        %v822 = vpop.f32.mrb[0].mxu0
        %v823 = vadd.f32 0.0, %v822
        %v824 = vpop.f32.mrb[0].mxu0
        %825 = vmatprep.mubr.f32.mxu0 %v247
        %826 = vmatmul.mubr.f32.gmra.mrb[0].mxu0 %v246
        %v827 = vpop.f32.mrb[0].mxu0
        %v828 = vadd.f32 0.0, %v827
        %v829 = vpop.f32.mrb[0].mxu0
        %830 = vmatprep.mubr.f32.mxu0 %v249
        %831 = vmatmul.mubr.f32.gmra.mrb[0].mxu0 %v248
        %v832 = vpop.f32.mrb[0].mxu0
        %v833 = vadd.f32 0.0, %v832
        %v834 = vpop.f32.mrb[0].mxu0
        %835 = vmatprep.mubr.f32.mxu0 %v251
        %836 = vmatmul.mubr.f32.gmra.mrb[0].mxu0 %v250
        %v837 = vpop.f32.mrb[0].mxu0
        %v838 = vadd.f32 0.0, %v837
        %v839 = vpop.f32.mrb[0].mxu0
        %840 = vmatprep.mubr.f32.mxu0 %v253
        %841 = vmatmul.mubr.f32.gmra.mrb[0].mxu0 %v252
        %v842 = vpop.f32.mrb[0].mxu0
        %v843 = vadd.f32 0.0, %v842
        %v844 = vpop.f32.mrb[0].mxu0
        %845 = vmatprep.mubr.f32.mxu0 %v255
        %846 = vmatmul.mubr.f32.gmra.mrb[0].mxu0 %v254
        %v847 = vpop.f32.mrb[0].mxu0
        %v848 = vadd.f32 0.0, %v847
        %v849 = vpop.f32.mrb[0].mxu0
        %850 = vmatprep.mubr.f32.mxu0 %v257
        %851 = vmatmul.mubr.f32.gmra.mrb[0].mxu0 %v256
        %v852 = vpop.f32.mrb[0].mxu0
        %v853 = vadd.f32 0.0, %v852
        %v854 = vpop.f32.mrb[0].mxu0
        %855 = vmatprep.mubr.f32.mxu0 %v259
        %856 = vmatmul.mubr.f32.gmra.mrb[0].mxu0 %v258
        %v857 = vpop.f32.mrb[0].mxu0
        %v858 = vadd.f32 0.0, %v857
        %v859 = vpop.f32.mrb[0].mxu0
        %860 = vmatprep.mubr.f32.mxu0 %v261
        %861 = vmatmul.mubr.f32.gmra.mrb[0].mxu0 %v260
        %v862 = vpop.f32.mrb[0].mxu0
        %v863 = vadd.f32 0.0, %v862
        %v864 = vpop.f32.mrb[0].mxu0
        %865 = vmatprep.mubr.f32.mxu0 %v263
        %866 = vmatmul.mubr.f32.gmra.mrb[0].mxu0 %v262
        %v867 = vpop.f32.mrb[0].mxu0
        %v868 = vadd.f32 0.0, %v867
        %v869 = vpop.f32.mrb[0].mxu0
        %870 = vmatprep.mubr.f32.mxu0 %v265
        %871 = vmatmul.mubr.f32.gmra.mrb[0].mxu0 %v264
        %v872 = vpop.f32.mrb[0].mxu0
        %v873 = vadd.f32 0.0, %v872
        %v874 = vpop.f32.mrb[0].mxu0
        %875 = vmatprep.mubr.f32.mxu0 %v267
        %876 = vmatmul.mubr.f32.gmra.mrb[0].mxu0 %v266
        %v877 = vpop.f32.mrb[0].mxu0
        %v878 = vadd.f32 0.0, %v877
        %v879 = vpop.f32.mrb[0].mxu0
        %880 = vmatprep.mubr.f32.mxu0 %v269
        %881 = vmatmul.mubr.f32.gmra.mrb[0].mxu0 %v268
        %v882 = vpop.f32.mrb[0].mxu0
        %v883 = vadd.f32 0.0, %v882
        %v884 = vpop.f32.mrb[0].mxu0
        %885 = vmatprep.mubr.f32.mxu0 %v271
        %886 = vmatmul.mubr.f32.gmra.mrb[0].mxu0 %v270
        %v887 = vpop.f32.mrb[0].mxu0
        %v888 = vadd.f32 0.0, %v887
        %v889 = vpop.f32.mrb[0].mxu0
        %890 = vmatprep.mubr.f32.mxu0 %v273
        %891 = vmatmul.mubr.f32.gmra.mrb[0].mxu0 %v272
        %v892 = vpop.f32.mrb[0].mxu0
        %v893 = vadd.f32 0.0, %v892
        %v894 = vpop.f32.mrb[0].mxu0
        %895 = vmatprep.mubr.f32.mxu0 %v275
        %896 = vmatmul.mubr.f32.gmra.mrb[0].mxu0 %v274
        %v897 = vpop.f32.mrb[0].mxu0
        %v898 = vadd.f32 0.0, %v897
        %v899 = vpop.f32.mrb[0].mxu0
        %900 = vmatprep.mubr.f32.mxu0 %v277
        %901 = vmatmul.mubr.f32.gmra.mrb[0].mxu0 %v276
        %v902 = vpop.f32.mrb[0].mxu0
        %v903 = vadd.f32 0.0, %v902
        %v904 = vpop.f32.mrb[0].mxu0
        %905 = vmatprep.mubr.f32.mxu0 %v279
        %906 = vmatmul.mubr.f32.gmra.mrb[0].mxu0 %v278
        %v907 = vpop.f32.mrb[0].mxu0
        %v908 = vadd.f32 0.0, %v907
        %v909 = vpop.f32.mrb[0].mxu0
        %910 = vmatprep.mubr.f32.mxu0 %v281
        %911 = vmatmul.mubr.f32.gmra.mrb[0].mxu0 %v280
        %v912 = vpop.f32.mrb[0].mxu0
        %v913 = vadd.f32 0.0, %v912
        %v914 = vpop.f32.mrb[0].mxu0
        %915 = vmatprep.mubr.f32.mxu0 %v283
        %916 = vmatmul.mubr.f32.gmra.mrb[0].mxu0 %v282
        %v917 = vpop.f32.mrb[0].mxu0
        %v918 = vadd.f32 0.0, %v917
        %v919 = vpop.f32.mrb[0].mxu0
        %920 = vmatprep.mubr.f32.mxu0 %v285
        %921 = vmatmul.mubr.f32.gmra.mrb[0].mxu0 %v284
        %v922 = vpop.f32.mrb[0].mxu0
        %v923 = vadd.f32 0.0, %v922
        %v924 = vpop.f32.mrb[0].mxu0
        %925 = vmatprep.mubr.f32.mxu0 %v287
        %926 = vmatmul.mubr.f32.gmra.mrb[0].mxu0 %v286
        %v927 = vpop.f32.mrb[0].mxu0
        %v928 = vadd.f32 0.0, %v927
        %v929 = vpop.f32.mrb[0].mxu0
        %930 = vmatprep.mubr.f32.mxu0 %v289
        %931 = vmatmul.mubr.f32.gmra.mrb[0].mxu0 %v288
        %v932 = vpop.f32.mrb[0].mxu0
        %v933 = vadd.f32 0.0, %v932
        %v934 = vpop.f32.mrb[0].mxu0
        %935 = vmatprep.mubr.f32.mxu0 %v291
        %936 = vmatmul.mubr.f32.gmra.mrb[0].mxu0 %v290
        %v937 = vpop.f32.mrb[0].mxu0
        %v938 = vadd.f32 0.0, %v937
        %v939 = vpop.f32.mrb[0].mxu0
        %940 = vmatprep.mubr.f32.mxu0 %v293
        %941 = vmatmul.mubr.f32.gmra.mrb[0].mxu0 %v292
        %v942 = vpop.f32.mrb[0].mxu0
        %v943 = vadd.f32 0.0, %v942
        %v944 = vpop.f32.mrb[0].mxu0
        %945 = vmatprep.mubr.f32.mxu0 %v295
        %946 = vmatmul.mubr.f32.gmra.mrb[0].mxu0 %v294
        %v947 = vpop.f32.mrb[0].mxu0
        %v948 = vadd.f32 0.0, %v947
        %v949 = vpop.f32.mrb[0].mxu0
        %950 = vmatprep.mubr.f32.mxu0 %v297
        %951 = vmatmul.mubr.f32.gmra.mrb[0].mxu0 %v296
        %v952 = vpop.f32.mrb[0].mxu0
        %v953 = vadd.f32 0.0, %v952
        %v954 = vpop.f32.mrb[0].mxu0
        %955 = vmatprep.mubr.f32.mxu0 %v299
        %956 = vmatmul.mubr.f32.gmra.mrb[0].mxu0 %v298
        %v957 = vpop.f32.mrb[0].mxu0
        %v958 = vadd.f32 0.0, %v957
        %v959 = vpop.f32.mrb[0].mxu0
        %960 = vmatprep.mubr.f32.mxu0 %v301
        %961 = vmatmul.mubr.f32.gmra.mrb[0].mxu0 %v300
        %v962 = vpop.f32.mrb[0].mxu0
        %v963 = vadd.f32 0.0, %v962
        %v964 = vpop.f32.mrb[0].mxu0
        %965 = vmatprep.mubr.f32.mxu0 %v303
        %966 = vmatmul.mubr.f32.gmra.mrb[0].mxu0 %v302
        %v967 = vpop.f32.mrb[0].mxu0
        %v968 = vadd.f32 0.0, %v967
        %v969 = vpop.f32.mrb[0].mxu0
        %970 = vmatprep.mubr.f32.mxu0 %v305
        %971 = vmatmul.mubr.f32.gmra.mrb[0].mxu0 %v304
        %v972 = vpop.f32.mrb[0].mxu0
        %v973 = vadd.f32 0.0, %v972
        %v974 = vpop.f32.mrb[0].mxu0
        %975 = vmatprep.mubr.f32.mxu0 %v307
        %976 = vmatmul.mubr.f32.gmra.mrb[0].mxu0 %v306
        %v977 = vpop.f32.mrb[0].mxu0
        %v978 = vadd.f32 0.0, %v977
        %v979 = vpop.f32.mrb[0].mxu0
        %980 = vmatprep.mubr.f32.mxu0 %v309
        %981 = vmatmul.mubr.f32.gmra.mrb[0].mxu0 %v308
        %v982 = vpop.f32.mrb[0].mxu0
        %v983 = vadd.f32 0.0, %v982
        %v984 = vpop.f32.mrb[0].mxu0
        %985 = vmatprep.mubr.f32.mxu0 %v311
        %986 = vmatmul.mubr.f32.gmra.mrb[0].mxu0 %v310
        %v987 = vpop.f32.mrb[0].mxu0
        %v988 = vadd.f32 0.0, %v987
        %v989 = vpop.f32.mrb[0].mxu0
        %990 = vmatprep.mubr.f32.mxu0 %v313
        %991 = vmatmul.mubr.f32.gmra.mrb[0].mxu0 %v312
        %v992 = vpop.f32.mrb[0].mxu0
        %v993 = vadd.f32 0.0, %v992
        %v994 = vpop.f32.mrb[0].mxu0
        %995 = vmatprep.mubr.f32.mxu0 %v315
        %996 = vmatmul.mubr.f32.gmra.mrb[0].mxu0 %v314
        %v997 = vpop.f32.mrb[0].mxu0
        %v998 = vadd.f32 0.0, %v997
        %v999 = vpop.f32.mrb[0].mxu0
        %1000 = vmatprep.mubr.f32.mxu0 %v317
        %1001 = vmatmul.mubr.f32.gmra.mrb[0].mxu0 %v316
        %v1002 = vpop.f32.mrb[0].mxu0
        %v1003 = vadd.f32 0.0, %v1002
        %v1004 = vpop.f32.mrb[0].mxu0
        %1005 = vmatprep.mubr.f32.mxu0 %v319
        %1006 = vmatmul.mubr.f32.gmra.mrb[0].mxu0 %v318
        %v1007 = vpop.f32.mrb[0].mxu0
        %v1008 = vadd.f32 0.0, %v1007
        %v1009 = vpop.f32.mrb[0].mxu0
        %1010 = vmatprep.mubr.f32.mxu0 %v321
        %1011 = vmatmul.mubr.f32.gmra.mrb[0].mxu0 %v320
        %v1012 = vpop.f32.mrb[0].mxu0
        %v1013 = vadd.f32 0.0, %v1012
        %v1014 = vpop.f32.mrb[0].mxu0
        %1015 = vmatprep.mubr.f32.mxu0 %v323
        %1016 = vmatmul.mubr.f32.gmra.mrb[0].mxu0 %v322
        %v1017 = vpop.f32.mrb[0].mxu0
        %v1018 = vadd.f32 0.0, %v1017
        %v1019 = vpop.f32.mrb[0].mxu0
        %1020 = vmatprep.mubr.f32.mxu0 %v325
        %1021 = vmatmul.mubr.f32.gmra.mrb[0].mxu0 %v324
        %v1022 = vpop.f32.mrb[0].mxu0
        %v1023 = vadd.f32 0.0, %v1022
        %v1024 = vpop.f32.mrb[0].mxu0
        %1025 = vmatprep.mubr.f32.mxu0 %v327
        %1026 = vmatmul.mubr.f32.gmra.mrb[0].mxu0 %v326
        %v1027 = vpop.f32.mrb[0].mxu0
        %v1028 = vadd.f32 0.0, %v1027
        %v1029 = vpop.f32.mrb[0].mxu0
        %1030 = vmatprep.mubr.f32.mxu0 %v329
        %1031 = vmatmul.mubr.f32.gmra.mrb[0].mxu0 %v328
        %v1032 = vpop.f32.mrb[0].mxu0
        %v1033 = vadd.f32 0.0, %v1032
        %v1034 = vpop.f32.mrb[0].mxu0
        %1035 = vmatprep.mubr.f32.mxu0 %v331
        %1036 = vmatmul.mubr.f32.gmra.mrb[0].mxu0 %v330
        %v1037 = vpop.f32.mrb[0].mxu0
        %v1038 = vadd.f32 0.0, %v1037
        %v1039 = vpop.f32.mrb[0].mxu0
        %1040 = vmatprep.mubr.f32.mxu0 %v333
        %1041 = vmatmul.mubr.f32.gmra.mrb[0].mxu0 %v332
        %v1042 = vpop.f32.mrb[0].mxu0
        %v1043 = vadd.f32 0.0, %v1042
        %v1044 = vpop.f32.mrb[0].mxu0
        %1045 = vmatprep.mubr.f32.mxu0 %v335
        %1046 = vmatmul.mubr.f32.gmra.mrb[0].mxu0 %v334
        %v1047 = vpop.f32.mrb[0].mxu0
        %v1048 = vadd.f32 0.0, %v1047
        %v1049 = vpop.f32.mrb[0].mxu0
        %1050 = vmatprep.mubr.f32.mxu0 %v337
        %1051 = vmatmul.mubr.f32.gmra.mrb[0].mxu0 %v336
        %v1052 = vpop.f32.mrb[0].mxu0
        %v1053 = vadd.f32 0.0, %v1052
        %v1054 = vpop.f32.mrb[0].mxu0
        %1055 = vmatprep.mubr.f32.mxu0 %v339
        %1056 = vmatmul.mubr.f32.gmra.mrb[0].mxu0 %v338
        %v1057 = vpop.f32.mrb[0].mxu0
        %v1058 = vadd.f32 0.0, %v1057
        %v1059 = vpop.f32.mrb[0].mxu0
        %1060 = vmatprep.mubr.f32.mxu0 %v341
        %1061 = vmatmul.mubr.f32.gmra.mrb[0].mxu0 %v340
        %v1062 = vpop.f32.mrb[0].mxu0
        %v1063 = vadd.f32 0.0, %v1062
        %v1064 = vpop.f32.mrb[0].mxu0
        %1065 = vmatprep.mubr.f32.mxu0 %v343
        %1066 = vmatmul.mubr.f32.gmra.mrb[0].mxu0 %v342
        %v1067 = vpop.f32.mrb[0].mxu0
        %v1068 = vadd.f32 0.0, %v1067
        %v1069 = vpop.f32.mrb[0].mxu0
        %1070 = vmatprep.mubr.f32.mxu0 %v345
        %1071 = vmatmul.mubr.f32.gmra.mrb[0].mxu0 %v344
        %v1072 = vpop.f32.mrb[0].mxu0
        %v1073 = vadd.f32 0.0, %v1072
        %v1074 = vpop.f32.mrb[0].mxu0
        %1075 = vmatprep.mubr.f32.mxu0 %v347
        %1076 = vmatmul.mubr.f32.gmra.mrb[0].mxu0 %v346
        %v1077 = vpop.f32.mrb[0].mxu0
        %v1078 = vadd.f32 0.0, %v1077
        %v1079 = vpop.f32.mrb[0].mxu0
        %1080 = vmatprep.mubr.f32.mxu0 %v349
        %1081 = vmatmul.mubr.f32.gmra.mrb[0].mxu0 %v348
        %v1082 = vpop.f32.mrb[0].mxu0
        %v1083 = vadd.f32 0.0, %v1082
        %v1084 = vpop.f32.mrb[0].mxu0
        %1085 = vmatprep.mubr.f32.mxu0 %v351
        %1086 = vmatmul.mubr.f32.gmra.mrb[0].mxu0 %v350
        %v1087 = vpop.f32.mrb[0].mxu0
        %v1088 = vadd.f32 0.0, %v1087
        %v1089 = vpop.f32.mrb[0].mxu0
        %1090 = vdwg.mxu0
        %vm1091 = vcmask 261120
        %1092 = vst.msk [vmem:[%s220] sm:$0xff] %vm1091, %v773
        %1093 = vst.msk [vmem:[%s220 + $0x8] sm:$0xff] %vm1091, %v778
        %1094 = vst.msk [vmem:[%s220 + $0x10] sm:$0xff] %vm1091, %v783
        %1095 = vst.msk [vmem:[%s220 + $0x18] sm:$0xff] %vm1091, %v788
        %1096 = vst.msk [vmem:[%s220 + $0x20] sm:$0xff] %vm1091, %v793
        %1097 = vst.msk [vmem:[%s220 + $0x28] sm:$0xff] %vm1091, %v798
        %1098 = vst.msk [vmem:[%s220 + $0x30] sm:$0xff] %vm1091, %v803
        %1099 = vst.msk [vmem:[%s220 + $0x38] sm:$0xff] %vm1091, %v808
        %1100 = vst.msk [vmem:[%s220 + $0x40] sm:$0xff] %vm1091, %v813
        %1101 = vst.msk [vmem:[%s220 + $0x48] sm:$0xff] %vm1091, %v818
        %1102 = vst.msk [vmem:[%s220 + $0x50] sm:$0xff] %vm1091, %v823
        %1103 = vst.msk [vmem:[%s220 + $0x58] sm:$0xff] %vm1091, %v828
        %1104 = vst.msk [vmem:[%s220 + $0x60] sm:$0xff] %vm1091, %v833
        %1105 = vst.msk [vmem:[%s220 + $0x68] sm:$0xff] %vm1091, %v838
        %1106 = vst.msk [vmem:[%s220 + $0x70] sm:$0xff] %vm1091, %v843
        %1107 = vst.msk [vmem:[%s220 + $0x78] sm:$0xff] %vm1091, %v848
        %1108 = vst.msk [vmem:[%s220 + $0x80] sm:$0xff] %vm1091, %v853
        %1109 = vst.msk [vmem:[%s220 + $0x88] sm:$0xff] %vm1091, %v858
        %1110 = vst.msk [vmem:[%s220 + $0x90] sm:$0xff] %vm1091, %v863
        %1111 = vst.msk [vmem:[%s220 + $0x98] sm:$0xff] %vm1091, %v868
        %1112 = vst.msk [vmem:[%s220 + $0xa0] sm:$0xff] %vm1091, %v873
        %1113 = vst.msk [vmem:[%s220 + $0xa8] sm:$0xff] %vm1091, %v878
        %1114 = vst.msk [vmem:[%s220 + $0xb0] sm:$0xff] %vm1091, %v883
        %1115 = vst.msk [vmem:[%s220 + $0xb8] sm:$0xff] %vm1091, %v888
        %1116 = vst.msk [vmem:[%s220 + $0xc0] sm:$0xff] %vm1091, %v893
        %1117 = vst.msk [vmem:[%s220 + $0xc8] sm:$0xff] %vm1091, %v898
        %1118 = vst.msk [vmem:[%s220 + $0xd0] sm:$0xff] %vm1091, %v903
        %1119 = vst.msk [vmem:[%s220 + $0xd8] sm:$0xff] %vm1091, %v908
        %1120 = vst.msk [vmem:[%s220 + $0xe0] sm:$0xff] %vm1091, %v913
        %1121 = vst.msk [vmem:[%s220 + $0xe8] sm:$0xff] %vm1091, %v918
        %1122 = vst.msk [vmem:[%s220 + $0xf0] sm:$0xff] %vm1091, %v923
        %1123 = vst.msk [vmem:[%s220 + $0xf8] sm:$0xff] %vm1091, %v928
        %1124 = vst.msk [vmem:[%s220 + $0x100] sm:$0xff] %vm1091, %v933
        %1125 = vst.msk [vmem:[%s220 + $0x108] sm:$0xff] %vm1091, %v938
        %1126 = vst.msk [vmem:[%s220 + $0x110] sm:$0xff] %vm1091, %v943
        %1127 = vst.msk [vmem:[%s220 + $0x118] sm:$0xff] %vm1091, %v948
        %1128 = vst.msk [vmem:[%s220 + $0x120] sm:$0xff] %vm1091, %v953
        %1129 = vst.msk [vmem:[%s220 + $0x128] sm:$0xff] %vm1091, %v958
        %1130 = vst.msk [vmem:[%s220 + $0x130] sm:$0xff] %vm1091, %v963
        %1131 = vst.msk [vmem:[%s220 + $0x138] sm:$0xff] %vm1091, %v968
        %1132 = vst.msk [vmem:[%s220 + $0x140] sm:$0xff] %vm1091, %v973
        %1133 = vst.msk [vmem:[%s220 + $0x148] sm:$0xff] %vm1091, %v978
        %1134 = vst.msk [vmem:[%s220 + $0x150] sm:$0xff] %vm1091, %v983
        %1135 = vst.msk [vmem:[%s220 + $0x158] sm:$0xff] %vm1091, %v988
        %1136 = vst.msk [vmem:[%s220 + $0x160] sm:$0xff] %vm1091, %v993
        %1137 = vst.msk [vmem:[%s220 + $0x168] sm:$0xff] %vm1091, %v998
        %1138 = vst.msk [vmem:[%s220 + $0x170] sm:$0xff] %vm1091, %v1003
        %1139 = vst.msk [vmem:[%s220 + $0x178] sm:$0xff] %vm1091, %v1008
        %1140 = vst.msk [vmem:[%s220 + $0x180] sm:$0xff] %vm1091, %v1013
        %1141 = vst.msk [vmem:[%s220 + $0x188] sm:$0xff] %vm1091, %v1018
        %1142 = vst.msk [vmem:[%s220 + $0x190] sm:$0xff] %vm1091, %v1023
        %1143 = vst.msk [vmem:[%s220 + $0x198] sm:$0xff] %vm1091, %v1028
        %1144 = vst.msk [vmem:[%s220 + $0x1a0] sm:$0xff] %vm1091, %v1033
        %1145 = vst.msk [vmem:[%s220 + $0x1a8] sm:$0xff] %vm1091, %v1038
        %1146 = vst.msk [vmem:[%s220 + $0x1b0] sm:$0xff] %vm1091, %v1043
        %1147 = vst.msk [vmem:[%s220 + $0x1b8] sm:$0xff] %vm1091, %v1048
        %1148 = vst.msk [vmem:[%s220 + $0x1c0] sm:$0xff] %vm1091, %v1053
        %1149 = vst.msk [vmem:[%s220 + $0x1c8] sm:$0xff] %vm1091, %v1058
        %1150 = vst.msk [vmem:[%s220 + $0x1d0] sm:$0xff] %vm1091, %v1063
        %1151 = vst.msk [vmem:[%s220 + $0x1d8] sm:$0xff] %vm1091, %v1068
        %1152 = vst.msk [vmem:[%s220 + $0x1e0] sm:$0xff] %vm1091, %v1073
        %1153 = vst.msk [vmem:[%s220 + $0x1e8] sm:$0xff] %vm1091, %v1078
        %1154 = vst.msk [vmem:[%s220 + $0x1f0] sm:$0xff] %vm1091, %v1083
        %1155 = vst.msk [vmem:[%s220 + $0x1f8] sm:$0xff] %vm1091, %v1088
        %s1156 = scalar_lea.vmem %s184, 256 [#allocation2]
        %v1157 = vld [vmem:[%s1156] sm:$0xff]
        %v1158 = vld [vmem:[%s1156 + $0x8] sm:$0xff]
        %v1159 = vld [vmem:[%s1156 + $0x10] sm:$0xff]
        %v1160 = vld [vmem:[%s1156 + $0x18] sm:$0xff]
        %v1161 = vld [vmem:[%s1156 + $0x20] sm:$0xff]
        %v1162 = vld [vmem:[%s1156 + $0x28] sm:$0xff]
        %v1163 = vld [vmem:[%s1156 + $0x30] sm:$0xff]
        %v1164 = vld [vmem:[%s1156 + $0x38] sm:$0xff]
        %v1165 = vld [vmem:[%s1156 + $0x40] sm:$0xff]
        %v1166 = vld [vmem:[%s1156 + $0x48] sm:$0xff]
        %v1167 = vld [vmem:[%s1156 + $0x50] sm:$0xff]
        %v1168 = vld [vmem:[%s1156 + $0x58] sm:$0xff]
        %v1169 = vld [vmem:[%s1156 + $0x60] sm:$0xff]
        %v1170 = vld [vmem:[%s1156 + $0x68] sm:$0xff]
        %v1171 = vld [vmem:[%s1156 + $0x70] sm:$0xff]
        %v1172 = vld [vmem:[%s1156 + $0x78] sm:$0xff]
        %v1173 = vld [vmem:[%s1156 + $0x80] sm:$0xff]
        %v1174 = vld [vmem:[%s1156 + $0x88] sm:$0xff]
        %v1175 = vld [vmem:[%s1156 + $0x90] sm:$0xff]
        %v1176 = vld [vmem:[%s1156 + $0x98] sm:$0xff]
        %v1177 = vld [vmem:[%s1156 + $0xa0] sm:$0xff]
        %v1178 = vld [vmem:[%s1156 + $0xa8] sm:$0xff]
        %v1179 = vld [vmem:[%s1156 + $0xb0] sm:$0xff]
        %v1180 = vld [vmem:[%s1156 + $0xb8] sm:$0xff]
        %v1181 = vld [vmem:[%s1156 + $0xc0] sm:$0xff]
        %v1182 = vld [vmem:[%s1156 + $0xc8] sm:$0xff]
        %v1183 = vld [vmem:[%s1156 + $0xd0] sm:$0xff]
        %v1184 = vld [vmem:[%s1156 + $0xd8] sm:$0xff]
        %v1185 = vld [vmem:[%s1156 + $0xe0] sm:$0xff]
        %v1186 = vld [vmem:[%s1156 + $0xe8] sm:$0xff]
        %v1187 = vld [vmem:[%s1156 + $0xf0] sm:$0xff]
        %v1188 = vld [vmem:[%s1156 + $0xf8] sm:$0xff]
        %v1190 = vsel %vm384, %v1157, 0
        %v1193 = vsel %vm384, %v1158, 0
        %v1196 = vsel %vm384, %v1159, 0
        %v1199 = vsel %vm384, %v1160, 0
        %v1202 = vsel %vm384, %v1161, 0
        %v1205 = vsel %vm384, %v1162, 0
        %v1208 = vsel %vm384, %v1163, 0
        %v1211 = vsel %vm384, %v1164, 0
        %v1214 = vsel %vm384, %v1165, 0
        %v1217 = vsel %vm384, %v1166, 0
        %v1220 = vsel %vm384, %v1167, 0
        %v1223 = vsel %vm384, %v1168, 0
        %v1226 = vsel %vm384, %v1169, 0
        %v1229 = vsel %vm384, %v1170, 0
        %v1232 = vsel %vm384, %v1171, 0
        %v1235 = vsel %vm384, %v1172, 0
        %v1238 = vsel %vm384, %v1173, 0
        %v1241 = vsel %vm384, %v1174, 0
        %v1244 = vsel %vm384, %v1175, 0
        %v1247 = vsel %vm384, %v1176, 0
        %v1250 = vsel %vm384, %v1177, 0
        %v1253 = vsel %vm384, %v1178, 0
        %v1256 = vsel %vm384, %v1179, 0
        %v1259 = vsel %vm384, %v1180, 0
        %v1262 = vsel %vm384, %v1181, 0
        %v1265 = vsel %vm384, %v1182, 0
        %v1268 = vsel %vm384, %v1183, 0
        %v1271 = vsel %vm384, %v1184, 0
        %v1274 = vsel %vm384, %v1185, 0
        %v1277 = vsel %vm384, %v1186, 0
        %v1280 = vsel %vm384, %v1187, 0
        %v1283 = vsel %vm384, %v1188, 0
        %1285 = vmatprep.subr.mxu0 0.0
        %1286 = vmatpush1.msra.mxu0 %v222
        %1287 = vmatprep.subr.mxu0 0.0
        %1288 = vmatpush1.msra.mxu0 %v223
        %1289 = vmatprep.subr.mxu0 0.0
        %1290 = vmatpush1.msra.mxu0 0.0
        %1291 = vmatprep.subr.mxu0 0.0
        %1292 = vmatpush1.msra.mxu0 0.0
        %1293 = vmatprep.subr.mxu0 0.0
        %1294 = vmatpush1.msra.mxu0 0.0
        %1295 = vmatprep.subr.mxu0 0.0
        %1296 = vmatpush1.msra.mxu0 0.0
        %1297 = vmatprep.subr.mxu0 0.0
        %1298 = vmatpush1.msra.mxu0 0.0
        %1299 = vmatprep.subr.mxu0 0.0
        %1300 = vmatpush1.msra.mxu0 0.0
        %1301 = vmatprep.subr.mxu0 0.0
        %1302 = vmatpush1.msra.mxu0 0.0
        %1303 = vmatprep.subr.mxu0 0.0
        %1304 = vmatpush1.msra.mxu0 0.0
        %1305 = vmatprep.subr.mxu0 0.0
        %1306 = vmatpush1.msra.mxu0 0.0
        %1307 = vmatprep.subr.mxu0 0.0
        %1308 = vmatpush1.msra.mxu0 0.0
        %1309 = vmatprep.subr.mxu0 0.0
        %1310 = vmatpush1.msra.mxu0 0.0
        %1311 = vmatprep.subr.mxu0 0.0
        %1312 = vmatpush1.msra.mxu0 0.0
        %1313 = vmatprep.subr.mxu0 0.0
        %1314 = vmatpush1.msra.mxu0 0.0
        %1315 = vmatprep.subr.mxu0 0.0
        %1316 = vmatpush1.msra.mxu0 0.0
        %1317 = vmatprep.subr.mxu0 0.0
        %1318 = vmatpush1.msra.mxu0 0.0
        %1319 = vmatprep.subr.mxu0 0.0
        %1320 = vmatpush1.msra.mxu0 0.0
        %1321 = vmatprep.subr.mxu0 0.0
        %1322 = vmatpush1.msra.mxu0 0.0
        %1323 = vmatprep.subr.mxu0 0.0
        %1324 = vmatpush1.msra.mxu0 0.0
        %1325 = vmatprep.subr.mxu0 0.0
        %1326 = vmatpush1.msra.mxu0 0.0
        %1327 = vmatprep.subr.mxu0 0.0
        %1328 = vmatpush1.msra.mxu0 0.0
        %1329 = vmatprep.subr.mxu0 0.0
        %1330 = vmatpush1.msra.mxu0 0.0
        %1331 = vmatprep.subr.mxu0 0.0
        %1332 = vmatpush1.msra.mxu0 0.0
        %1333 = vmatprep.subr.mxu0 0.0
        %1334 = vmatpush1.msra.mxu0 0.0
        %1335 = vmatprep.subr.mxu0 0.0
        %1336 = vmatpush1.msra.mxu0 0.0
        %1337 = vmatprep.subr.mxu0 0.0
        %1338 = vmatpush1.msra.mxu0 0.0
        %1339 = vmatprep.subr.mxu0 0.0
        %1340 = vmatpush1.msra.mxu0 0.0
        %1341 = vmatprep.subr.mxu0 0.0
        %1342 = vmatpush1.msra.mxu0 0.0
        %1343 = vmatprep.subr.mxu0 0.0
        %1344 = vmatpush1.msra.mxu0 0.0
        %1345 = vmatprep.subr.mxu0 0.0
        %1346 = vmatpush1.msra.mxu0 0.0
        %1347 = vmatprep.subr.mxu0 0.0
        %1348 = vmatpush1.msra.mxu0 0.0
        %1349 = vmatprep.mubr.f32.mxu0 0.0
        %1350 = vmatmul.mubr.f32.gmra.mrb[0].mxu0 %v1190
        %v1351 = vpop.f32.mrb[0].mxu0
        %v1352 = vadd.f32 0.0, %v1351
        %v1353 = vpop.f32.mrb[0].mxu0
        %1354 = vmatprep.mubr.f32.mxu0 0.0
        %1355 = vmatmul.mubr.f32.gmra.mrb[0].mxu0 %v1193
        %v1356 = vpop.f32.mrb[0].mxu0
        %v1357 = vadd.f32 0.0, %v1356
        %v1358 = vpop.f32.mrb[0].mxu0
        %1359 = vmatprep.mubr.f32.mxu0 0.0
        %1360 = vmatmul.mubr.f32.gmra.mrb[0].mxu0 %v1196
        %v1361 = vpop.f32.mrb[0].mxu0
        %v1362 = vadd.f32 0.0, %v1361
        %v1363 = vpop.f32.mrb[0].mxu0
        %1364 = vmatprep.mubr.f32.mxu0 0.0
        %1365 = vmatmul.mubr.f32.gmra.mrb[0].mxu0 %v1199
        %v1366 = vpop.f32.mrb[0].mxu0
        %v1367 = vadd.f32 0.0, %v1366
        %v1368 = vpop.f32.mrb[0].mxu0
        %1369 = vmatprep.mubr.f32.mxu0 0.0
        %1370 = vmatmul.mubr.f32.gmra.mrb[0].mxu0 %v1202
        %v1371 = vpop.f32.mrb[0].mxu0
        %v1372 = vadd.f32 0.0, %v1371
        %v1373 = vpop.f32.mrb[0].mxu0
        %1374 = vmatprep.mubr.f32.mxu0 0.0
        %1375 = vmatmul.mubr.f32.gmra.mrb[0].mxu0 %v1205
        %v1376 = vpop.f32.mrb[0].mxu0
        %v1377 = vadd.f32 0.0, %v1376
        %v1378 = vpop.f32.mrb[0].mxu0
        %1379 = vmatprep.mubr.f32.mxu0 0.0
        %1380 = vmatmul.mubr.f32.gmra.mrb[0].mxu0 %v1208
        %v1381 = vpop.f32.mrb[0].mxu0
        %v1382 = vadd.f32 0.0, %v1381
        %v1383 = vpop.f32.mrb[0].mxu0
        %1384 = vmatprep.mubr.f32.mxu0 0.0
        %1385 = vmatmul.mubr.f32.gmra.mrb[0].mxu0 %v1211
        %v1386 = vpop.f32.mrb[0].mxu0
        %v1387 = vadd.f32 0.0, %v1386
        %v1388 = vpop.f32.mrb[0].mxu0
        %1389 = vmatprep.mubr.f32.mxu0 0.0
        %1390 = vmatmul.mubr.f32.gmra.mrb[0].mxu0 %v1214
        %v1391 = vpop.f32.mrb[0].mxu0
        %v1392 = vadd.f32 0.0, %v1391
        %v1393 = vpop.f32.mrb[0].mxu0
        %1394 = vmatprep.mubr.f32.mxu0 0.0
        %1395 = vmatmul.mubr.f32.gmra.mrb[0].mxu0 %v1217
        %v1396 = vpop.f32.mrb[0].mxu0
        %v1397 = vadd.f32 0.0, %v1396
        %v1398 = vpop.f32.mrb[0].mxu0
        %1399 = vmatprep.mubr.f32.mxu0 0.0
        %1400 = vmatmul.mubr.f32.gmra.mrb[0].mxu0 %v1220
        %v1401 = vpop.f32.mrb[0].mxu0
        %v1402 = vadd.f32 0.0, %v1401
        %v1403 = vpop.f32.mrb[0].mxu0
        %1404 = vmatprep.mubr.f32.mxu0 0.0
        %1405 = vmatmul.mubr.f32.gmra.mrb[0].mxu0 %v1223
        %v1406 = vpop.f32.mrb[0].mxu0
        %v1407 = vadd.f32 0.0, %v1406
        %v1408 = vpop.f32.mrb[0].mxu0
        %1409 = vmatprep.mubr.f32.mxu0 0.0
        %1410 = vmatmul.mubr.f32.gmra.mrb[0].mxu0 %v1226
        %v1411 = vpop.f32.mrb[0].mxu0
        %v1412 = vadd.f32 0.0, %v1411
        %v1413 = vpop.f32.mrb[0].mxu0
        %1414 = vmatprep.mubr.f32.mxu0 0.0
        %1415 = vmatmul.mubr.f32.gmra.mrb[0].mxu0 %v1229
        %v1416 = vpop.f32.mrb[0].mxu0
        %v1417 = vadd.f32 0.0, %v1416
        %v1418 = vpop.f32.mrb[0].mxu0
        %1419 = vmatprep.mubr.f32.mxu0 0.0
        %1420 = vmatmul.mubr.f32.gmra.mrb[0].mxu0 %v1232
        %v1421 = vpop.f32.mrb[0].mxu0
        %v1422 = vadd.f32 0.0, %v1421
        %v1423 = vpop.f32.mrb[0].mxu0
        %1424 = vmatprep.mubr.f32.mxu0 0.0
        %1425 = vmatmul.mubr.f32.gmra.mrb[0].mxu0 %v1235
        %v1426 = vpop.f32.mrb[0].mxu0
        %v1427 = vadd.f32 0.0, %v1426
        %v1428 = vpop.f32.mrb[0].mxu0
        %1429 = vmatprep.mubr.f32.mxu0 0.0
        %1430 = vmatmul.mubr.f32.gmra.mrb[0].mxu0 %v1238
        %v1431 = vpop.f32.mrb[0].mxu0
        %v1432 = vadd.f32 0.0, %v1431
        %v1433 = vpop.f32.mrb[0].mxu0
        %1434 = vmatprep.mubr.f32.mxu0 0.0
        %1435 = vmatmul.mubr.f32.gmra.mrb[0].mxu0 %v1241
        %v1436 = vpop.f32.mrb[0].mxu0
        %v1437 = vadd.f32 0.0, %v1436
        %v1438 = vpop.f32.mrb[0].mxu0
        %1439 = vmatprep.mubr.f32.mxu0 0.0
        %1440 = vmatmul.mubr.f32.gmra.mrb[0].mxu0 %v1244
        %v1441 = vpop.f32.mrb[0].mxu0
        %v1442 = vadd.f32 0.0, %v1441
        %v1443 = vpop.f32.mrb[0].mxu0
        %1444 = vmatprep.mubr.f32.mxu0 0.0
        %1445 = vmatmul.mubr.f32.gmra.mrb[0].mxu0 %v1247
        %v1446 = vpop.f32.mrb[0].mxu0
        %v1447 = vadd.f32 0.0, %v1446
        %v1448 = vpop.f32.mrb[0].mxu0
        %1449 = vmatprep.mubr.f32.mxu0 0.0
        %1450 = vmatmul.mubr.f32.gmra.mrb[0].mxu0 %v1250
        %v1451 = vpop.f32.mrb[0].mxu0
        %v1452 = vadd.f32 0.0, %v1451
        %v1453 = vpop.f32.mrb[0].mxu0
        %1454 = vmatprep.mubr.f32.mxu0 0.0
        %1455 = vmatmul.mubr.f32.gmra.mrb[0].mxu0 %v1253
        %v1456 = vpop.f32.mrb[0].mxu0
        %v1457 = vadd.f32 0.0, %v1456
        %v1458 = vpop.f32.mrb[0].mxu0
        %1459 = vmatprep.mubr.f32.mxu0 0.0
        %1460 = vmatmul.mubr.f32.gmra.mrb[0].mxu0 %v1256
        %v1461 = vpop.f32.mrb[0].mxu0
        %v1462 = vadd.f32 0.0, %v1461
        %v1463 = vpop.f32.mrb[0].mxu0
        %1464 = vmatprep.mubr.f32.mxu0 0.0
        %1465 = vmatmul.mubr.f32.gmra.mrb[0].mxu0 %v1259
        %v1466 = vpop.f32.mrb[0].mxu0
        %v1467 = vadd.f32 0.0, %v1466
        %v1468 = vpop.f32.mrb[0].mxu0
        %1469 = vmatprep.mubr.f32.mxu0 0.0
        %1470 = vmatmul.mubr.f32.gmra.mrb[0].mxu0 %v1262
        %v1471 = vpop.f32.mrb[0].mxu0
        %v1472 = vadd.f32 0.0, %v1471
        %v1473 = vpop.f32.mrb[0].mxu0
        %1474 = vmatprep.mubr.f32.mxu0 0.0
        %1475 = vmatmul.mubr.f32.gmra.mrb[0].mxu0 %v1265
        %v1476 = vpop.f32.mrb[0].mxu0
        %v1477 = vadd.f32 0.0, %v1476
        %v1478 = vpop.f32.mrb[0].mxu0
        %1479 = vmatprep.mubr.f32.mxu0 0.0
        %1480 = vmatmul.mubr.f32.gmra.mrb[0].mxu0 %v1268
        %v1481 = vpop.f32.mrb[0].mxu0
        %v1482 = vadd.f32 0.0, %v1481
        %v1483 = vpop.f32.mrb[0].mxu0
        %1484 = vmatprep.mubr.f32.mxu0 0.0
        %1485 = vmatmul.mubr.f32.gmra.mrb[0].mxu0 %v1271
        %v1486 = vpop.f32.mrb[0].mxu0
        %v1487 = vadd.f32 0.0, %v1486
        %v1488 = vpop.f32.mrb[0].mxu0
        %1489 = vmatprep.mubr.f32.mxu0 0.0
        %1490 = vmatmul.mubr.f32.gmra.mrb[0].mxu0 %v1274
        %v1491 = vpop.f32.mrb[0].mxu0
        %v1492 = vadd.f32 0.0, %v1491
        %v1493 = vpop.f32.mrb[0].mxu0
        %1494 = vmatprep.mubr.f32.mxu0 0.0
        %1495 = vmatmul.mubr.f32.gmra.mrb[0].mxu0 %v1277
        %v1496 = vpop.f32.mrb[0].mxu0
        %v1497 = vadd.f32 0.0, %v1496
        %v1498 = vpop.f32.mrb[0].mxu0
        %1499 = vmatprep.mubr.f32.mxu0 0.0
        %1500 = vmatmul.mubr.f32.gmra.mrb[0].mxu0 %v1280
        %v1501 = vpop.f32.mrb[0].mxu0
        %v1502 = vadd.f32 0.0, %v1501
        %v1503 = vpop.f32.mrb[0].mxu0
        %1504 = vmatprep.mubr.f32.mxu0 0.0
        %1505 = vmatmul.mubr.f32.gmra.mrb[0].mxu0 %v1283
        %v1506 = vpop.f32.mrb[0].mxu0
        %v1507 = vadd.f32 0.0, %v1506
        %v1508 = vpop.f32.mrb[0].mxu0
        %1509 = vdwg.mxu0
        %1510 = vmatprep.subr.mxu0 0.0
        %1511 = vmatpush1.msra.mxu0 %v1352
        %1512 = vmatprep.subr.mxu0 0.0
        %1513 = vmatpush1.msra.mxu0 %v1357
        %1514 = vmatprep.subr.mxu0 0.0
        %1515 = vmatpush1.msra.mxu0 %v1362
        %1516 = vmatprep.subr.mxu0 0.0
        %1517 = vmatpush1.msra.mxu0 %v1367
        %1518 = vmatprep.subr.mxu0 0.0
        %1519 = vmatpush1.msra.mxu0 %v1372
        %1520 = vmatprep.subr.mxu0 0.0
        %1521 = vmatpush1.msra.mxu0 %v1377
        %1522 = vmatprep.subr.mxu0 0.0
        %1523 = vmatpush1.msra.mxu0 %v1382
        %1524 = vmatprep.subr.mxu0 0.0
        %1525 = vmatpush1.msra.mxu0 %v1387
        %1526 = vmatprep.subr.mxu0 0.0
        %1527 = vmatpush1.msra.mxu0 %v1392
        %1528 = vmatprep.subr.mxu0 0.0
        %1529 = vmatpush1.msra.mxu0 %v1397
        %1530 = vmatprep.subr.mxu0 0.0
        %1531 = vmatpush1.msra.mxu0 %v1402
        %1532 = vmatprep.subr.mxu0 0.0
        %1533 = vmatpush1.msra.mxu0 %v1407
        %1534 = vmatprep.subr.mxu0 0.0
        %1535 = vmatpush1.msra.mxu0 %v1412
        %1536 = vmatprep.subr.mxu0 0.0
        %1537 = vmatpush1.msra.mxu0 %v1417
        %1538 = vmatprep.subr.mxu0 0.0
        %1539 = vmatpush1.msra.mxu0 %v1422
        %1540 = vmatprep.subr.mxu0 0.0
        %1541 = vmatpush1.msra.mxu0 %v1427
        %1542 = vmatprep.subr.mxu0 0.0
        %1543 = vmatpush1.msra.mxu0 %v1432
        %1544 = vmatprep.subr.mxu0 0.0
        %1545 = vmatpush1.msra.mxu0 %v1437
        %1546 = vmatprep.subr.mxu0 0.0
        %1547 = vmatpush1.msra.mxu0 %v1442
        %1548 = vmatprep.subr.mxu0 0.0
        %1549 = vmatpush1.msra.mxu0 %v1447
        %1550 = vmatprep.subr.mxu0 0.0
        %1551 = vmatpush1.msra.mxu0 %v1452
        %1552 = vmatprep.subr.mxu0 0.0
        %1553 = vmatpush1.msra.mxu0 %v1457
        %1554 = vmatprep.subr.mxu0 0.0
        %1555 = vmatpush1.msra.mxu0 %v1462
        %1556 = vmatprep.subr.mxu0 0.0
        %1557 = vmatpush1.msra.mxu0 %v1467
        %1558 = vmatprep.subr.mxu0 0.0
        %1559 = vmatpush1.msra.mxu0 %v1472
        %1560 = vmatprep.subr.mxu0 0.0
        %1561 = vmatpush1.msra.mxu0 %v1477
        %1562 = vmatprep.subr.mxu0 0.0
        %1563 = vmatpush1.msra.mxu0 %v1482
        %1564 = vmatprep.subr.mxu0 0.0
        %1565 = vmatpush1.msra.mxu0 %v1487
        %1566 = vmatprep.subr.mxu0 0.0
        %1567 = vmatpush1.msra.mxu0 %v1492
        %1568 = vmatprep.subr.mxu0 0.0
        %1569 = vmatpush1.msra.mxu0 %v1497
        %1570 = vmatprep.subr.mxu0 0.0
        %1571 = vmatpush1.msra.mxu0 %v1502
        %1572 = vmatprep.subr.mxu0 0.0
        %1573 = vmatpush1.msra.mxu0 %v1507
        %1574 = vmatprep.mubr.f32.mxu0 %v225
        %1575 = vmatmul.mubr.f32.gmra.mrb[0].mxu0 %v224
        %v1576 = vpop.f32.mrb[0].mxu0
        %v1577 = vadd.f32 0.0, %v1576
        %v1578 = vpop.f32.mrb[0].mxu0
        %1579 = vmatprep.mubr.f32.mxu0 %v227
        %1580 = vmatmul.mubr.f32.gmra.mrb[0].mxu0 %v226
        %v1581 = vpop.f32.mrb[0].mxu0
        %v1582 = vadd.f32 0.0, %v1581
        %v1583 = vpop.f32.mrb[0].mxu0
        %1584 = vmatprep.mubr.f32.mxu0 %v229
        %1585 = vmatmul.mubr.f32.gmra.mrb[0].mxu0 %v228
        %v1586 = vpop.f32.mrb[0].mxu0
        %v1587 = vadd.f32 0.0, %v1586
        %v1588 = vpop.f32.mrb[0].mxu0
        %1589 = vmatprep.mubr.f32.mxu0 %v231
        %1590 = vmatmul.mubr.f32.gmra.mrb[0].mxu0 %v230
        %v1591 = vpop.f32.mrb[0].mxu0
        %v1592 = vadd.f32 0.0, %v1591
        %v1593 = vpop.f32.mrb[0].mxu0
        %1594 = vmatprep.mubr.f32.mxu0 %v233
        %1595 = vmatmul.mubr.f32.gmra.mrb[0].mxu0 %v232
        %v1596 = vpop.f32.mrb[0].mxu0
        %v1597 = vadd.f32 0.0, %v1596
        %v1598 = vpop.f32.mrb[0].mxu0
        %1599 = vmatprep.mubr.f32.mxu0 %v235
        %1600 = vmatmul.mubr.f32.gmra.mrb[0].mxu0 %v234
        %v1601 = vpop.f32.mrb[0].mxu0
        %v1602 = vadd.f32 0.0, %v1601
        %v1603 = vpop.f32.mrb[0].mxu0
        %1604 = vmatprep.mubr.f32.mxu0 %v237
        %1605 = vmatmul.mubr.f32.gmra.mrb[0].mxu0 %v236
        %v1606 = vpop.f32.mrb[0].mxu0
        %v1607 = vadd.f32 0.0, %v1606
        %v1608 = vpop.f32.mrb[0].mxu0
        %1609 = vmatprep.mubr.f32.mxu0 %v239
        %1610 = vmatmul.mubr.f32.gmra.mrb[0].mxu0 %v238
        %v1611 = vpop.f32.mrb[0].mxu0
        %v1612 = vadd.f32 0.0, %v1611
        %v1613 = vpop.f32.mrb[0].mxu0
        %1614 = vmatprep.mubr.f32.mxu0 %v241
        %1615 = vmatmul.mubr.f32.gmra.mrb[0].mxu0 %v240
        %v1616 = vpop.f32.mrb[0].mxu0
        %v1617 = vadd.f32 0.0, %v1616
        %v1618 = vpop.f32.mrb[0].mxu0
        %1619 = vmatprep.mubr.f32.mxu0 %v243
        %1620 = vmatmul.mubr.f32.gmra.mrb[0].mxu0 %v242
        %v1621 = vpop.f32.mrb[0].mxu0
        %v1622 = vadd.f32 0.0, %v1621
        %v1623 = vpop.f32.mrb[0].mxu0
        %1624 = vmatprep.mubr.f32.mxu0 %v245
        %1625 = vmatmul.mubr.f32.gmra.mrb[0].mxu0 %v244
        %v1626 = vpop.f32.mrb[0].mxu0
        %v1627 = vadd.f32 0.0, %v1626
        %v1628 = vpop.f32.mrb[0].mxu0
        %1629 = vmatprep.mubr.f32.mxu0 %v247
        %1630 = vmatmul.mubr.f32.gmra.mrb[0].mxu0 %v246
        %v1631 = vpop.f32.mrb[0].mxu0
        %v1632 = vadd.f32 0.0, %v1631
        %v1633 = vpop.f32.mrb[0].mxu0
        %1634 = vmatprep.mubr.f32.mxu0 %v249
        %1635 = vmatmul.mubr.f32.gmra.mrb[0].mxu0 %v248
        %v1636 = vpop.f32.mrb[0].mxu0
        %v1637 = vadd.f32 0.0, %v1636
        %v1638 = vpop.f32.mrb[0].mxu0
        %1639 = vmatprep.mubr.f32.mxu0 %v251
        %1640 = vmatmul.mubr.f32.gmra.mrb[0].mxu0 %v250
        %v1641 = vpop.f32.mrb[0].mxu0
        %v1642 = vadd.f32 0.0, %v1641
        %v1643 = vpop.f32.mrb[0].mxu0
        %1644 = vmatprep.mubr.f32.mxu0 %v253
        %1645 = vmatmul.mubr.f32.gmra.mrb[0].mxu0 %v252
        %v1646 = vpop.f32.mrb[0].mxu0
        %v1647 = vadd.f32 0.0, %v1646
        %v1648 = vpop.f32.mrb[0].mxu0
        %1649 = vmatprep.mubr.f32.mxu0 %v255
        %1650 = vmatmul.mubr.f32.gmra.mrb[0].mxu0 %v254
        %v1651 = vpop.f32.mrb[0].mxu0
        %v1652 = vadd.f32 0.0, %v1651
        %v1653 = vpop.f32.mrb[0].mxu0
        %1654 = vmatprep.mubr.f32.mxu0 %v257
        %1655 = vmatmul.mubr.f32.gmra.mrb[0].mxu0 %v256
        %v1656 = vpop.f32.mrb[0].mxu0
        %v1657 = vadd.f32 0.0, %v1656
        %v1658 = vpop.f32.mrb[0].mxu0
        %1659 = vmatprep.mubr.f32.mxu0 %v259
        %1660 = vmatmul.mubr.f32.gmra.mrb[0].mxu0 %v258
        %v1661 = vpop.f32.mrb[0].mxu0
        %v1662 = vadd.f32 0.0, %v1661
        %v1663 = vpop.f32.mrb[0].mxu0
        %1664 = vmatprep.mubr.f32.mxu0 %v261
        %1665 = vmatmul.mubr.f32.gmra.mrb[0].mxu0 %v260
        %v1666 = vpop.f32.mrb[0].mxu0
        %v1667 = vadd.f32 0.0, %v1666
        %v1668 = vpop.f32.mrb[0].mxu0
        %1669 = vmatprep.mubr.f32.mxu0 %v263
        %1670 = vmatmul.mubr.f32.gmra.mrb[0].mxu0 %v262
        %v1671 = vpop.f32.mrb[0].mxu0
        %v1672 = vadd.f32 0.0, %v1671
        %v1673 = vpop.f32.mrb[0].mxu0
        %1674 = vmatprep.mubr.f32.mxu0 %v265
        %1675 = vmatmul.mubr.f32.gmra.mrb[0].mxu0 %v264
        %v1676 = vpop.f32.mrb[0].mxu0
        %v1677 = vadd.f32 0.0, %v1676
        %v1678 = vpop.f32.mrb[0].mxu0
        %1679 = vmatprep.mubr.f32.mxu0 %v267
        %1680 = vmatmul.mubr.f32.gmra.mrb[0].mxu0 %v266
        %v1681 = vpop.f32.mrb[0].mxu0
        %v1682 = vadd.f32 0.0, %v1681
        %v1683 = vpop.f32.mrb[0].mxu0
        %1684 = vmatprep.mubr.f32.mxu0 %v269
        %1685 = vmatmul.mubr.f32.gmra.mrb[0].mxu0 %v268
        %v1686 = vpop.f32.mrb[0].mxu0
        %v1687 = vadd.f32 0.0, %v1686
        %v1688 = vpop.f32.mrb[0].mxu0
        %1689 = vmatprep.mubr.f32.mxu0 %v271
        %1690 = vmatmul.mubr.f32.gmra.mrb[0].mxu0 %v270
        %v1691 = vpop.f32.mrb[0].mxu0
        %v1692 = vadd.f32 0.0, %v1691
        %v1693 = vpop.f32.mrb[0].mxu0
        %1694 = vmatprep.mubr.f32.mxu0 %v273
        %1695 = vmatmul.mubr.f32.gmra.mrb[0].mxu0 %v272
        %v1696 = vpop.f32.mrb[0].mxu0
        %v1697 = vadd.f32 0.0, %v1696
        %v1698 = vpop.f32.mrb[0].mxu0
        %1699 = vmatprep.mubr.f32.mxu0 %v275
        %1700 = vmatmul.mubr.f32.gmra.mrb[0].mxu0 %v274
        %v1701 = vpop.f32.mrb[0].mxu0
        %v1702 = vadd.f32 0.0, %v1701
        %v1703 = vpop.f32.mrb[0].mxu0
        %1704 = vmatprep.mubr.f32.mxu0 %v277
        %1705 = vmatmul.mubr.f32.gmra.mrb[0].mxu0 %v276
        %v1706 = vpop.f32.mrb[0].mxu0
        %v1707 = vadd.f32 0.0, %v1706
        %v1708 = vpop.f32.mrb[0].mxu0
        %1709 = vmatprep.mubr.f32.mxu0 %v279
        %1710 = vmatmul.mubr.f32.gmra.mrb[0].mxu0 %v278
        %v1711 = vpop.f32.mrb[0].mxu0
        %v1712 = vadd.f32 0.0, %v1711
        %v1713 = vpop.f32.mrb[0].mxu0
        %1714 = vmatprep.mubr.f32.mxu0 %v281
        %1715 = vmatmul.mubr.f32.gmra.mrb[0].mxu0 %v280
        %v1716 = vpop.f32.mrb[0].mxu0
        %v1717 = vadd.f32 0.0, %v1716
        %v1718 = vpop.f32.mrb[0].mxu0
        %1719 = vmatprep.mubr.f32.mxu0 %v283
        %1720 = vmatmul.mubr.f32.gmra.mrb[0].mxu0 %v282
        %v1721 = vpop.f32.mrb[0].mxu0
        %v1722 = vadd.f32 0.0, %v1721
        %v1723 = vpop.f32.mrb[0].mxu0
        %1724 = vmatprep.mubr.f32.mxu0 %v285
        %1725 = vmatmul.mubr.f32.gmra.mrb[0].mxu0 %v284
        %v1726 = vpop.f32.mrb[0].mxu0
        %v1727 = vadd.f32 0.0, %v1726
        %v1728 = vpop.f32.mrb[0].mxu0
        %1729 = vmatprep.mubr.f32.mxu0 %v287
        %1730 = vmatmul.mubr.f32.gmra.mrb[0].mxu0 %v286
        %v1731 = vpop.f32.mrb[0].mxu0
        %v1732 = vadd.f32 0.0, %v1731
        %v1733 = vpop.f32.mrb[0].mxu0
        %1734 = vmatprep.mubr.f32.mxu0 %v289
        %1735 = vmatmul.mubr.f32.gmra.mrb[0].mxu0 %v288
        %v1736 = vpop.f32.mrb[0].mxu0
        %v1737 = vadd.f32 0.0, %v1736
        %v1738 = vpop.f32.mrb[0].mxu0
        %1739 = vmatprep.mubr.f32.mxu0 %v291
        %1740 = vmatmul.mubr.f32.gmra.mrb[0].mxu0 %v290
        %v1741 = vpop.f32.mrb[0].mxu0
        %v1742 = vadd.f32 0.0, %v1741
        %v1743 = vpop.f32.mrb[0].mxu0
        %1744 = vmatprep.mubr.f32.mxu0 %v293
        %1745 = vmatmul.mubr.f32.gmra.mrb[0].mxu0 %v292
        %v1746 = vpop.f32.mrb[0].mxu0
        %v1747 = vadd.f32 0.0, %v1746
        %v1748 = vpop.f32.mrb[0].mxu0
        %1749 = vmatprep.mubr.f32.mxu0 %v295
        %1750 = vmatmul.mubr.f32.gmra.mrb[0].mxu0 %v294
        %v1751 = vpop.f32.mrb[0].mxu0
        %v1752 = vadd.f32 0.0, %v1751
        %v1753 = vpop.f32.mrb[0].mxu0
        %1754 = vmatprep.mubr.f32.mxu0 %v297
        %1755 = vmatmul.mubr.f32.gmra.mrb[0].mxu0 %v296
        %v1756 = vpop.f32.mrb[0].mxu0
        %v1757 = vadd.f32 0.0, %v1756
        %v1758 = vpop.f32.mrb[0].mxu0
        %1759 = vmatprep.mubr.f32.mxu0 %v299
        %1760 = vmatmul.mubr.f32.gmra.mrb[0].mxu0 %v298
        %v1761 = vpop.f32.mrb[0].mxu0
        %v1762 = vadd.f32 0.0, %v1761
        %v1763 = vpop.f32.mrb[0].mxu0
        %1764 = vmatprep.mubr.f32.mxu0 %v301
        %1765 = vmatmul.mubr.f32.gmra.mrb[0].mxu0 %v300
        %v1766 = vpop.f32.mrb[0].mxu0
        %v1767 = vadd.f32 0.0, %v1766
        %v1768 = vpop.f32.mrb[0].mxu0
        %1769 = vmatprep.mubr.f32.mxu0 %v303
        %1770 = vmatmul.mubr.f32.gmra.mrb[0].mxu0 %v302
        %v1771 = vpop.f32.mrb[0].mxu0
        %v1772 = vadd.f32 0.0, %v1771
        %v1773 = vpop.f32.mrb[0].mxu0
        %1774 = vmatprep.mubr.f32.mxu0 %v305
        %1775 = vmatmul.mubr.f32.gmra.mrb[0].mxu0 %v304
        %v1776 = vpop.f32.mrb[0].mxu0
        %v1777 = vadd.f32 0.0, %v1776
        %v1778 = vpop.f32.mrb[0].mxu0
        %1779 = vmatprep.mubr.f32.mxu0 %v307
        %1780 = vmatmul.mubr.f32.gmra.mrb[0].mxu0 %v306
        %v1781 = vpop.f32.mrb[0].mxu0
        %v1782 = vadd.f32 0.0, %v1781
        %v1783 = vpop.f32.mrb[0].mxu0
        %1784 = vmatprep.mubr.f32.mxu0 %v309
        %1785 = vmatmul.mubr.f32.gmra.mrb[0].mxu0 %v308
        %v1786 = vpop.f32.mrb[0].mxu0
        %v1787 = vadd.f32 0.0, %v1786
        %v1788 = vpop.f32.mrb[0].mxu0
        %1789 = vmatprep.mubr.f32.mxu0 %v311
        %1790 = vmatmul.mubr.f32.gmra.mrb[0].mxu0 %v310
        %v1791 = vpop.f32.mrb[0].mxu0
        %v1792 = vadd.f32 0.0, %v1791
        %v1793 = vpop.f32.mrb[0].mxu0
        %1794 = vmatprep.mubr.f32.mxu0 %v313
        %1795 = vmatmul.mubr.f32.gmra.mrb[0].mxu0 %v312
        %v1796 = vpop.f32.mrb[0].mxu0
        %v1797 = vadd.f32 0.0, %v1796
        %v1798 = vpop.f32.mrb[0].mxu0
        %1799 = vmatprep.mubr.f32.mxu0 %v315
        %1800 = vmatmul.mubr.f32.gmra.mrb[0].mxu0 %v314
        %v1801 = vpop.f32.mrb[0].mxu0
        %v1802 = vadd.f32 0.0, %v1801
        %v1803 = vpop.f32.mrb[0].mxu0
        %1804 = vmatprep.mubr.f32.mxu0 %v317
        %1805 = vmatmul.mubr.f32.gmra.mrb[0].mxu0 %v316
        %v1806 = vpop.f32.mrb[0].mxu0
        %v1807 = vadd.f32 0.0, %v1806
        %v1808 = vpop.f32.mrb[0].mxu0
        %1809 = vmatprep.mubr.f32.mxu0 %v319
        %1810 = vmatmul.mubr.f32.gmra.mrb[0].mxu0 %v318
        %v1811 = vpop.f32.mrb[0].mxu0
        %v1812 = vadd.f32 0.0, %v1811
        %v1813 = vpop.f32.mrb[0].mxu0
        %1814 = vmatprep.mubr.f32.mxu0 %v321
        %1815 = vmatmul.mubr.f32.gmra.mrb[0].mxu0 %v320
        %v1816 = vpop.f32.mrb[0].mxu0
        %v1817 = vadd.f32 0.0, %v1816
        %v1818 = vpop.f32.mrb[0].mxu0
        %1819 = vmatprep.mubr.f32.mxu0 %v323
        %1820 = vmatmul.mubr.f32.gmra.mrb[0].mxu0 %v322
        %v1821 = vpop.f32.mrb[0].mxu0
        %v1822 = vadd.f32 0.0, %v1821
        %v1823 = vpop.f32.mrb[0].mxu0
        %1824 = vmatprep.mubr.f32.mxu0 %v325
        %1825 = vmatmul.mubr.f32.gmra.mrb[0].mxu0 %v324
        %v1826 = vpop.f32.mrb[0].mxu0
        %v1827 = vadd.f32 0.0, %v1826
        %v1828 = vpop.f32.mrb[0].mxu0
        %1829 = vmatprep.mubr.f32.mxu0 %v327
        %1830 = vmatmul.mubr.f32.gmra.mrb[0].mxu0 %v326
        %v1831 = vpop.f32.mrb[0].mxu0
        %v1832 = vadd.f32 0.0, %v1831
        %v1833 = vpop.f32.mrb[0].mxu0
        %1834 = vmatprep.mubr.f32.mxu0 %v329
        %1835 = vmatmul.mubr.f32.gmra.mrb[0].mxu0 %v328
        %v1836 = vpop.f32.mrb[0].mxu0
        %v1837 = vadd.f32 0.0, %v1836
        %v1838 = vpop.f32.mrb[0].mxu0
        %1839 = vmatprep.mubr.f32.mxu0 %v331
        %1840 = vmatmul.mubr.f32.gmra.mrb[0].mxu0 %v330
        %v1841 = vpop.f32.mrb[0].mxu0
        %v1842 = vadd.f32 0.0, %v1841
        %v1843 = vpop.f32.mrb[0].mxu0
        %1844 = vmatprep.mubr.f32.mxu0 %v333
        %1845 = vmatmul.mubr.f32.gmra.mrb[0].mxu0 %v332
        %v1846 = vpop.f32.mrb[0].mxu0
        %v1847 = vadd.f32 0.0, %v1846
        %v1848 = vpop.f32.mrb[0].mxu0
        %1849 = vmatprep.mubr.f32.mxu0 %v335
        %1850 = vmatmul.mubr.f32.gmra.mrb[0].mxu0 %v334
        %v1851 = vpop.f32.mrb[0].mxu0
        %v1852 = vadd.f32 0.0, %v1851
        %v1853 = vpop.f32.mrb[0].mxu0
        %1854 = vmatprep.mubr.f32.mxu0 %v337
        %1855 = vmatmul.mubr.f32.gmra.mrb[0].mxu0 %v336
        %v1856 = vpop.f32.mrb[0].mxu0
        %v1857 = vadd.f32 0.0, %v1856
        %v1858 = vpop.f32.mrb[0].mxu0
        %1859 = vmatprep.mubr.f32.mxu0 %v339
        %1860 = vmatmul.mubr.f32.gmra.mrb[0].mxu0 %v338
        %v1861 = vpop.f32.mrb[0].mxu0
        %v1862 = vadd.f32 0.0, %v1861
        %v1863 = vpop.f32.mrb[0].mxu0
        %1864 = vmatprep.mubr.f32.mxu0 %v341
        %1865 = vmatmul.mubr.f32.gmra.mrb[0].mxu0 %v340
        %v1866 = vpop.f32.mrb[0].mxu0
        %v1867 = vadd.f32 0.0, %v1866
        %v1868 = vpop.f32.mrb[0].mxu0
        %1869 = vmatprep.mubr.f32.mxu0 %v343
        %1870 = vmatmul.mubr.f32.gmra.mrb[0].mxu0 %v342
        %v1871 = vpop.f32.mrb[0].mxu0
        %v1872 = vadd.f32 0.0, %v1871
        %v1873 = vpop.f32.mrb[0].mxu0
        %1874 = vmatprep.mubr.f32.mxu0 %v345
        %1875 = vmatmul.mubr.f32.gmra.mrb[0].mxu0 %v344
        %v1876 = vpop.f32.mrb[0].mxu0
        %v1877 = vadd.f32 0.0, %v1876
        %v1878 = vpop.f32.mrb[0].mxu0
        %1879 = vmatprep.mubr.f32.mxu0 %v347
        %1880 = vmatmul.mubr.f32.gmra.mrb[0].mxu0 %v346
        %v1881 = vpop.f32.mrb[0].mxu0
        %v1882 = vadd.f32 0.0, %v1881
        %v1883 = vpop.f32.mrb[0].mxu0
        %1884 = vmatprep.mubr.f32.mxu0 %v349
        %1885 = vmatmul.mubr.f32.gmra.mrb[0].mxu0 %v348
        %v1886 = vpop.f32.mrb[0].mxu0
        %v1887 = vadd.f32 0.0, %v1886
        %v1888 = vpop.f32.mrb[0].mxu0
        %1889 = vmatprep.mubr.f32.mxu0 %v351
        %1890 = vmatmul.mubr.f32.gmra.mrb[0].mxu0 %v350
        %v1891 = vpop.f32.mrb[0].mxu0
        %v1892 = vadd.f32 0.0, %v1891
        %v1893 = vpop.f32.mrb[0].mxu0
        %1894 = vdwg.mxu0
        %s1895 = scalar_lea.vmem %s220, 512
        %1896 = vst.msk [vmem:[%s1895] sm:$0xff] %vm1091, %v1577
        %1897 = vst.msk [vmem:[%s1895 + $0x8] sm:$0xff] %vm1091, %v1582
        %1898 = vst.msk [vmem:[%s1895 + $0x10] sm:$0xff] %vm1091, %v1587
        %1899 = vst.msk [vmem:[%s1895 + $0x18] sm:$0xff] %vm1091, %v1592
        %1900 = vst.msk [vmem:[%s1895 + $0x20] sm:$0xff] %vm1091, %v1597
        %1901 = vst.msk [vmem:[%s1895 + $0x28] sm:$0xff] %vm1091, %v1602
        %1902 = vst.msk [vmem:[%s1895 + $0x30] sm:$0xff] %vm1091, %v1607
        %1903 = vst.msk [vmem:[%s1895 + $0x38] sm:$0xff] %vm1091, %v1612
        %1904 = vst.msk [vmem:[%s1895 + $0x40] sm:$0xff] %vm1091, %v1617
        %1905 = vst.msk [vmem:[%s1895 + $0x48] sm:$0xff] %vm1091, %v1622
        %1906 = vst.msk [vmem:[%s1895 + $0x50] sm:$0xff] %vm1091, %v1627
        %1907 = vst.msk [vmem:[%s1895 + $0x58] sm:$0xff] %vm1091, %v1632
        %1908 = vst.msk [vmem:[%s1895 + $0x60] sm:$0xff] %vm1091, %v1637
        %1909 = vst.msk [vmem:[%s1895 + $0x68] sm:$0xff] %vm1091, %v1642
        %1910 = vst.msk [vmem:[%s1895 + $0x70] sm:$0xff] %vm1091, %v1647
        %1911 = vst.msk [vmem:[%s1895 + $0x78] sm:$0xff] %vm1091, %v1652
        %1912 = vst.msk [vmem:[%s1895 + $0x80] sm:$0xff] %vm1091, %v1657
        %1913 = vst.msk [vmem:[%s1895 + $0x88] sm:$0xff] %vm1091, %v1662
        %1914 = vst.msk [vmem:[%s1895 + $0x90] sm:$0xff] %vm1091, %v1667
        %1915 = vst.msk [vmem:[%s1895 + $0x98] sm:$0xff] %vm1091, %v1672
        %1916 = vst.msk [vmem:[%s1895 + $0xa0] sm:$0xff] %vm1091, %v1677
        %1917 = vst.msk [vmem:[%s1895 + $0xa8] sm:$0xff] %vm1091, %v1682
        %1918 = vst.msk [vmem:[%s1895 + $0xb0] sm:$0xff] %vm1091, %v1687
        %1919 = vst.msk [vmem:[%s1895 + $0xb8] sm:$0xff] %vm1091, %v1692
        %1920 = vst.msk [vmem:[%s1895 + $0xc0] sm:$0xff] %vm1091, %v1697
        %1921 = vst.msk [vmem:[%s1895 + $0xc8] sm:$0xff] %vm1091, %v1702
        %1922 = vst.msk [vmem:[%s1895 + $0xd0] sm:$0xff] %vm1091, %v1707
        %1923 = vst.msk [vmem:[%s1895 + $0xd8] sm:$0xff] %vm1091, %v1712
        %1924 = vst.msk [vmem:[%s1895 + $0xe0] sm:$0xff] %vm1091, %v1717
        %1925 = vst.msk [vmem:[%s1895 + $0xe8] sm:$0xff] %vm1091, %v1722
        %1926 = vst.msk [vmem:[%s1895 + $0xf0] sm:$0xff] %vm1091, %v1727
        %1927 = vst.msk [vmem:[%s1895 + $0xf8] sm:$0xff] %vm1091, %v1732
        %1928 = vst.msk [vmem:[%s1895 + $0x100] sm:$0xff] %vm1091, %v1737
        %1929 = vst.msk [vmem:[%s1895 + $0x108] sm:$0xff] %vm1091, %v1742
        %1930 = vst.msk [vmem:[%s1895 + $0x110] sm:$0xff] %vm1091, %v1747
        %1931 = vst.msk [vmem:[%s1895 + $0x118] sm:$0xff] %vm1091, %v1752
        %1932 = vst.msk [vmem:[%s1895 + $0x120] sm:$0xff] %vm1091, %v1757
        %1933 = vst.msk [vmem:[%s1895 + $0x128] sm:$0xff] %vm1091, %v1762
        %1934 = vst.msk [vmem:[%s1895 + $0x130] sm:$0xff] %vm1091, %v1767
        %1935 = vst.msk [vmem:[%s1895 + $0x138] sm:$0xff] %vm1091, %v1772
        %1936 = vst.msk [vmem:[%s1895 + $0x140] sm:$0xff] %vm1091, %v1777
        %1937 = vst.msk [vmem:[%s1895 + $0x148] sm:$0xff] %vm1091, %v1782
        %1938 = vst.msk [vmem:[%s1895 + $0x150] sm:$0xff] %vm1091, %v1787
        %1939 = vst.msk [vmem:[%s1895 + $0x158] sm:$0xff] %vm1091, %v1792
        %1940 = vst.msk [vmem:[%s1895 + $0x160] sm:$0xff] %vm1091, %v1797
        %1941 = vst.msk [vmem:[%s1895 + $0x168] sm:$0xff] %vm1091, %v1802
        %1942 = vst.msk [vmem:[%s1895 + $0x170] sm:$0xff] %vm1091, %v1807
        %1943 = vst.msk [vmem:[%s1895 + $0x178] sm:$0xff] %vm1091, %v1812
        %1944 = vst.msk [vmem:[%s1895 + $0x180] sm:$0xff] %vm1091, %v1817
        %1945 = vst.msk [vmem:[%s1895 + $0x188] sm:$0xff] %vm1091, %v1822
        %1946 = vst.msk [vmem:[%s1895 + $0x190] sm:$0xff] %vm1091, %v1827
        %1947 = vst.msk [vmem:[%s1895 + $0x198] sm:$0xff] %vm1091, %v1832
        %1948 = vst.msk [vmem:[%s1895 + $0x1a0] sm:$0xff] %vm1091, %v1837
        %1949 = vst.msk [vmem:[%s1895 + $0x1a8] sm:$0xff] %vm1091, %v1842
        %1950 = vst.msk [vmem:[%s1895 + $0x1b0] sm:$0xff] %vm1091, %v1847
        %1951 = vst.msk [vmem:[%s1895 + $0x1b8] sm:$0xff] %vm1091, %v1852
        %1952 = vst.msk [vmem:[%s1895 + $0x1c0] sm:$0xff] %vm1091, %v1857
        %1953 = vst.msk [vmem:[%s1895 + $0x1c8] sm:$0xff] %vm1091, %v1862
        %1954 = vst.msk [vmem:[%s1895 + $0x1d0] sm:$0xff] %vm1091, %v1867
        %1955 = vst.msk [vmem:[%s1895 + $0x1d8] sm:$0xff] %vm1091, %v1872
        %1956 = vst.msk [vmem:[%s1895 + $0x1e0] sm:$0xff] %vm1091, %v1877
        %1957 = vst.msk [vmem:[%s1895 + $0x1e8] sm:$0xff] %vm1091, %v1882
        %1958 = vst.msk [vmem:[%s1895 + $0x1f0] sm:$0xff] %vm1091, %v1887
        %1959 = vst.msk [vmem:[%s1895 + $0x1f8] sm:$0xff] %vm1091, %v1892
        %s1960 = scalar_lea.vmem %s184, 512 [#allocation2]
        %v1961 = vld [vmem:[%s1960] sm:$0xff]
        %v1962 = vld [vmem:[%s1960 + $0x8] sm:$0xff]
        %v1963 = vld [vmem:[%s1960 + $0x10] sm:$0xff]
        %v1964 = vld [vmem:[%s1960 + $0x18] sm:$0xff]
        %v1965 = vld [vmem:[%s1960 + $0x20] sm:$0xff]
        %v1966 = vld [vmem:[%s1960 + $0x28] sm:$0xff]
        %v1967 = vld [vmem:[%s1960 + $0x30] sm:$0xff]
        %v1968 = vld [vmem:[%s1960 + $0x38] sm:$0xff]
        %v1969 = vld [vmem:[%s1960 + $0x40] sm:$0xff]
        %v1970 = vld [vmem:[%s1960 + $0x48] sm:$0xff]
        %v1971 = vld [vmem:[%s1960 + $0x50] sm:$0xff]
        %v1972 = vld [vmem:[%s1960 + $0x58] sm:$0xff]
        %v1973 = vld [vmem:[%s1960 + $0x60] sm:$0xff]
        %v1974 = vld [vmem:[%s1960 + $0x68] sm:$0xff]
        %v1975 = vld [vmem:[%s1960 + $0x70] sm:$0xff]
        %v1976 = vld [vmem:[%s1960 + $0x78] sm:$0xff]
        %v1977 = vld [vmem:[%s1960 + $0x80] sm:$0xff]
        %v1978 = vld [vmem:[%s1960 + $0x88] sm:$0xff]
        %v1979 = vld [vmem:[%s1960 + $0x90] sm:$0xff]
        %v1980 = vld [vmem:[%s1960 + $0x98] sm:$0xff]
        %v1981 = vld [vmem:[%s1960 + $0xa0] sm:$0xff]
        %v1982 = vld [vmem:[%s1960 + $0xa8] sm:$0xff]
        %v1983 = vld [vmem:[%s1960 + $0xb0] sm:$0xff]
        %v1984 = vld [vmem:[%s1960 + $0xb8] sm:$0xff]
        %v1985 = vld [vmem:[%s1960 + $0xc0] sm:$0xff]
        %v1986 = vld [vmem:[%s1960 + $0xc8] sm:$0xff]
        %v1987 = vld [vmem:[%s1960 + $0xd0] sm:$0xff]
        %v1988 = vld [vmem:[%s1960 + $0xd8] sm:$0xff]
        %v1989 = vld [vmem:[%s1960 + $0xe0] sm:$0xff]
        %v1990 = vld [vmem:[%s1960 + $0xe8] sm:$0xff]
        %v1991 = vld [vmem:[%s1960 + $0xf0] sm:$0xff]
        %v1992 = vld [vmem:[%s1960 + $0xf8] sm:$0xff]
        %v1994 = vsel %vm384, %v1961, 0
        %v1997 = vsel %vm384, %v1962, 0
        %v2000 = vsel %vm384, %v1963, 0
        %v2003 = vsel %vm384, %v1964, 0
        %v2006 = vsel %vm384, %v1965, 0
        %v2009 = vsel %vm384, %v1966, 0
        %v2012 = vsel %vm384, %v1967, 0
        %v2015 = vsel %vm384, %v1968, 0
        %v2018 = vsel %vm384, %v1969, 0
        %v2021 = vsel %vm384, %v1970, 0
        %v2024 = vsel %vm384, %v1971, 0
        %v2027 = vsel %vm384, %v1972, 0
        %v2030 = vsel %vm384, %v1973, 0
        %v2033 = vsel %vm384, %v1974, 0
        %v2036 = vsel %vm384, %v1975, 0
        %v2039 = vsel %vm384, %v1976, 0
        %v2042 = vsel %vm384, %v1977, 0
        %v2045 = vsel %vm384, %v1978, 0
        %v2048 = vsel %vm384, %v1979, 0
        %v2051 = vsel %vm384, %v1980, 0
        %v2054 = vsel %vm384, %v1981, 0
        %v2057 = vsel %vm384, %v1982, 0
        %v2060 = vsel %vm384, %v1983, 0
        %v2063 = vsel %vm384, %v1984, 0
        %v2066 = vsel %vm384, %v1985, 0
        %v2069 = vsel %vm384, %v1986, 0
        %v2072 = vsel %vm384, %v1987, 0
        %v2075 = vsel %vm384, %v1988, 0
        %v2078 = vsel %vm384, %v1989, 0
        %v2081 = vsel %vm384, %v1990, 0
        %v2084 = vsel %vm384, %v1991, 0
        %v2087 = vsel %vm384, %v1992, 0
        %2089 = vmatprep.subr.mxu0 0.0
        %2090 = vmatpush1.msra.mxu0 %v222
        %2091 = vmatprep.subr.mxu0 0.0
        %2092 = vmatpush1.msra.mxu0 %v223
        %2093 = vmatprep.subr.mxu0 0.0
        %2094 = vmatpush1.msra.mxu0 0.0
        %2095 = vmatprep.subr.mxu0 0.0
        %2096 = vmatpush1.msra.mxu0 0.0
        %2097 = vmatprep.subr.mxu0 0.0
        %2098 = vmatpush1.msra.mxu0 0.0
        %2099 = vmatprep.subr.mxu0 0.0
        %2100 = vmatpush1.msra.mxu0 0.0
        %2101 = vmatprep.subr.mxu0 0.0
        %2102 = vmatpush1.msra.mxu0 0.0
        %2103 = vmatprep.subr.mxu0 0.0
        %2104 = vmatpush1.msra.mxu0 0.0
        %2105 = vmatprep.subr.mxu0 0.0
        %2106 = vmatpush1.msra.mxu0 0.0
        %2107 = vmatprep.subr.mxu0 0.0
        %2108 = vmatpush1.msra.mxu0 0.0
        %2109 = vmatprep.subr.mxu0 0.0
        %2110 = vmatpush1.msra.mxu0 0.0
        %2111 = vmatprep.subr.mxu0 0.0
        %2112 = vmatpush1.msra.mxu0 0.0
        %2113 = vmatprep.subr.mxu0 0.0
        %2114 = vmatpush1.msra.mxu0 0.0
        %2115 = vmatprep.subr.mxu0 0.0
        %2116 = vmatpush1.msra.mxu0 0.0
        %2117 = vmatprep.subr.mxu0 0.0
        %2118 = vmatpush1.msra.mxu0 0.0
        %2119 = vmatprep.subr.mxu0 0.0
        %2120 = vmatpush1.msra.mxu0 0.0
        %2121 = vmatprep.subr.mxu0 0.0
        %2122 = vmatpush1.msra.mxu0 0.0
        %2123 = vmatprep.subr.mxu0 0.0
        %2124 = vmatpush1.msra.mxu0 0.0
        %2125 = vmatprep.subr.mxu0 0.0
        %2126 = vmatpush1.msra.mxu0 0.0
        %2127 = vmatprep.subr.mxu0 0.0
        %2128 = vmatpush1.msra.mxu0 0.0
        %2129 = vmatprep.subr.mxu0 0.0
        %2130 = vmatpush1.msra.mxu0 0.0
        %2131 = vmatprep.subr.mxu0 0.0
        %2132 = vmatpush1.msra.mxu0 0.0
        %2133 = vmatprep.subr.mxu0 0.0
        %2134 = vmatpush1.msra.mxu0 0.0
        %2135 = vmatprep.subr.mxu0 0.0
        %2136 = vmatpush1.msra.mxu0 0.0
        %2137 = vmatprep.subr.mxu0 0.0
        %2138 = vmatpush1.msra.mxu0 0.0
        %2139 = vmatprep.subr.mxu0 0.0
        %2140 = vmatpush1.msra.mxu0 0.0
        %2141 = vmatprep.subr.mxu0 0.0
        %2142 = vmatpush1.msra.mxu0 0.0
        %2143 = vmatprep.subr.mxu0 0.0
        %2144 = vmatpush1.msra.mxu0 0.0
        %2145 = vmatprep.subr.mxu0 0.0
        %2146 = vmatpush1.msra.mxu0 0.0
        %2147 = vmatprep.subr.mxu0 0.0
        %2148 = vmatpush1.msra.mxu0 0.0
        %2149 = vmatprep.subr.mxu0 0.0
        %2150 = vmatpush1.msra.mxu0 0.0
        %2151 = vmatprep.subr.mxu0 0.0
        %2152 = vmatpush1.msra.mxu0 0.0
        %2153 = vmatprep.mubr.f32.mxu0 0.0
        %2154 = vmatmul.mubr.f32.gmra.mrb[0].mxu0 %v1994
        %v2155 = vpop.f32.mrb[0].mxu0
        %v2156 = vadd.f32 0.0, %v2155
        %v2157 = vpop.f32.mrb[0].mxu0
        %2158 = vmatprep.mubr.f32.mxu0 0.0
        %2159 = vmatmul.mubr.f32.gmra.mrb[0].mxu0 %v1997
        %v2160 = vpop.f32.mrb[0].mxu0
        %v2161 = vadd.f32 0.0, %v2160
        %v2162 = vpop.f32.mrb[0].mxu0
        %2163 = vmatprep.mubr.f32.mxu0 0.0
        %2164 = vmatmul.mubr.f32.gmra.mrb[0].mxu0 %v2000
        %v2165 = vpop.f32.mrb[0].mxu0
        %v2166 = vadd.f32 0.0, %v2165
        %v2167 = vpop.f32.mrb[0].mxu0
        %2168 = vmatprep.mubr.f32.mxu0 0.0
        %2169 = vmatmul.mubr.f32.gmra.mrb[0].mxu0 %v2003
        %v2170 = vpop.f32.mrb[0].mxu0
        %v2171 = vadd.f32 0.0, %v2170
        %v2172 = vpop.f32.mrb[0].mxu0
        %2173 = vmatprep.mubr.f32.mxu0 0.0
        %2174 = vmatmul.mubr.f32.gmra.mrb[0].mxu0 %v2006
        %v2175 = vpop.f32.mrb[0].mxu0
        %v2176 = vadd.f32 0.0, %v2175
        %v2177 = vpop.f32.mrb[0].mxu0
        %2178 = vmatprep.mubr.f32.mxu0 0.0
        %2179 = vmatmul.mubr.f32.gmra.mrb[0].mxu0 %v2009
        %v2180 = vpop.f32.mrb[0].mxu0
        %v2181 = vadd.f32 0.0, %v2180
        %v2182 = vpop.f32.mrb[0].mxu0
        %2183 = vmatprep.mubr.f32.mxu0 0.0
        %2184 = vmatmul.mubr.f32.gmra.mrb[0].mxu0 %v2012
        %v2185 = vpop.f32.mrb[0].mxu0
        %v2186 = vadd.f32 0.0, %v2185
        %v2187 = vpop.f32.mrb[0].mxu0
        %2188 = vmatprep.mubr.f32.mxu0 0.0
        %2189 = vmatmul.mubr.f32.gmra.mrb[0].mxu0 %v2015
        %v2190 = vpop.f32.mrb[0].mxu0
        %v2191 = vadd.f32 0.0, %v2190
        %v2192 = vpop.f32.mrb[0].mxu0
        %2193 = vmatprep.mubr.f32.mxu0 0.0
        %2194 = vmatmul.mubr.f32.gmra.mrb[0].mxu0 %v2018
        %v2195 = vpop.f32.mrb[0].mxu0
        %v2196 = vadd.f32 0.0, %v2195
        %v2197 = vpop.f32.mrb[0].mxu0
        %2198 = vmatprep.mubr.f32.mxu0 0.0
        %2199 = vmatmul.mubr.f32.gmra.mrb[0].mxu0 %v2021
        %v2200 = vpop.f32.mrb[0].mxu0
        %v2201 = vadd.f32 0.0, %v2200
        %v2202 = vpop.f32.mrb[0].mxu0
        %2203 = vmatprep.mubr.f32.mxu0 0.0
        %2204 = vmatmul.mubr.f32.gmra.mrb[0].mxu0 %v2024
        %v2205 = vpop.f32.mrb[0].mxu0
        %v2206 = vadd.f32 0.0, %v2205
        %v2207 = vpop.f32.mrb[0].mxu0
        %2208 = vmatprep.mubr.f32.mxu0 0.0
        %2209 = vmatmul.mubr.f32.gmra.mrb[0].mxu0 %v2027
        %v2210 = vpop.f32.mrb[0].mxu0
        %v2211 = vadd.f32 0.0, %v2210
        %v2212 = vpop.f32.mrb[0].mxu0
        %2213 = vmatprep.mubr.f32.mxu0 0.0
        %2214 = vmatmul.mubr.f32.gmra.mrb[0].mxu0 %v2030
        %v2215 = vpop.f32.mrb[0].mxu0
        %v2216 = vadd.f32 0.0, %v2215
        %v2217 = vpop.f32.mrb[0].mxu0
        %2218 = vmatprep.mubr.f32.mxu0 0.0
        %2219 = vmatmul.mubr.f32.gmra.mrb[0].mxu0 %v2033
        %v2220 = vpop.f32.mrb[0].mxu0
        %v2221 = vadd.f32 0.0, %v2220
        %v2222 = vpop.f32.mrb[0].mxu0
        %2223 = vmatprep.mubr.f32.mxu0 0.0
        %2224 = vmatmul.mubr.f32.gmra.mrb[0].mxu0 %v2036
        %v2225 = vpop.f32.mrb[0].mxu0
        %v2226 = vadd.f32 0.0, %v2225
        %v2227 = vpop.f32.mrb[0].mxu0
        %2228 = vmatprep.mubr.f32.mxu0 0.0
        %2229 = vmatmul.mubr.f32.gmra.mrb[0].mxu0 %v2039
        %v2230 = vpop.f32.mrb[0].mxu0
        %v2231 = vadd.f32 0.0, %v2230
        %v2232 = vpop.f32.mrb[0].mxu0
        %2233 = vmatprep.mubr.f32.mxu0 0.0
        %2234 = vmatmul.mubr.f32.gmra.mrb[0].mxu0 %v2042
        %v2235 = vpop.f32.mrb[0].mxu0
        %v2236 = vadd.f32 0.0, %v2235
        %v2237 = vpop.f32.mrb[0].mxu0
        %2238 = vmatprep.mubr.f32.mxu0 0.0
        %2239 = vmatmul.mubr.f32.gmra.mrb[0].mxu0 %v2045
        %v2240 = vpop.f32.mrb[0].mxu0
        %v2241 = vadd.f32 0.0, %v2240
        %v2242 = vpop.f32.mrb[0].mxu0
        %2243 = vmatprep.mubr.f32.mxu0 0.0
        %2244 = vmatmul.mubr.f32.gmra.mrb[0].mxu0 %v2048
        %v2245 = vpop.f32.mrb[0].mxu0
        %v2246 = vadd.f32 0.0, %v2245
        %v2247 = vpop.f32.mrb[0].mxu0
        %2248 = vmatprep.mubr.f32.mxu0 0.0
        %2249 = vmatmul.mubr.f32.gmra.mrb[0].mxu0 %v2051
        %v2250 = vpop.f32.mrb[0].mxu0
        %v2251 = vadd.f32 0.0, %v2250
        %v2252 = vpop.f32.mrb[0].mxu0
        %2253 = vmatprep.mubr.f32.mxu0 0.0
        %2254 = vmatmul.mubr.f32.gmra.mrb[0].mxu0 %v2054
        %v2255 = vpop.f32.mrb[0].mxu0
        %v2256 = vadd.f32 0.0, %v2255
        %v2257 = vpop.f32.mrb[0].mxu0
        %2258 = vmatprep.mubr.f32.mxu0 0.0
        %2259 = vmatmul.mubr.f32.gmra.mrb[0].mxu0 %v2057
        %v2260 = vpop.f32.mrb[0].mxu0
        %v2261 = vadd.f32 0.0, %v2260
        %v2262 = vpop.f32.mrb[0].mxu0
        %2263 = vmatprep.mubr.f32.mxu0 0.0
        %2264 = vmatmul.mubr.f32.gmra.mrb[0].mxu0 %v2060
        %v2265 = vpop.f32.mrb[0].mxu0
        %v2266 = vadd.f32 0.0, %v2265
        %v2267 = vpop.f32.mrb[0].mxu0
        %2268 = vmatprep.mubr.f32.mxu0 0.0
        %2269 = vmatmul.mubr.f32.gmra.mrb[0].mxu0 %v2063
        %v2270 = vpop.f32.mrb[0].mxu0
        %v2271 = vadd.f32 0.0, %v2270
        %v2272 = vpop.f32.mrb[0].mxu0
        %2273 = vmatprep.mubr.f32.mxu0 0.0
        %2274 = vmatmul.mubr.f32.gmra.mrb[0].mxu0 %v2066
        %v2275 = vpop.f32.mrb[0].mxu0
        %v2276 = vadd.f32 0.0, %v2275
        %v2277 = vpop.f32.mrb[0].mxu0
        %2278 = vmatprep.mubr.f32.mxu0 0.0
        %2279 = vmatmul.mubr.f32.gmra.mrb[0].mxu0 %v2069
        %v2280 = vpop.f32.mrb[0].mxu0
        %v2281 = vadd.f32 0.0, %v2280
        %v2282 = vpop.f32.mrb[0].mxu0
        %2283 = vmatprep.mubr.f32.mxu0 0.0
        %2284 = vmatmul.mubr.f32.gmra.mrb[0].mxu0 %v2072
        %v2285 = vpop.f32.mrb[0].mxu0
        %v2286 = vadd.f32 0.0, %v2285
        %v2287 = vpop.f32.mrb[0].mxu0
        %2288 = vmatprep.mubr.f32.mxu0 0.0
        %2289 = vmatmul.mubr.f32.gmra.mrb[0].mxu0 %v2075
        %v2290 = vpop.f32.mrb[0].mxu0
        %v2291 = vadd.f32 0.0, %v2290
        %v2292 = vpop.f32.mrb[0].mxu0
        %2293 = vmatprep.mubr.f32.mxu0 0.0
        %2294 = vmatmul.mubr.f32.gmra.mrb[0].mxu0 %v2078
        %v2295 = vpop.f32.mrb[0].mxu0
        %v2296 = vadd.f32 0.0, %v2295
        %v2297 = vpop.f32.mrb[0].mxu0
        %2298 = vmatprep.mubr.f32.mxu0 0.0
        %2299 = vmatmul.mubr.f32.gmra.mrb[0].mxu0 %v2081
        %v2300 = vpop.f32.mrb[0].mxu0
        %v2301 = vadd.f32 0.0, %v2300
        %v2302 = vpop.f32.mrb[0].mxu0
        %2303 = vmatprep.mubr.f32.mxu0 0.0
        %2304 = vmatmul.mubr.f32.gmra.mrb[0].mxu0 %v2084
        %v2305 = vpop.f32.mrb[0].mxu0
        %v2306 = vadd.f32 0.0, %v2305
        %v2307 = vpop.f32.mrb[0].mxu0
        %2308 = vmatprep.mubr.f32.mxu0 0.0
        %2309 = vmatmul.mubr.f32.gmra.mrb[0].mxu0 %v2087
        %v2310 = vpop.f32.mrb[0].mxu0
        %v2311 = vadd.f32 0.0, %v2310
        %v2312 = vpop.f32.mrb[0].mxu0
        %2313 = vdwg.mxu0
        %2314 = vmatprep.subr.mxu0 0.0
        %2315 = vmatpush1.msra.mxu0 %v2156
        %2316 = vmatprep.subr.mxu0 0.0
        %2317 = vmatpush1.msra.mxu0 %v2161
        %2318 = vmatprep.subr.mxu0 0.0
        %2319 = vmatpush1.msra.mxu0 %v2166
        %2320 = vmatprep.subr.mxu0 0.0
        %2321 = vmatpush1.msra.mxu0 %v2171
        %2322 = vmatprep.subr.mxu0 0.0
        %2323 = vmatpush1.msra.mxu0 %v2176
        %2324 = vmatprep.subr.mxu0 0.0
        %2325 = vmatpush1.msra.mxu0 %v2181
        %2326 = vmatprep.subr.mxu0 0.0
        %2327 = vmatpush1.msra.mxu0 %v2186
        %2328 = vmatprep.subr.mxu0 0.0
        %2329 = vmatpush1.msra.mxu0 %v2191
        %2330 = vmatprep.subr.mxu0 0.0
        %2331 = vmatpush1.msra.mxu0 %v2196
        %2332 = vmatprep.subr.mxu0 0.0
        %2333 = vmatpush1.msra.mxu0 %v2201
        %2334 = vmatprep.subr.mxu0 0.0
        %2335 = vmatpush1.msra.mxu0 %v2206
        %2336 = vmatprep.subr.mxu0 0.0
        %2337 = vmatpush1.msra.mxu0 %v2211
        %2338 = vmatprep.subr.mxu0 0.0
        %2339 = vmatpush1.msra.mxu0 %v2216
        %2340 = vmatprep.subr.mxu0 0.0
        %2341 = vmatpush1.msra.mxu0 %v2221
        %2342 = vmatprep.subr.mxu0 0.0
        %2343 = vmatpush1.msra.mxu0 %v2226
        %2344 = vmatprep.subr.mxu0 0.0
        %2345 = vmatpush1.msra.mxu0 %v2231
        %2346 = vmatprep.subr.mxu0 0.0
        %2347 = vmatpush1.msra.mxu0 %v2236
        %2348 = vmatprep.subr.mxu0 0.0
        %2349 = vmatpush1.msra.mxu0 %v2241
        %2350 = vmatprep.subr.mxu0 0.0
        %2351 = vmatpush1.msra.mxu0 %v2246
        %2352 = vmatprep.subr.mxu0 0.0
        %2353 = vmatpush1.msra.mxu0 %v2251
        %2354 = vmatprep.subr.mxu0 0.0
        %2355 = vmatpush1.msra.mxu0 %v2256
        %2356 = vmatprep.subr.mxu0 0.0
        %2357 = vmatpush1.msra.mxu0 %v2261
        %2358 = vmatprep.subr.mxu0 0.0
        %2359 = vmatpush1.msra.mxu0 %v2266
        %2360 = vmatprep.subr.mxu0 0.0
        %2361 = vmatpush1.msra.mxu0 %v2271
        %2362 = vmatprep.subr.mxu0 0.0
        %2363 = vmatpush1.msra.mxu0 %v2276
        %2364 = vmatprep.subr.mxu0 0.0
        %2365 = vmatpush1.msra.mxu0 %v2281
        %2366 = vmatprep.subr.mxu0 0.0
        %2367 = vmatpush1.msra.mxu0 %v2286
        %2368 = vmatprep.subr.mxu0 0.0
        %2369 = vmatpush1.msra.mxu0 %v2291
        %2370 = vmatprep.subr.mxu0 0.0
        %2371 = vmatpush1.msra.mxu0 %v2296
        %2372 = vmatprep.subr.mxu0 0.0
        %2373 = vmatpush1.msra.mxu0 %v2301
        %2374 = vmatprep.subr.mxu0 0.0
        %2375 = vmatpush1.msra.mxu0 %v2306
        %2376 = vmatprep.subr.mxu0 0.0
        %2377 = vmatpush1.msra.mxu0 %v2311
        %2378 = vmatprep.mubr.f32.mxu0 %v225
        %2379 = vmatmul.mubr.f32.gmra.mrb[0].mxu0 %v224
        %v2380 = vpop.f32.mrb[0].mxu0
        %v2381 = vadd.f32 0.0, %v2380
        %v2382 = vpop.f32.mrb[0].mxu0
        %2383 = vmatprep.mubr.f32.mxu0 %v227
        %2384 = vmatmul.mubr.f32.gmra.mrb[0].mxu0 %v226
        %v2385 = vpop.f32.mrb[0].mxu0
        %v2386 = vadd.f32 0.0, %v2385
        %v2387 = vpop.f32.mrb[0].mxu0
        %2388 = vmatprep.mubr.f32.mxu0 %v229
        %2389 = vmatmul.mubr.f32.gmra.mrb[0].mxu0 %v228
        %v2390 = vpop.f32.mrb[0].mxu0
        %v2391 = vadd.f32 0.0, %v2390
        %v2392 = vpop.f32.mrb[0].mxu0
        %2393 = vmatprep.mubr.f32.mxu0 %v231
        %2394 = vmatmul.mubr.f32.gmra.mrb[0].mxu0 %v230
        %v2395 = vpop.f32.mrb[0].mxu0
        %v2396 = vadd.f32 0.0, %v2395
        %v2397 = vpop.f32.mrb[0].mxu0
        %2398 = vmatprep.mubr.f32.mxu0 %v233
        %2399 = vmatmul.mubr.f32.gmra.mrb[0].mxu0 %v232
        %v2400 = vpop.f32.mrb[0].mxu0
        %v2401 = vadd.f32 0.0, %v2400
        %v2402 = vpop.f32.mrb[0].mxu0
        %2403 = vmatprep.mubr.f32.mxu0 %v235
        %2404 = vmatmul.mubr.f32.gmra.mrb[0].mxu0 %v234
        %v2405 = vpop.f32.mrb[0].mxu0
        %v2406 = vadd.f32 0.0, %v2405
        %v2407 = vpop.f32.mrb[0].mxu0
        %2408 = vmatprep.mubr.f32.mxu0 %v237
        %2409 = vmatmul.mubr.f32.gmra.mrb[0].mxu0 %v236
        %v2410 = vpop.f32.mrb[0].mxu0
        %v2411 = vadd.f32 0.0, %v2410
        %v2412 = vpop.f32.mrb[0].mxu0
        %2413 = vmatprep.mubr.f32.mxu0 %v239
        %2414 = vmatmul.mubr.f32.gmra.mrb[0].mxu0 %v238
        %v2415 = vpop.f32.mrb[0].mxu0
        %v2416 = vadd.f32 0.0, %v2415
        %v2417 = vpop.f32.mrb[0].mxu0
        %2418 = vmatprep.mubr.f32.mxu0 %v241
        %2419 = vmatmul.mubr.f32.gmra.mrb[0].mxu0 %v240
        %v2420 = vpop.f32.mrb[0].mxu0
        %v2421 = vadd.f32 0.0, %v2420
        %v2422 = vpop.f32.mrb[0].mxu0
        %2423 = vmatprep.mubr.f32.mxu0 %v243
        %2424 = vmatmul.mubr.f32.gmra.mrb[0].mxu0 %v242
        %v2425 = vpop.f32.mrb[0].mxu0
        %v2426 = vadd.f32 0.0, %v2425
        %v2427 = vpop.f32.mrb[0].mxu0
        %2428 = vmatprep.mubr.f32.mxu0 %v245
        %2429 = vmatmul.mubr.f32.gmra.mrb[0].mxu0 %v244
        %v2430 = vpop.f32.mrb[0].mxu0
        %v2431 = vadd.f32 0.0, %v2430
        %v2432 = vpop.f32.mrb[0].mxu0
        %2433 = vmatprep.mubr.f32.mxu0 %v247
        %2434 = vmatmul.mubr.f32.gmra.mrb[0].mxu0 %v246
        %v2435 = vpop.f32.mrb[0].mxu0
        %v2436 = vadd.f32 0.0, %v2435
        %v2437 = vpop.f32.mrb[0].mxu0
        %2438 = vmatprep.mubr.f32.mxu0 %v249
        %2439 = vmatmul.mubr.f32.gmra.mrb[0].mxu0 %v248
        %v2440 = vpop.f32.mrb[0].mxu0
        %v2441 = vadd.f32 0.0, %v2440
        %v2442 = vpop.f32.mrb[0].mxu0
        %2443 = vmatprep.mubr.f32.mxu0 %v251
        %2444 = vmatmul.mubr.f32.gmra.mrb[0].mxu0 %v250
        %v2445 = vpop.f32.mrb[0].mxu0
        %v2446 = vadd.f32 0.0, %v2445
        %v2447 = vpop.f32.mrb[0].mxu0
        %2448 = vmatprep.mubr.f32.mxu0 %v253
        %2449 = vmatmul.mubr.f32.gmra.mrb[0].mxu0 %v252
        %v2450 = vpop.f32.mrb[0].mxu0
        %v2451 = vadd.f32 0.0, %v2450
        %v2452 = vpop.f32.mrb[0].mxu0
        %2453 = vmatprep.mubr.f32.mxu0 %v255
        %2454 = vmatmul.mubr.f32.gmra.mrb[0].mxu0 %v254
        %v2455 = vpop.f32.mrb[0].mxu0
        %v2456 = vadd.f32 0.0, %v2455
        %v2457 = vpop.f32.mrb[0].mxu0
        %2458 = vmatprep.mubr.f32.mxu0 %v257
        %2459 = vmatmul.mubr.f32.gmra.mrb[0].mxu0 %v256
        %v2460 = vpop.f32.mrb[0].mxu0
        %v2461 = vadd.f32 0.0, %v2460
        %v2462 = vpop.f32.mrb[0].mxu0
        %2463 = vmatprep.mubr.f32.mxu0 %v259
        %2464 = vmatmul.mubr.f32.gmra.mrb[0].mxu0 %v258
        %v2465 = vpop.f32.mrb[0].mxu0
        %v2466 = vadd.f32 0.0, %v2465
        %v2467 = vpop.f32.mrb[0].mxu0
        %2468 = vmatprep.mubr.f32.mxu0 %v261
        %2469 = vmatmul.mubr.f32.gmra.mrb[0].mxu0 %v260
        %v2470 = vpop.f32.mrb[0].mxu0
        %v2471 = vadd.f32 0.0, %v2470
        %v2472 = vpop.f32.mrb[0].mxu0
        %2473 = vmatprep.mubr.f32.mxu0 %v263
        %2474 = vmatmul.mubr.f32.gmra.mrb[0].mxu0 %v262
        %v2475 = vpop.f32.mrb[0].mxu0
        %v2476 = vadd.f32 0.0, %v2475
        %v2477 = vpop.f32.mrb[0].mxu0
        %2478 = vmatprep.mubr.f32.mxu0 %v265
        %2479 = vmatmul.mubr.f32.gmra.mrb[0].mxu0 %v264
        %v2480 = vpop.f32.mrb[0].mxu0
        %v2481 = vadd.f32 0.0, %v2480
        %v2482 = vpop.f32.mrb[0].mxu0
        %2483 = vmatprep.mubr.f32.mxu0 %v267
        %2484 = vmatmul.mubr.f32.gmra.mrb[0].mxu0 %v266
        %v2485 = vpop.f32.mrb[0].mxu0
        %v2486 = vadd.f32 0.0, %v2485
        %v2487 = vpop.f32.mrb[0].mxu0
        %2488 = vmatprep.mubr.f32.mxu0 %v269
        %2489 = vmatmul.mubr.f32.gmra.mrb[0].mxu0 %v268
        %v2490 = vpop.f32.mrb[0].mxu0
        %v2491 = vadd.f32 0.0, %v2490
        %v2492 = vpop.f32.mrb[0].mxu0
        %2493 = vmatprep.mubr.f32.mxu0 %v271
        %2494 = vmatmul.mubr.f32.gmra.mrb[0].mxu0 %v270
        %v2495 = vpop.f32.mrb[0].mxu0
        %v2496 = vadd.f32 0.0, %v2495
        %v2497 = vpop.f32.mrb[0].mxu0
        %2498 = vmatprep.mubr.f32.mxu0 %v273
        %2499 = vmatmul.mubr.f32.gmra.mrb[0].mxu0 %v272
        %v2500 = vpop.f32.mrb[0].mxu0
        %v2501 = vadd.f32 0.0, %v2500
        %v2502 = vpop.f32.mrb[0].mxu0
        %2503 = vmatprep.mubr.f32.mxu0 %v275
        %2504 = vmatmul.mubr.f32.gmra.mrb[0].mxu0 %v274
        %v2505 = vpop.f32.mrb[0].mxu0
        %v2506 = vadd.f32 0.0, %v2505
        %v2507 = vpop.f32.mrb[0].mxu0
        %2508 = vmatprep.mubr.f32.mxu0 %v277
        %2509 = vmatmul.mubr.f32.gmra.mrb[0].mxu0 %v276
        %v2510 = vpop.f32.mrb[0].mxu0
        %v2511 = vadd.f32 0.0, %v2510
        %v2512 = vpop.f32.mrb[0].mxu0
        %2513 = vmatprep.mubr.f32.mxu0 %v279
        %2514 = vmatmul.mubr.f32.gmra.mrb[0].mxu0 %v278
        %v2515 = vpop.f32.mrb[0].mxu0
        %v2516 = vadd.f32 0.0, %v2515
        %v2517 = vpop.f32.mrb[0].mxu0
        %2518 = vmatprep.mubr.f32.mxu0 %v281
        %2519 = vmatmul.mubr.f32.gmra.mrb[0].mxu0 %v280
        %v2520 = vpop.f32.mrb[0].mxu0
        %v2521 = vadd.f32 0.0, %v2520
        %v2522 = vpop.f32.mrb[0].mxu0
        %2523 = vmatprep.mubr.f32.mxu0 %v283
        %2524 = vmatmul.mubr.f32.gmra.mrb[0].mxu0 %v282
        %v2525 = vpop.f32.mrb[0].mxu0
        %v2526 = vadd.f32 0.0, %v2525
        %v2527 = vpop.f32.mrb[0].mxu0
        %2528 = vmatprep.mubr.f32.mxu0 %v285
        %2529 = vmatmul.mubr.f32.gmra.mrb[0].mxu0 %v284
        %v2530 = vpop.f32.mrb[0].mxu0
        %v2531 = vadd.f32 0.0, %v2530
        %v2532 = vpop.f32.mrb[0].mxu0
        %2533 = vmatprep.mubr.f32.mxu0 %v287
        %2534 = vmatmul.mubr.f32.gmra.mrb[0].mxu0 %v286
        %v2535 = vpop.f32.mrb[0].mxu0
        %v2536 = vadd.f32 0.0, %v2535
        %v2537 = vpop.f32.mrb[0].mxu0
        %2538 = vmatprep.mubr.f32.mxu0 %v289
        %2539 = vmatmul.mubr.f32.gmra.mrb[0].mxu0 %v288
        %v2540 = vpop.f32.mrb[0].mxu0
        %v2541 = vadd.f32 0.0, %v2540
        %v2542 = vpop.f32.mrb[0].mxu0
        %2543 = vmatprep.mubr.f32.mxu0 %v291
        %2544 = vmatmul.mubr.f32.gmra.mrb[0].mxu0 %v290
        %v2545 = vpop.f32.mrb[0].mxu0
        %v2546 = vadd.f32 0.0, %v2545
        %v2547 = vpop.f32.mrb[0].mxu0
        %2548 = vmatprep.mubr.f32.mxu0 %v293
        %2549 = vmatmul.mubr.f32.gmra.mrb[0].mxu0 %v292
        %v2550 = vpop.f32.mrb[0].mxu0
        %v2551 = vadd.f32 0.0, %v2550
        %v2552 = vpop.f32.mrb[0].mxu0
        %2553 = vmatprep.mubr.f32.mxu0 %v295
        %2554 = vmatmul.mubr.f32.gmra.mrb[0].mxu0 %v294
        %v2555 = vpop.f32.mrb[0].mxu0
        %v2556 = vadd.f32 0.0, %v2555
        %v2557 = vpop.f32.mrb[0].mxu0
        %2558 = vmatprep.mubr.f32.mxu0 %v297
        %2559 = vmatmul.mubr.f32.gmra.mrb[0].mxu0 %v296
        %v2560 = vpop.f32.mrb[0].mxu0
        %v2561 = vadd.f32 0.0, %v2560
        %v2562 = vpop.f32.mrb[0].mxu0
        %2563 = vmatprep.mubr.f32.mxu0 %v299
        %2564 = vmatmul.mubr.f32.gmra.mrb[0].mxu0 %v298
        %v2565 = vpop.f32.mrb[0].mxu0
        %v2566 = vadd.f32 0.0, %v2565
        %v2567 = vpop.f32.mrb[0].mxu0
        %2568 = vmatprep.mubr.f32.mxu0 %v301
        %2569 = vmatmul.mubr.f32.gmra.mrb[0].mxu0 %v300
        %v2570 = vpop.f32.mrb[0].mxu0
        %v2571 = vadd.f32 0.0, %v2570
        %v2572 = vpop.f32.mrb[0].mxu0
        %2573 = vmatprep.mubr.f32.mxu0 %v303
        %2574 = vmatmul.mubr.f32.gmra.mrb[0].mxu0 %v302
        %v2575 = vpop.f32.mrb[0].mxu0
        %v2576 = vadd.f32 0.0, %v2575
        %v2577 = vpop.f32.mrb[0].mxu0
        %2578 = vmatprep.mubr.f32.mxu0 %v305
        %2579 = vmatmul.mubr.f32.gmra.mrb[0].mxu0 %v304
        %v2580 = vpop.f32.mrb[0].mxu0
        %v2581 = vadd.f32 0.0, %v2580
        %v2582 = vpop.f32.mrb[0].mxu0
        %2583 = vmatprep.mubr.f32.mxu0 %v307
        %2584 = vmatmul.mubr.f32.gmra.mrb[0].mxu0 %v306
        %v2585 = vpop.f32.mrb[0].mxu0
        %v2586 = vadd.f32 0.0, %v2585
        %v2587 = vpop.f32.mrb[0].mxu0
        %2588 = vmatprep.mubr.f32.mxu0 %v309
        %2589 = vmatmul.mubr.f32.gmra.mrb[0].mxu0 %v308
        %v2590 = vpop.f32.mrb[0].mxu0
        %v2591 = vadd.f32 0.0, %v2590
        %v2592 = vpop.f32.mrb[0].mxu0
        %2593 = vmatprep.mubr.f32.mxu0 %v311
        %2594 = vmatmul.mubr.f32.gmra.mrb[0].mxu0 %v310
        %v2595 = vpop.f32.mrb[0].mxu0
        %v2596 = vadd.f32 0.0, %v2595
        %v2597 = vpop.f32.mrb[0].mxu0
        %2598 = vmatprep.mubr.f32.mxu0 %v313
        %2599 = vmatmul.mubr.f32.gmra.mrb[0].mxu0 %v312
        %v2600 = vpop.f32.mrb[0].mxu0
        %v2601 = vadd.f32 0.0, %v2600
        %v2602 = vpop.f32.mrb[0].mxu0
        %2603 = vmatprep.mubr.f32.mxu0 %v315
        %2604 = vmatmul.mubr.f32.gmra.mrb[0].mxu0 %v314
        %v2605 = vpop.f32.mrb[0].mxu0
        %v2606 = vadd.f32 0.0, %v2605
        %v2607 = vpop.f32.mrb[0].mxu0
        %2608 = vmatprep.mubr.f32.mxu0 %v317
        %2609 = vmatmul.mubr.f32.gmra.mrb[0].mxu0 %v316
        %v2610 = vpop.f32.mrb[0].mxu0
        %v2611 = vadd.f32 0.0, %v2610
        %v2612 = vpop.f32.mrb[0].mxu0
        %2613 = vmatprep.mubr.f32.mxu0 %v319
        %2614 = vmatmul.mubr.f32.gmra.mrb[0].mxu0 %v318
        %v2615 = vpop.f32.mrb[0].mxu0
        %v2616 = vadd.f32 0.0, %v2615
        %v2617 = vpop.f32.mrb[0].mxu0
        %2618 = vmatprep.mubr.f32.mxu0 %v321
        %2619 = vmatmul.mubr.f32.gmra.mrb[0].mxu0 %v320
        %v2620 = vpop.f32.mrb[0].mxu0
        %v2621 = vadd.f32 0.0, %v2620
        %v2622 = vpop.f32.mrb[0].mxu0
        %2623 = vmatprep.mubr.f32.mxu0 %v323
        %2624 = vmatmul.mubr.f32.gmra.mrb[0].mxu0 %v322
        %v2625 = vpop.f32.mrb[0].mxu0
        %v2626 = vadd.f32 0.0, %v2625
        %v2627 = vpop.f32.mrb[0].mxu0
        %2628 = vmatprep.mubr.f32.mxu0 %v325
        %2629 = vmatmul.mubr.f32.gmra.mrb[0].mxu0 %v324
        %v2630 = vpop.f32.mrb[0].mxu0
        %v2631 = vadd.f32 0.0, %v2630
        %v2632 = vpop.f32.mrb[0].mxu0
        %2633 = vmatprep.mubr.f32.mxu0 %v327
        %2634 = vmatmul.mubr.f32.gmra.mrb[0].mxu0 %v326
        %v2635 = vpop.f32.mrb[0].mxu0
        %v2636 = vadd.f32 0.0, %v2635
        %v2637 = vpop.f32.mrb[0].mxu0
        %2638 = vmatprep.mubr.f32.mxu0 %v329
        %2639 = vmatmul.mubr.f32.gmra.mrb[0].mxu0 %v328
        %v2640 = vpop.f32.mrb[0].mxu0
        %v2641 = vadd.f32 0.0, %v2640
        %v2642 = vpop.f32.mrb[0].mxu0
        %2643 = vmatprep.mubr.f32.mxu0 %v331
        %2644 = vmatmul.mubr.f32.gmra.mrb[0].mxu0 %v330
        %v2645 = vpop.f32.mrb[0].mxu0
        %v2646 = vadd.f32 0.0, %v2645
        %v2647 = vpop.f32.mrb[0].mxu0
        %2648 = vmatprep.mubr.f32.mxu0 %v333
        %2649 = vmatmul.mubr.f32.gmra.mrb[0].mxu0 %v332
        %v2650 = vpop.f32.mrb[0].mxu0
        %v2651 = vadd.f32 0.0, %v2650
        %v2652 = vpop.f32.mrb[0].mxu0
        %2653 = vmatprep.mubr.f32.mxu0 %v335
        %2654 = vmatmul.mubr.f32.gmra.mrb[0].mxu0 %v334
        %v2655 = vpop.f32.mrb[0].mxu0
        %v2656 = vadd.f32 0.0, %v2655
        %v2657 = vpop.f32.mrb[0].mxu0
        %2658 = vmatprep.mubr.f32.mxu0 %v337
        %2659 = vmatmul.mubr.f32.gmra.mrb[0].mxu0 %v336
        %v2660 = vpop.f32.mrb[0].mxu0
        %v2661 = vadd.f32 0.0, %v2660
        %v2662 = vpop.f32.mrb[0].mxu0
        %2663 = vmatprep.mubr.f32.mxu0 %v339
        %2664 = vmatmul.mubr.f32.gmra.mrb[0].mxu0 %v338
        %v2665 = vpop.f32.mrb[0].mxu0
        %v2666 = vadd.f32 0.0, %v2665
        %v2667 = vpop.f32.mrb[0].mxu0
        %2668 = vmatprep.mubr.f32.mxu0 %v341
        %2669 = vmatmul.mubr.f32.gmra.mrb[0].mxu0 %v340
        %v2670 = vpop.f32.mrb[0].mxu0
        %v2671 = vadd.f32 0.0, %v2670
        %v2672 = vpop.f32.mrb[0].mxu0
        %2673 = vmatprep.mubr.f32.mxu0 %v343
        %2674 = vmatmul.mubr.f32.gmra.mrb[0].mxu0 %v342
        %v2675 = vpop.f32.mrb[0].mxu0
        %v2676 = vadd.f32 0.0, %v2675
        %v2677 = vpop.f32.mrb[0].mxu0
        %2678 = vmatprep.mubr.f32.mxu0 %v345
        %2679 = vmatmul.mubr.f32.gmra.mrb[0].mxu0 %v344
        %v2680 = vpop.f32.mrb[0].mxu0
        %v2681 = vadd.f32 0.0, %v2680
        %v2682 = vpop.f32.mrb[0].mxu0
        %2683 = vmatprep.mubr.f32.mxu0 %v347
        %2684 = vmatmul.mubr.f32.gmra.mrb[0].mxu0 %v346
        %v2685 = vpop.f32.mrb[0].mxu0
        %v2686 = vadd.f32 0.0, %v2685
        %v2687 = vpop.f32.mrb[0].mxu0
        %2688 = vmatprep.mubr.f32.mxu0 %v349
        %2689 = vmatmul.mubr.f32.gmra.mrb[0].mxu0 %v348
        %v2690 = vpop.f32.mrb[0].mxu0
        %v2691 = vadd.f32 0.0, %v2690
        %v2692 = vpop.f32.mrb[0].mxu0
        %2693 = vmatprep.mubr.f32.mxu0 %v351
        %2694 = vmatmul.mubr.f32.gmra.mrb[0].mxu0 %v350
        %v2695 = vpop.f32.mrb[0].mxu0
        %v2696 = vadd.f32 0.0, %v2695
        %v2697 = vpop.f32.mrb[0].mxu0
        %2698 = vdwg.mxu0
        %s2699 = scalar_lea.vmem %s220, 1024
        %2700 = vst.msk [vmem:[%s2699] sm:$0xff] %vm1091, %v2381
        %2701 = vst.msk [vmem:[%s2699 + $0x8] sm:$0xff] %vm1091, %v2386
        %2702 = vst.msk [vmem:[%s2699 + $0x10] sm:$0xff] %vm1091, %v2391
        %2703 = vst.msk [vmem:[%s2699 + $0x18] sm:$0xff] %vm1091, %v2396
        %2704 = vst.msk [vmem:[%s2699 + $0x20] sm:$0xff] %vm1091, %v2401
        %2705 = vst.msk [vmem:[%s2699 + $0x28] sm:$0xff] %vm1091, %v2406
        %2706 = vst.msk [vmem:[%s2699 + $0x30] sm:$0xff] %vm1091, %v2411
        %2707 = vst.msk [vmem:[%s2699 + $0x38] sm:$0xff] %vm1091, %v2416
        %2708 = vst.msk [vmem:[%s2699 + $0x40] sm:$0xff] %vm1091, %v2421
        %2709 = vst.msk [vmem:[%s2699 + $0x48] sm:$0xff] %vm1091, %v2426
        %2710 = vst.msk [vmem:[%s2699 + $0x50] sm:$0xff] %vm1091, %v2431
        %2711 = vst.msk [vmem:[%s2699 + $0x58] sm:$0xff] %vm1091, %v2436
        %2712 = vst.msk [vmem:[%s2699 + $0x60] sm:$0xff] %vm1091, %v2441
        %2713 = vst.msk [vmem:[%s2699 + $0x68] sm:$0xff] %vm1091, %v2446
        %2714 = vst.msk [vmem:[%s2699 + $0x70] sm:$0xff] %vm1091, %v2451
        %2715 = vst.msk [vmem:[%s2699 + $0x78] sm:$0xff] %vm1091, %v2456
        %2716 = vst.msk [vmem:[%s2699 + $0x80] sm:$0xff] %vm1091, %v2461
        %2717 = vst.msk [vmem:[%s2699 + $0x88] sm:$0xff] %vm1091, %v2466
        %2718 = vst.msk [vmem:[%s2699 + $0x90] sm:$0xff] %vm1091, %v2471
        %2719 = vst.msk [vmem:[%s2699 + $0x98] sm:$0xff] %vm1091, %v2476
        %2720 = vst.msk [vmem:[%s2699 + $0xa0] sm:$0xff] %vm1091, %v2481
        %2721 = vst.msk [vmem:[%s2699 + $0xa8] sm:$0xff] %vm1091, %v2486
        %2722 = vst.msk [vmem:[%s2699 + $0xb0] sm:$0xff] %vm1091, %v2491
        %2723 = vst.msk [vmem:[%s2699 + $0xb8] sm:$0xff] %vm1091, %v2496
        %2724 = vst.msk [vmem:[%s2699 + $0xc0] sm:$0xff] %vm1091, %v2501
        %2725 = vst.msk [vmem:[%s2699 + $0xc8] sm:$0xff] %vm1091, %v2506
        %2726 = vst.msk [vmem:[%s2699 + $0xd0] sm:$0xff] %vm1091, %v2511
        %2727 = vst.msk [vmem:[%s2699 + $0xd8] sm:$0xff] %vm1091, %v2516
        %2728 = vst.msk [vmem:[%s2699 + $0xe0] sm:$0xff] %vm1091, %v2521
        %2729 = vst.msk [vmem:[%s2699 + $0xe8] sm:$0xff] %vm1091, %v2526
        %2730 = vst.msk [vmem:[%s2699 + $0xf0] sm:$0xff] %vm1091, %v2531
        %2731 = vst.msk [vmem:[%s2699 + $0xf8] sm:$0xff] %vm1091, %v2536
        %2732 = vst.msk [vmem:[%s2699 + $0x100] sm:$0xff] %vm1091, %v2541
        %2733 = vst.msk [vmem:[%s2699 + $0x108] sm:$0xff] %vm1091, %v2546
        %2734 = vst.msk [vmem:[%s2699 + $0x110] sm:$0xff] %vm1091, %v2551
        %2735 = vst.msk [vmem:[%s2699 + $0x118] sm:$0xff] %vm1091, %v2556
        %2736 = vst.msk [vmem:[%s2699 + $0x120] sm:$0xff] %vm1091, %v2561
        %2737 = vst.msk [vmem:[%s2699 + $0x128] sm:$0xff] %vm1091, %v2566
        %2738 = vst.msk [vmem:[%s2699 + $0x130] sm:$0xff] %vm1091, %v2571
        %2739 = vst.msk [vmem:[%s2699 + $0x138] sm:$0xff] %vm1091, %v2576
        %2740 = vst.msk [vmem:[%s2699 + $0x140] sm:$0xff] %vm1091, %v2581
        %2741 = vst.msk [vmem:[%s2699 + $0x148] sm:$0xff] %vm1091, %v2586
        %2742 = vst.msk [vmem:[%s2699 + $0x150] sm:$0xff] %vm1091, %v2591
        %2743 = vst.msk [vmem:[%s2699 + $0x158] sm:$0xff] %vm1091, %v2596
        %2744 = vst.msk [vmem:[%s2699 + $0x160] sm:$0xff] %vm1091, %v2601
        %2745 = vst.msk [vmem:[%s2699 + $0x168] sm:$0xff] %vm1091, %v2606
        %2746 = vst.msk [vmem:[%s2699 + $0x170] sm:$0xff] %vm1091, %v2611
        %2747 = vst.msk [vmem:[%s2699 + $0x178] sm:$0xff] %vm1091, %v2616
        %2748 = vst.msk [vmem:[%s2699 + $0x180] sm:$0xff] %vm1091, %v2621
        %2749 = vst.msk [vmem:[%s2699 + $0x188] sm:$0xff] %vm1091, %v2626
        %2750 = vst.msk [vmem:[%s2699 + $0x190] sm:$0xff] %vm1091, %v2631
        %2751 = vst.msk [vmem:[%s2699 + $0x198] sm:$0xff] %vm1091, %v2636
        %2752 = vst.msk [vmem:[%s2699 + $0x1a0] sm:$0xff] %vm1091, %v2641
        %2753 = vst.msk [vmem:[%s2699 + $0x1a8] sm:$0xff] %vm1091, %v2646
        %2754 = vst.msk [vmem:[%s2699 + $0x1b0] sm:$0xff] %vm1091, %v2651
        %2755 = vst.msk [vmem:[%s2699 + $0x1b8] sm:$0xff] %vm1091, %v2656
        %2756 = vst.msk [vmem:[%s2699 + $0x1c0] sm:$0xff] %vm1091, %v2661
        %2757 = vst.msk [vmem:[%s2699 + $0x1c8] sm:$0xff] %vm1091, %v2666
        %2758 = vst.msk [vmem:[%s2699 + $0x1d0] sm:$0xff] %vm1091, %v2671
        %2759 = vst.msk [vmem:[%s2699 + $0x1d8] sm:$0xff] %vm1091, %v2676
        %2760 = vst.msk [vmem:[%s2699 + $0x1e0] sm:$0xff] %vm1091, %v2681
        %2761 = vst.msk [vmem:[%s2699 + $0x1e8] sm:$0xff] %vm1091, %v2686
        %2762 = vst.msk [vmem:[%s2699 + $0x1f0] sm:$0xff] %vm1091, %v2691
        %2763 = vst.msk [vmem:[%s2699 + $0x1f8] sm:$0xff] %vm1091, %v2696
        %s2764 = smul.u32 192, %s18
        %p2765 = scmp.lt.s32.totalorder %s2764, 383
        %s2766 = scalar_select %p2765, %s2764, 383
        %s2767 = smul.addr %s2766, 8
        %s2768 = scalar_lea.vmem %s3, %s2767
        // Predicated region
        $region45: #{resize_transformer_block.2} parent=31 // pred_check
          %p2769 = pneg %p104
        $region46: #{resize_transformer_block.2} parent=31 // pred_check_branch
          %2771 = sbr.rel (%p2769) target = $region48
        $region47: #{resize_transformer_block.2} parent=31 // pred_region
          %s2772 = smul.u32 192, %s18
        $region48: #{resize_transformer_block.2} parent=31 // pred_fallthru
          _
      $region32: #{resize_transformer_block.2} parent=5 // pred_fallthru
        _
      %p2773 = scmp.le.s32.totalorder 2, %s13
      // Predicated region
      $region49: #{resize_transformer_block.2} parent=5 // pred_check
        %p2774 = pneg %p2773
      $region50: #{resize_transformer_block.2} parent=5 // pred_check_branch
        %2776 = sbr.rel (%p2774) target = $region52
      $region51: #{resize_transformer_block.2} parent=5 // pred_region
        %s2777 = ssub.s32 %s13, 2
        // Predicated region
        $region53: #{resize_transformer_block.2} parent=51 // pred_check
          %p2778 = pneg %p110
        $region54: #{resize_transformer_block.2} parent=51 // pred_check_branch
          %2780 = sbr.rel (%p2778) target = $region56
        $region55: #{resize_transformer_block.2} parent=51 // pred_region
          %s2781 = smul.u32 192, %s19
          %p2782 = scmp.lt.s32.totalorder %s2781, 383
          %s2783 = scalar_select %p2782, %s2781, 383
          %s2784 = smul.addr %s2783, 8
          %s2785 = scalar_lea.vmem %s3, %s2784
        $region56: #{resize_transformer_block.2} parent=51 // pred_fallthru
          _
      $region52: #{resize_transformer_block.2} parent=5 // pred_fallthru
        _
    $region6: #{resize_transformer_block.2} parent=1 // loop_footer
      %s17 = sadd.s32 1, %s13
    $region7: #{resize_transformer_block.2} parent=1 // loop_footer_branch
      %12 = sbr.rel target = $region3
    $region8: #{resize_transformer_block.2} parent=1 // loop_exit
      _
    %2786 = vsyncpa [#allocation3], 1
    %s2787 = scalar_lea.sflag [#allocation3], 1
    %2788 = vsyncpa %s2787, 1
    %2789 = vsyncpa [#allocation5], 1

</llo_original>
